<compile_context>
chip_gen: v7x
topology: tpu7x:2x2x1
jax: 0.10.0
libtpu: 0.0.40
codegen_flags: <defaults>
</compile_context>

<pallas_src>
import functools
import math

import jax
import jax.numpy as jnp
from jax import lax
from jax.experimental import pallas as pl
from jax.experimental.pallas import tpu as pltpu

_F32_BYTES = 4
_LANE = 128
_SUBLANE = 8


def _round_up(n, m):
    return ((n + m - 1) // m) * m


def _device_vmem_budget_bytes():
    """~75% of the physical per-core VMEM (v7x: ~48 MiB, v5e/v6e: ~96 MiB)."""
    cap = 64 * 1024 * 1024  # conservative fallback == v7x per-TC VMEM
    try:
        info = pltpu.get_tpu_info()
        cap = int(getattr(info, "vmem_capacity_bytes", cap)) or cap
    except Exception:
        pass
    return (3 * cap) // 4


def _vmem_estimate(t_pad, tk, c, k, v):
    """Rough VMEM footprint (bytes) for one grid step, incl. double buffers."""
    c_sub = _round_up(c, _SUBLANE)
    k_sub = _round_up(k, _SUBLANE)
    v_sub = _round_up(v, _SUBLANE)
    kv_sub = _round_up(k + v, _SUBLANE)
    blocks = (
        2 * c_sub * t_pad * _F32_BYTES                         # x (full, resident)
        + 2 * c_sub * tk * _F32_BYTES                          # x key tile
        + 2 * k_sub * _round_up(c, _LANE) * _F32_BYTES         # W_q
        + 2 * k_sub * _LANE * _F32_BYTES                       # b_q
        + 2 * kv_sub * _round_up(c, _LANE) * _F32_BYTES        # W_kv
        + 2 * kv_sub * _LANE * _F32_BYTES                      # b_kv
        + 2 * v_sub * t_pad * _F32_BYTES                       # out accumulator
        + 2 * t_pad * tk * _F32_BYTES                          # attn tile
    )
    scratch = k_sub * t_pad * _F32_BYTES + t_pad * _LANE * 4   # q_scr + row_scr
    temps = 3 * t_pad * tk * _F32_BYTES + t_pad * tk           # scores/e/w + mask
    return blocks + scratch + temps


def _pick_block_k(t_pad, budget, c, k, v, max_block_k=None):
    """Largest key tile (multiple of 128, dividing t_pad, <= 2048) in budget."""
    cap = min(t_pad, 2048)
    if max_block_k is not None:
        cap = min(cap, max(_LANE, (max_block_k // _LANE) * _LANE))
    best = _LANE
    tk = _LANE
    while tk <= cap:
        if t_pad % tk == 0 and _vmem_estimate(t_pad, tk, c, k, v) <= budget:
            best = tk
        tk += _LANE
    return best


def _attention_kernel(key_size, value_size, t_real,
                      x_full_ref, x_tile_ref, w_q_ref, b_q_ref,
                      w_kv_ref, b_kv_ref,
                      out_ref, attn_ref,
                      q_scr, row_scr):
    """Grid step = (batch b, key tile kt).  Time-major: T on the lane axis."""
    kt = pl.program_id(1)
    K = key_size
    V = value_size
    T = q_scr.shape[1]            # padded sequence length
    TK = attn_ref.shape[2]        # key-tile width
    hp = lax.Precision.HIGHEST

    # ---- per-batch setup (kt == 0): project q (pre-scaled) + query-row index.
    @pl.when(kt == 0)
    def _():
        x = x_full_ref[0]                                        # (C, T)
        # q already carries the 1/sqrt(key_size) scale (folded into W_q/b_q).
        q_scr[...] = (jnp.dot(w_q_ref[...], x, precision=hp,
                              preferred_element_type=jnp.float32)
                      + b_q_ref[...])                            # (K, T)
        iota = lax.broadcasted_iota(jnp.int32, (T, 1), 0)
        # padded query rows get -1 so they are always masked below.
        row_scr[...] = jnp.where(iota < t_real, iota, -1)
        out_ref[...] = jnp.zeros_like(out_ref)

    # ---- per key tile: project k/v for this tile only (lane-dense x tile).
    x_t = x_tile_ref[0]                                          # (C, TK)
    kv = (jnp.dot(w_kv_ref[...], x_t, precision=hp,
                  preferred_element_type=jnp.float32)
          + b_kv_ref[...])                                       # (K+V, TK)
    k_t = kv[:K, :]                                              # (K, TK)
    v_t = kv[K:K + V, :]                                         # (V, TK)

    # scores[j, i] = q[:, j] . k[:, i]  -- contract the feature axis (dim 0).
    q = q_scr[...]                                               # (K, T)
    scores = lax.dot_general(q, k_t, (((0,), (0,)), ((), ())),
                             precision=hp,
                             preferred_element_type=jnp.float32)  # (T, TK)

    # strict upper-triangular mask: global key index > query index -> -inf.
    row = row_scr[...]                                           # (T, 1)
    col = lax.broadcasted_iota(jnp.int32, (1, TK), 1) + kt * TK  # (1, TK)
    scores = jnp.where(col > row, -jnp.inf, scores)

    # softmax over the QUERY axis (axis 0).  Fully-masked (padded) key columns
    # degrade to w == 0 through the m / denom clamps instead of NaN.
    m = jnp.maximum(jnp.max(scores, axis=0, keepdims=True), -3.0e38)  # (1, TK)
    e = jnp.exp(scores - m)                                      # (T, TK)
    denom = jnp.maximum(jnp.sum(e, axis=0, keepdims=True), 1e-20)
    r = pl.reciprocal(denom, approx=True)
    r = r * (2.0 - denom * r)     # one Newton step -> ~f32-exact reciprocal
    w = e * r                                                    # (T, TK)

    attn_ref[0] = w
    # out[v, j] += sum_i v_t[v, i] * w[j, i]
    out_ref[0] += lax.dot_general(v_t, w, (((1,), (1,)), ((), ())),
                                  precision=hp,
                                  preferred_element_type=jnp.float32)  # (V, T)


def attention_block(x_bct, params, key_size, *, max_block_k=None):
    """x_bct: (B, C, T) f32.  Returns (out (B, V, T), attn (B, T, T))."""
    wq, bq, wk, bk, wv, bv = params
    B, C, T = x_bct.shape
    K = wq.shape[1]
    V = wv.shape[1]
    F_KV = K + V

    # Pad T to a lane multiple; the tail is masked inside the kernel.
    T_pad = _round_up(max(T, 1), _LANE)
    x_in = x_bct
    if T_pad != T:
        x_in = jnp.pad(x_bct, ((0, 0), (0, 0), (0, T_pad - T)))

    budget = _device_vmem_budget_bytes()
    TK = _pick_block_k(T_pad, budget, C, K, V, max_block_k)
    num_kt = T_pad // TK
    est = _vmem_estimate(T_pad, TK, C, K, V)
    vmem_limit = int(min(max(est + (2 << 20), 32 << 20), budget))

    # Time-major weights: y(rows, T) = W^T(rows, C) @ x(C, T) + b(rows, 1).
    inv_sqrt = 1.0 / math.sqrt(key_size)
    w_q_t = jnp.transpose(wq) * inv_sqrt                         # (K, C)
    b_q_t = jnp.transpose(bq) * inv_sqrt                         # (K, 1)
    w_kv_t = jnp.concatenate([jnp.transpose(wk), jnp.transpose(wv)], axis=0)
    b_kv_t = jnp.concatenate([jnp.transpose(bk), jnp.transpose(bv)], axis=0)

    kern = functools.partial(_attention_kernel, K, V, T)

    # TODO(synk): if the attn writeback is still exposed on v5e/v6e traces,
    # consider pipeline_mode=pl.Buffered(3) on the attn out_spec (128 MiB parts
    # only) and/or a bf16 attn output where downstream tolerates it.
    out_bvt, attn = pl.pallas_call(
        kern,
        out_shape=(
            jax.ShapeDtypeStruct((B, V, T_pad), jnp.float32),
            jax.ShapeDtypeStruct((B, T_pad, T_pad), jnp.float32),
        ),
        grid=(B, num_kt),
        in_specs=[
            pl.BlockSpec((1, C, T_pad), lambda b, kt: (b, 0, 0)),   # x, resident
            pl.BlockSpec((1, C, TK), lambda b, kt: (b, 0, kt)),     # x key tile
            pl.BlockSpec((K, C), lambda b, kt: (0, 0)),             # W_q (scaled)
            pl.BlockSpec((K, 1), lambda b, kt: (0, 0)),             # b_q (scaled)
            pl.BlockSpec((F_KV, C), lambda b, kt: (0, 0)),          # W_kv
            pl.BlockSpec((F_KV, 1), lambda b, kt: (0, 0)),          # b_kv
        ],
        out_specs=(
            pl.BlockSpec((1, V, T_pad), lambda b, kt: (b, 0, 0)),   # out accum
            pl.BlockSpec((1, T_pad, TK), lambda b, kt: (b, 0, kt)),  # attn tile
        ),
        scratch_shapes=[
            pltpu.VMEM((K, T_pad), jnp.float32),   # q (pre-scaled), per batch
            pltpu.VMEM((T_pad, 1), jnp.int32),     # query-row index (+ tail mask)
        ],
        compiler_params=pltpu.CompilerParams(
            dimension_semantics=("parallel", "arbitrary"),
            vmem_limit_bytes=vmem_limit,
        ),
    )(x_in, x_in, w_q_t, b_q_t, w_kv_t, b_kv_t)

    if T_pad != T:
        out_bvt = out_bvt[:, :, :T]
        attn = attn[:, :T, :T]
    return out_bvt, attn


def init_params(key, in_channels, key_size, value_size):
    """Deterministic synthetic Linear weights stored as (in, out): y = x@W + b."""
    ks = jax.random.split(key, 6)
    s = 1.0 / math.sqrt(in_channels)

    def u(k, shape):
        return jax.random.uniform(k, shape, jnp.float32, -s, s)

    return (u(ks[0], (in_channels, key_size)), u(ks[1], (1, key_size)),
            u(ks[2], (in_channels, key_size)), u(ks[3], (1, key_size)),
            u(ks[4], (in_channels, value_size)), u(ks[5], (1, value_size)))


def _reference(x_bct, params, key_size):
    """Pure-JAX mirror of AttentionBlock.forward (highest matmul precision)."""
    wq, bq, wk, bk, wv, bv = params
    hp = lax.Precision.HIGHEST
    x = jnp.transpose(x_bct, (0, 2, 1))                          # (B, T, C)
    q = jnp.einsum('btc,ck->btk', x, wq, precision=hp) + bq
    k = jnp.einsum('btc,ck->btk', x, wk, precision=hp) + bk
    v = jnp.einsum('btc,cv->btv', x, wv, precision=hp) + bv
    temp = jnp.einsum('bjk,bik->bji', q, k, precision=hp)        # (B, Tq, Tk)
    T = x.shape[1]
    mask = jnp.arange(T)[None, :] > jnp.arange(T)[:, None]       # mask[j, i] = i > j
    temp = jnp.where(mask[None], -jnp.inf, temp)
    w = jax.nn.softmax(temp / math.sqrt(key_size), axis=1)       # over queries
    out = jnp.einsum('bji,biv->bjv', w, v, precision=hp)
    return jnp.transpose(out, (0, 2, 1)), w


def _check(x, params, key_size, max_block_k=None):
    out, attn = attention_block(x, params, key_size, max_block_k=max_block_k)
    out = jax.block_until_ready(out)
    attn = jax.block_until_ready(attn)
    ref_out, ref_attn = _reference(x, params, key_size)
    assert out.shape == ref_out.shape and attn.shape == ref_attn.shape
    err_o = float(jnp.max(jnp.abs(out - ref_out)))
    err_a = float(jnp.max(jnp.abs(attn - ref_attn)))
    # Newton-refined reciprocal keeps the kernel f32-accurate -> tight tolerance.
    assert bool(jnp.allclose(out, ref_out, atol=1e-4, rtol=1e-4)), (
        f"out mismatch, max abs err {err_o:.3e}")
    assert bool(jnp.allclose(attn, ref_attn, atol=1e-4, rtol=1e-4)), (
        f"attn mismatch, max abs err {err_a:.3e}")


if __name__ == "__main__":
    B, C = 2, 4
    key_size = 8
    value_size = C  # TemporalBlock uses AttentionBlock(n_inputs, key_size, n_inputs)

    root = jax.random.PRNGKey(0)
    kx1, kx2, kx3, kp = jax.random.split(root, 4)
    params = init_params(kp, C, key_size, value_size)

    # 1) module-default tiny shape (T=8): exercises the pad-to-128 path.
    x_small = jax.random.normal(kx1, (B, C, 8), dtype=jnp.float32)
    _check(x_small, params, key_size)

    # 2) T=256 with TK capped at 128: two key tiles + resident out accumulator.
    x_tiled = jax.random.normal(kx2, (B, C, 256), dtype=jnp.float32)
    _check(x_tiled, params, key_size, max_block_k=128)

    # 3) T=200 (not a lane multiple): padding + multi-tile + masked tail.
    x_ragged = jax.random.normal(kx3, (B, C, 200), dtype=jnp.float32)
    _check(x_ragged, params, key_size, max_block_k=128)

    print("KERNEL_OK")
</pallas_src>

<mosaic_0001>
module attributes {stable_mosaic.version = 11 : i64} {
  func.func @_attention_kernel(%arg0: i32, %arg1: i32, %arg2: memref<1x4x128xf32, #tpu.memory_space<vmem>>, %arg3: memref<1x4x128xf32, #tpu.memory_space<vmem>>, %arg4: memref<8x4xf32, #tpu.memory_space<vmem>>, %arg5: memref<8x1xf32, #tpu.memory_space<vmem>>, %arg6: memref<12x4xf32, #tpu.memory_space<vmem>>, %arg7: memref<12x1xf32, #tpu.memory_space<vmem>>, %arg8: memref<1x4x128xf32, #tpu.memory_space<vmem>>, %arg9: memref<1x128x128xf32, #tpu.memory_space<vmem>>, %arg10: memref<8x128xf32, #tpu.memory_space<vmem>>, %arg11: memref<128x1xi32, #tpu.memory_space<vmem>>) attributes {dimension_semantics = [#tpu.dimension_semantics<parallel>, #tpu.dimension_semantics<arbitrary>], iteration_bounds = array<i64: 2, 1>, scalar_prefetch = 0 : i64, scratch_operands = 2 : i64, tpu.core_type = #tpu.core_type<tc>, window_params = [{transform_indices = @transform_0, window_bounds = array<i64: 1, 4, 128>}, {transform_indices = @transform_1, window_bounds = array<i64: 1, 4, 128>}, {pipeline_mode = #tpu.pipeline_mode<synchronous>, transform_indices = @transform_2, window_bounds = array<i64: 8, 4>}, {pipeline_mode = #tpu.pipeline_mode<synchronous>, transform_indices = @transform_3, window_bounds = array<i64: 8, 1>}, {pipeline_mode = #tpu.pipeline_mode<synchronous>, transform_indices = @transform_4, window_bounds = array<i64: 12, 4>}, {pipeline_mode = #tpu.pipeline_mode<synchronous>, transform_indices = @transform_5, window_bounds = array<i64: 12, 1>}, {transform_indices = @transform_6, window_bounds = array<i64: 1, 4, 128>}, {transform_indices = @transform_7, window_bounds = array<i64: 1, 128, 128>}]} {
    %c0_i32 = arith.constant 0 : i32
    %0 = arith.cmpi eq, %arg1, %c0_i32 : i32
    %1 = arith.extui %0 : i1 to i32
    %c0_i32_0 = arith.constant 0 : i32
    %2 = arith.cmpi ne, %1, %c0_i32_0 : i32
    scf.if %2 {
      %c0_28 = arith.constant 0 : index
      %c0_29 = arith.constant 0 : index
      %c0_30 = arith.constant 0 : index
      %52 = vector.load %arg2[%c0_28, %c0_29, %c0_30] : memref<1x4x128xf32, #tpu.memory_space<vmem>>, vector<1x4x128xf32>
      %53 = vector.shape_cast %52 : vector<1x4x128xf32> to vector<4x128xf32>
      %c0_31 = arith.constant 0 : index
      %c0_32 = arith.constant 0 : index
      %54 = vector.load %arg4[%c0_31, %c0_32] : memref<8x4xf32, #tpu.memory_space<vmem>>, vector<8x4xf32>
      %cst_33 = arith.constant dense<0.000000e+00> : vector<8x128xf32>
      %55 = tpu.matmul %54, %53, %cst_33 {dimension_numbers = #tpu.dot_dimension_numbers<[1], [0], [0], [1], [0, 0, 1, 1], [], []>, precision = #tpu.contract_precision<fp32>} : vector<8x4xf32>, vector<4x128xf32>, vector<8x128xf32> -> vector<8x128xf32>
      %c0_34 = arith.constant 0 : index
      %c0_35 = arith.constant 0 : index
      %56 = vector.load %arg5[%c0_34, %c0_35] : memref<8x1xf32, #tpu.memory_space<vmem>>, vector<8x1xf32>
      %57 = vector.broadcast %56 : vector<8x1xf32> to vector<8x128xf32>
      %58 = arith.addf %55, %57 : vector<8x128xf32>
      %c0_36 = arith.constant 0 : index
      %c0_37 = arith.constant 0 : index
      %59 = vector.load %arg10[%c0_36, %c0_37] : memref<8x128xf32, #tpu.memory_space<vmem>>, vector<8x128xf32>
      tpu.vector_store %arg10[%c0_36, %c0_37], %58 {strides = array<i32>} : memref<8x128xf32, #tpu.memory_space<vmem>>, vector<8x128xf32>,
      %60 = tpu.iota {dimensions = array<i32: 0>} : vector<128x1xi32>
      %c8_i32 = arith.constant 8 : i32
      %61 = vector.broadcast %c8_i32 : i32 to vector<128x1xi32>
      %62 = arith.cmpi slt, %60, %61 : vector<128x1xi32>
      %c-1_i32 = arith.constant -1 : i32
      %63 = vector.broadcast %c-1_i32 : i32 to vector<128x1xi32>
      %64 = arith.select %62, %60, %63 : vector<128x1xi1>, vector<128x1xi32>
      %c0_38 = arith.constant 0 : index
      %c0_39 = arith.constant 0 : index
      %65 = vector.load %arg11[%c0_38, %c0_39] : memref<128x1xi32, #tpu.memory_space<vmem>>, vector<128x1xi32>
      tpu.vector_store %arg11[%c0_38, %c0_39], %64 {strides = array<i32>} : memref<128x1xi32, #tpu.memory_space<vmem>>, vector<128x1xi32>,
      %cst_40 = arith.constant 0.000000e+00 : f32
      %66 = vector.broadcast %cst_40 : f32 to vector<1x4x128xf32>
      %c0_41 = arith.constant 0 : index
      %c0_42 = arith.constant 0 : index
      %c0_43 = arith.constant 0 : index
      %67 = vector.load %arg8[%c0_41, %c0_42, %c0_43] : memref<1x4x128xf32, #tpu.memory_space<vmem>>, vector<1x4x128xf32>
      tpu.vector_store %arg8[%c0_41, %c0_42, %c0_43], %66 {strides = array<i32>} : memref<1x4x128xf32, #tpu.memory_space<vmem>>, vector<1x4x128xf32>,
    } else {
    }
    %c0 = arith.constant 0 : index
    %c0_1 = arith.constant 0 : index
    %c0_2 = arith.constant 0 : index
    %3 = vector.load %arg3[%c0, %c0_1, %c0_2] : memref<1x4x128xf32, #tpu.memory_space<vmem>>, vector<1x4x128xf32>
    %4 = vector.shape_cast %3 : vector<1x4x128xf32> to vector<4x128xf32>
    %c0_3 = arith.constant 0 : index
    %c0_4 = arith.constant 0 : index
    %5 = vector.load %arg6[%c0_3, %c0_4] : memref<12x4xf32, #tpu.memory_space<vmem>>, vector<12x4xf32>
    %cst = arith.constant dense<0.000000e+00> : vector<12x128xf32>
    %6 = tpu.matmul %5, %4, %cst {dimension_numbers = #tpu.dot_dimension_numbers<[1], [0], [0], [1], [0, 0, 1, 1], [], []>, precision = #tpu.contract_precision<fp32>} : vector<12x4xf32>, vector<4x128xf32>, vector<12x128xf32> -> vector<12x128xf32>
    %c0_5 = arith.constant 0 : index
    %c0_6 = arith.constant 0 : index
    %7 = vector.load %arg7[%c0_5, %c0_6] : memref<12x1xf32, #tpu.memory_space<vmem>>, vector<12x1xf32>
    %8 = vector.broadcast %7 : vector<12x1xf32> to vector<12x128xf32>
    %9 = arith.addf %6, %8 : vector<12x128xf32>
    %10 = vector.extract_strided_slice %9 {offsets = [0, 0], sizes = [8, 128], strides = [1, 1]} : vector<12x128xf32> to vector<8x128xf32>
    %11 = vector.extract_strided_slice %9 {offsets = [8, 0], sizes = [4, 128], strides = [1, 1]} : vector<12x128xf32> to vector<4x128xf32>
    %c0_7 = arith.constant 0 : index
    %c0_8 = arith.constant 0 : index
    %12 = vector.load %arg10[%c0_7, %c0_8] : memref<8x128xf32, #tpu.memory_space<vmem>>, vector<8x128xf32>
    %cst_9 = arith.constant dense<0.000000e+00> : vector<128x128xf32>
    %13 = tpu.matmul %12, %10, %cst_9 {dimension_numbers = #tpu.dot_dimension_numbers<[0], [0], [1], [1], [0, 1, 1, 1], [], []>, precision = #tpu.contract_precision<fp32>} : vector<8x128xf32>, vector<8x128xf32>, vector<128x128xf32> -> vector<128x128xf32>
    %c0_10 = arith.constant 0 : index
    %c0_11 = arith.constant 0 : index
    %14 = vector.load %arg11[%c0_10, %c0_11] : memref<128x1xi32, #tpu.memory_space<vmem>>, vector<128x1xi32>
    %15 = tpu.iota {dimensions = array<i32: 1>} : vector<1x128xi32>
    %c128_i32 = arith.constant 128 : i32
    %16 = arith.muli %arg1, %c128_i32 : i32
    %17 = vector.broadcast %16 : i32 to vector<1x128xi32>
    %18 = arith.addi %15, %17 : vector<1x128xi32>
    %19 = vector.broadcast %18 : vector<1x128xi32> to vector<128x128xi32>
    %20 = vector.broadcast %14 : vector<128x1xi32> to vector<128x128xi32>
    %21 = arith.cmpi sgt, %19, %20 : vector<128x128xi32>
    %cst_12 = arith.constant 0xFF800000 : f32
    %22 = vector.broadcast %cst_12 : f32 to vector<128x128xf32>
    %23 = arith.select %21, %22, %13 : vector<128x128xi1>, vector<128x128xf32>
    %cst_13 = arith.constant dense<0xFF800000> : vector<128xf32>
    %24 = vector.multi_reduction <maximumf>, %23, %cst_13 [0] : vector<128x128xf32> to vector<128xf32>
    %25 = vector.shape_cast %24 : vector<128xf32> to vector<1x128xf32>
    %cst_14 = arith.constant -3.000000e+38 : f32
    %26 = vector.broadcast %cst_14 : f32 to vector<1x128xf32>
    %27 = arith.maximumf %25, %26 : vector<1x128xf32>
    %28 = vector.broadcast %27 : vector<1x128xf32> to vector<128x128xf32>
    %29 = arith.subf %23, %28 : vector<128x128xf32>
    %30 = math.exp %29 : vector<128x128xf32>
    %cst_15 = arith.constant dense<0.000000e+00> : vector<128xf32>
    %31 = vector.multi_reduction <add>, %30, %cst_15 [0] : vector<128x128xf32> to vector<128xf32>
    %32 = vector.shape_cast %31 : vector<128xf32> to vector<1x128xf32>
    %cst_16 = arith.constant 9.99999968E-21 : f32
    %33 = vector.broadcast %cst_16 : f32 to vector<1x128xf32>
    %34 = arith.maximumf %32, %33 : vector<1x128xf32>
    %35 = tpu.reciprocal %34 {approx = true} : vector<1x128xf32> -> vector<1x128xf32>
    %36 = arith.mulf %34, %35 : vector<1x128xf32>
    %cst_17 = arith.constant 2.000000e+00 : f32
    %37 = vector.broadcast %cst_17 : f32 to vector<1x128xf32>
    %38 = arith.subf %37, %36 : vector<1x128xf32>
    %39 = arith.mulf %35, %38 : vector<1x128xf32>
    %40 = vector.broadcast %39 : vector<1x128xf32> to vector<128x128xf32>
    %41 = arith.mulf %30, %40 : vector<128x128xf32>
    %c0_18 = arith.constant 0 : index
    %c0_19 = arith.constant 0 : index
    %c0_20 = arith.constant 0 : index
    %42 = vector.load %arg9[%c0_18, %c0_19, %c0_20] : memref<1x128x128xf32, #tpu.memory_space<vmem>>, vector<1x128x128xf32>
    %43 = vector.shape_cast %42 : vector<1x128x128xf32> to vector<128x128xf32>
    %44 = vector.shape_cast %41 : vector<128x128xf32> to vector<1x128x128xf32>
    tpu.vector_store %arg9[%c0_18, %c0_19, %c0_20], %44 {strides = array<i32>} : memref<1x128x128xf32, #tpu.memory_space<vmem>>, vector<1x128x128xf32>,
    %c0_21 = arith.constant 0 : index
    %c0_22 = arith.constant 0 : index
    %c0_23 = arith.constant 0 : index
    %45 = vector.load %arg8[%c0_21, %c0_22, %c0_23] : memref<1x4x128xf32, #tpu.memory_space<vmem>>, vector<1x4x128xf32>
    %46 = vector.shape_cast %45 : vector<1x4x128xf32> to vector<4x128xf32>
    %cst_24 = arith.constant dense<0.000000e+00> : vector<4x128xf32>
    %47 = tpu.matmul %11, %41, %cst_24 {dimension_numbers = #tpu.dot_dimension_numbers<[1], [1], [0], [0], [0, 0, 1, 0], [], []>, precision = #tpu.contract_precision<fp32>} : vector<4x128xf32>, vector<128x128xf32>, vector<4x128xf32> -> vector<4x128xf32>
    %48 = arith.addf %46, %47 : vector<4x128xf32>
    %c0_25 = arith.constant 0 : index
    %c0_26 = arith.constant 0 : index
    %c0_27 = arith.constant 0 : index
    %49 = vector.load %arg8[%c0_25, %c0_26, %c0_27] : memref<1x4x128xf32, #tpu.memory_space<vmem>>, vector<1x4x128xf32>
    %50 = vector.shape_cast %49 : vector<1x4x128xf32> to vector<4x128xf32>
    %51 = vector.shape_cast %48 : vector<4x128xf32> to vector<1x4x128xf32>
    tpu.vector_store %arg8[%c0_25, %c0_26, %c0_27], %51 {strides = array<i32>} : memref<1x4x128xf32, #tpu.memory_space<vmem>>, vector<1x4x128xf32>,
    return
  }
  func.func @transform_0(%arg0: i32, %arg1: i32) -> (i32, i32, i32) {
    %c0_i32 = arith.constant 0 : i32
    %c0_i32_0 = arith.constant 0 : i32
    %c0_i32_1 = arith.constant 0 : i32
    return %arg0, %c0_i32, %c0_i32_0 : i32, i32, i32
  }
  func.func @transform_1(%arg0: i32, %arg1: i32) -> (i32, i32, i32) {
    %c0_i32 = arith.constant 0 : i32
    %c0_i32_0 = arith.constant 0 : i32
    return %arg0, %c0_i32, %arg1 : i32, i32, i32
  }
  func.func @transform_2(%arg0: i32, %arg1: i32) -> (i32, i32) {
    %c0_i32 = arith.constant 0 : i32
    %c0_i32_0 = arith.constant 0 : i32
    %c0_i32_1 = arith.constant 0 : i32
    return %c0_i32, %c0_i32_0 : i32, i32
  }
  func.func @transform_3(%arg0: i32, %arg1: i32) -> (i32, i32) {
    %c0_i32 = arith.constant 0 : i32
    %c0_i32_0 = arith.constant 0 : i32
    %c0_i32_1 = arith.constant 0 : i32
    return %c0_i32, %c0_i32_0 : i32, i32
  }
  func.func @transform_4(%arg0: i32, %arg1: i32) -> (i32, i32) {
    %c0_i32 = arith.constant 0 : i32
    %c0_i32_0 = arith.constant 0 : i32
    %c0_i32_1 = arith.constant 0 : i32
    return %c0_i32, %c0_i32_0 : i32, i32
  }
  func.func @transform_5(%arg0: i32, %arg1: i32) -> (i32, i32) {
    %c0_i32 = arith.constant 0 : i32
    %c0_i32_0 = arith.constant 0 : i32
    %c0_i32_1 = arith.constant 0 : i32
    return %c0_i32, %c0_i32_0 : i32, i32
  }
  func.func @transform_6(%arg0: i32, %arg1: i32) -> (i32, i32, i32) {
    %c0_i32 = arith.constant 0 : i32
    %c0_i32_0 = arith.constant 0 : i32
    %c0_i32_1 = arith.constant 0 : i32
    return %arg0, %c0_i32, %c0_i32_0 : i32, i32, i32
  }
  func.func @transform_7(%arg0: i32, %arg1: i32) -> (i32, i32, i32) {
    %c0_i32 = arith.constant 0 : i32
    %c0_i32_0 = arith.constant 0 : i32
    return %arg0, %c0_i32, %arg1 : i32, i32, i32
  }
}

</mosaic_0001>

<llo_original>
// kernel: tpu_custom_call.1
$region0: #{tpu_custom_call.1}
  #allocation0 [shape = 'u32[]', space=smem, size = 0x4, offset = 0x4, fixed_abs, tag = 'smem constant byte address 0x4 - core index']
  #allocation1 [shape = 'u32[144,128]{1,0:T(1,128)}', space=vmem, size = 0x12000, scoped, tag = 'internal scratch']
  #allocation2 [shape = 'f32[8,128]{1,0:T(8,128)}', space=vmem, size = 0x1000, scoped, tag = 'scratch operand']
  #allocation3 [shape = 's32[128,1]{1,0:T(8,128)}', space=vmem, size = 0x10000, scoped, tag = 'scratch operand']
  %s0 = inlined_call_operand.vmem [shape: f32[2,4,128], index: 0, kind: input, shape index: {}]
  %s1 = inlined_call_operand.vmem [shape: f32[2,4,128], index: 1, kind: input, shape index: {}]
  %s2 = inlined_call_operand.vmem [shape: f32[8,4], index: 2, kind: input, shape index: {}]
  %s3 = inlined_call_operand.vmem [shape: f32[8,1], index: 3, kind: input, shape index: {}]
  %s4 = inlined_call_operand.vmem [shape: f32[12,4], index: 4, kind: input, shape index: {}]
  %s5 = inlined_call_operand.vmem [shape: f32[12,1], index: 5, kind: input, shape index: {}]
  %s6 = inlined_call_operand.hbm [shape: f32[2,4,128], index: 6, kind: output, shape index: {0}]
  %s7 = inlined_call_operand.hbm [shape: f32[2,128,128], index: 7, kind: output, shape index: {1}]
  %8 = xla_tuple %s6, %s7
  %s9 = sld [smem:[#allocation0]]
  $region69: #{tpu_custom_call.1} parent=0
    _
  %s11 = ssub.s32 1, %s9
  %s12 = scalar_select 0, %s11, %s9
  $region1: #{tpu_custom_call.1} parent=0
    #allocation4 [shape = 'u8[4096]{0}', space=vmem, size = 0x1000, scoped, tag = 'output window, operand 0']
    #allocation5 [shape = 's32[2]{0}', space=sflag, size = 0x8, scoped, tag = 'scoped memory for tpu_custom_call.1']
    #allocation6 [shape = 'u8[131072]{0}', space=vmem, size = 0x20000, scoped, tag = 'output window, operand 1']
    #allocation7 [shape = 's32[2]{0}', space=sflag, size = 0x8, scoped, tag = 'scoped memory for tpu_custom_call.1']
    %13 = vsyncpa [#allocation5], 0
    %s14 = scalar_lea.sflag [#allocation5], 1
    %15 = vsyncpa %s14, 0
    %16 = vsyncpa [#allocation7], 0
    %s17 = scalar_lea.sflag [#allocation7], 1
    %18 = vsyncpa %s17, 0
    loop: start=0, step=1, limit=4
    $region2: #{tpu_custom_call.1} parent=1 // loop_pre_header
      _
    $region3: #{tpu_custom_call.1} parent=1 // loop_header
      %s20 = sphi 0, %s24
      %p21 = scmp.ge.s32.totalorder %s20, 4
      %s27 = sphi 0, %s39
      %s28 = sphi 0, %s35
      %s29 = sphi 0, %s27
      %s30 = sphi 0, %s28
      %s31 = sphi 0, %s29
      %s32 = sphi 0, %s30
      %s42 = sphi 0, %s44
      %s45 = sphi 0, %s42
      %s46 = sphi 0, %s45
      %s62 = sphi 0, %s46
      %s70 = sphi 0, %s72
      %s73 = sphi 0, %s70
      %s74 = sphi 0, %s73
      %s90 = sphi 0, %s74
      %s94 = sphi 0, %s94
      %s96 = sphi 0, %s94
      %s97 = sphi 0, %s96
      %s111 = sphi 0, %s97
      %s115 = sphi 0, %s115
      %s117 = sphi 0, %s115
      %s118 = sphi 0, %s117
      %s132 = sphi 0, %s118
      %s136 = sphi 0, %s136
      %s138 = sphi 0, %s136
      %s139 = sphi 0, %s138
      %s153 = sphi 0, %s139
      %s157 = sphi 0, %s157
      %s159 = sphi 0, %s157
      %s160 = sphi 0, %s159
      %s174 = sphi 0, %s160
      %s180 = sphi 0, %s182
      %s183 = sphi 0, %s180
      %s184 = sphi 0, %s183
      %s200 = sphi 0, %s184
      %s208 = sphi 0, %s210
      %s211 = sphi 0, %s208
      %s212 = sphi 0, %s211
      %s228 = sphi 0, %s212
    $region4: #{tpu_custom_call.1} parent=1 // loop_header_branch
      %23 = sbr.rel (%p21) target = $region8
    $region5: #{tpu_custom_call.1} parent=1 // loop_body
      %s25 = ssub.s32 %s20, 1
      %s26 = ssub.s32 %s20, 2
      %s33 = sadd.s32 1, %s28
      %p34 = scmp.ge.s32.totalorder %s33, 1
      %s35 = scalar_select %p34, 0, %s33
      %s36 = sadd.s32 1, %s27
      %s37 = scalar_select %p34, %s36, %s27
      %p38 = scmp.ge.s32.totalorder %s37, 2
      %s39 = scalar_select %p38, 0, %s37
      %s40 = ssub.s32 %s27, %s39
      %p41 = scmp.eq.s32.totalorder %s40, 0
      %s43 = sadd.s32 %s42, 1
      %s44 = scalar_select %p41, %s42, %s43
      %p47 = pneg %p41
      %p48 = scmp.eq.s32.totalorder %s20, 1
      %p49 = por %p47, %p48
      %p50 = scmp.ne.s32.totalorder %s42, %s45
      %p51 = scmp.eq.s32.totalorder %s20, 0
      %p52 = por %p50, %p51
      %p53 = scmp.ne.s32.totalorder %s42, %s45
      %p54 = scmp.eq.s32.totalorder %s25, 1
      %p55 = por %p53, %p54
      %p56 = scmp.ne.s32.totalorder %s45, %s46
      %p57 = scmp.eq.s32.totalorder %s25, 0
      %p58 = por %p56, %p57
      %p59 = scmp.ne.s32.totalorder %s45, %s46
      %p60 = scmp.eq.s32.totalorder %s26, 1
      %p61 = por %p59, %p60
      %p63 = scmp.ne.s32.totalorder %s46, %s62
      %p64 = scmp.eq.s32.totalorder %s26, 0
      %p65 = por %p63, %p64
      %s66 = ssub.s32 %s27, %s39
      %s67 = ssub.s32 %s28, %s35
      %s68 = sor.u32 %s66, %s67
      %p69 = scmp.eq.s32.totalorder %s68, 0
      %s71 = sadd.s32 %s70, 1
      %s72 = scalar_select %p69, %s70, %s71
      %p75 = pneg %p69
      %p76 = scmp.eq.s32.totalorder %s20, 1
      %p77 = por %p75, %p76
      %p78 = scmp.ne.s32.totalorder %s70, %s73
      %p79 = scmp.eq.s32.totalorder %s20, 0
      %p80 = por %p78, %p79
      %p81 = scmp.ne.s32.totalorder %s70, %s73
      %p82 = scmp.eq.s32.totalorder %s25, 1
      %p83 = por %p81, %p82
      %p84 = scmp.ne.s32.totalorder %s73, %s74
      %p85 = scmp.eq.s32.totalorder %s25, 0
      %p86 = por %p84, %p85
      %p87 = scmp.ne.s32.totalorder %s73, %s74
      %p88 = scmp.eq.s32.totalorder %s26, 1
      %p89 = por %p87, %p88
      %p91 = scmp.ne.s32.totalorder %s74, %s90
      %p92 = scmp.eq.s32.totalorder %s26, 0
      %p93 = por %p91, %p92
      %s95 = sadd.s32 %s94, 1
      %p98 = scmp.eq.s32.totalorder %s20, 1
      %p99 = scmp.ne.s32.totalorder %s94, %s96
      %p100 = scmp.eq.s32.totalorder %s20, 0
      %p101 = por %p99, %p100
      %p102 = scmp.ne.s32.totalorder %s94, %s96
      %p103 = scmp.eq.s32.totalorder %s25, 1
      %p104 = por %p102, %p103
      %p105 = scmp.ne.s32.totalorder %s96, %s97
      %p106 = scmp.eq.s32.totalorder %s25, 0
      %p107 = por %p105, %p106
      %p108 = scmp.ne.s32.totalorder %s96, %s97
      %p109 = scmp.eq.s32.totalorder %s26, 1
      %p110 = por %p108, %p109
      %p112 = scmp.ne.s32.totalorder %s97, %s111
      %p113 = scmp.eq.s32.totalorder %s26, 0
      %p114 = por %p112, %p113
      %s116 = sadd.s32 %s115, 1
      %p119 = scmp.eq.s32.totalorder %s20, 1
      %p120 = scmp.ne.s32.totalorder %s115, %s117
      %p121 = scmp.eq.s32.totalorder %s20, 0
      %p122 = por %p120, %p121
      %p123 = scmp.ne.s32.totalorder %s115, %s117
      %p124 = scmp.eq.s32.totalorder %s25, 1
      %p125 = por %p123, %p124
      %p126 = scmp.ne.s32.totalorder %s117, %s118
      %p127 = scmp.eq.s32.totalorder %s25, 0
      %p128 = por %p126, %p127
      %p129 = scmp.ne.s32.totalorder %s117, %s118
      %p130 = scmp.eq.s32.totalorder %s26, 1
      %p131 = por %p129, %p130
      %p133 = scmp.ne.s32.totalorder %s118, %s132
      %p134 = scmp.eq.s32.totalorder %s26, 0
      %p135 = por %p133, %p134
      %s137 = sadd.s32 %s136, 1
      %p140 = scmp.eq.s32.totalorder %s20, 1
      %p141 = scmp.ne.s32.totalorder %s136, %s138
      %p142 = scmp.eq.s32.totalorder %s20, 0
      %p143 = por %p141, %p142
      %p144 = scmp.ne.s32.totalorder %s136, %s138
      %p145 = scmp.eq.s32.totalorder %s25, 1
      %p146 = por %p144, %p145
      %p147 = scmp.ne.s32.totalorder %s138, %s139
      %p148 = scmp.eq.s32.totalorder %s25, 0
      %p149 = por %p147, %p148
      %p150 = scmp.ne.s32.totalorder %s138, %s139
      %p151 = scmp.eq.s32.totalorder %s26, 1
      %p152 = por %p150, %p151
      %p154 = scmp.ne.s32.totalorder %s139, %s153
      %p155 = scmp.eq.s32.totalorder %s26, 0
      %p156 = por %p154, %p155
      %s158 = sadd.s32 %s157, 1
      %p161 = scmp.eq.s32.totalorder %s20, 1
      %p162 = scmp.ne.s32.totalorder %s157, %s159
      %p163 = scmp.eq.s32.totalorder %s20, 0
      %p164 = por %p162, %p163
      %p165 = scmp.ne.s32.totalorder %s157, %s159
      %p166 = scmp.eq.s32.totalorder %s25, 1
      %p167 = por %p165, %p166
      %p168 = scmp.ne.s32.totalorder %s159, %s160
      %p169 = scmp.eq.s32.totalorder %s25, 0
      %p170 = por %p168, %p169
      %p171 = scmp.ne.s32.totalorder %s159, %s160
      %p172 = scmp.eq.s32.totalorder %s26, 1
      %p173 = por %p171, %p172
      %p175 = scmp.ne.s32.totalorder %s160, %s174
      %p176 = scmp.eq.s32.totalorder %s26, 0
      %p177 = por %p175, %p176
      %s178 = ssub.s32 %s27, %s39
      %p179 = scmp.eq.s32.totalorder %s178, 0
      %s181 = sadd.s32 %s180, 1
      %s182 = scalar_select %p179, %s180, %s181
      %p185 = pneg %p179
      %p186 = scmp.eq.s32.totalorder %s20, 1
      %p187 = por %p185, %p186
      %p188 = scmp.ne.s32.totalorder %s180, %s183
      %p189 = scmp.eq.s32.totalorder %s20, 0
      %p190 = por %p188, %p189
      %p191 = scmp.ne.s32.totalorder %s180, %s183
      %p192 = scmp.eq.s32.totalorder %s25, 1
      %p193 = por %p191, %p192
      %p194 = scmp.ne.s32.totalorder %s183, %s184
      %p195 = scmp.eq.s32.totalorder %s25, 0
      %p196 = por %p194, %p195
      %p197 = scmp.ne.s32.totalorder %s183, %s184
      %p198 = scmp.eq.s32.totalorder %s26, 1
      %p199 = por %p197, %p198
      %p201 = scmp.ne.s32.totalorder %s184, %s200
      %p202 = scmp.eq.s32.totalorder %s26, 0
      %p203 = por %p201, %p202
      %s204 = ssub.s32 %s27, %s39
      %s205 = ssub.s32 %s28, %s35
      %s206 = sor.u32 %s204, %s205
      %p207 = scmp.eq.s32.totalorder %s206, 0
      %s209 = sadd.s32 %s208, 1
      %s210 = scalar_select %p207, %s208, %s209
      %p213 = pneg %p207
      %p214 = scmp.eq.s32.totalorder %s20, 1
      %p215 = por %p213, %p214
      %p216 = scmp.ne.s32.totalorder %s208, %s211
      %p217 = scmp.eq.s32.totalorder %s20, 0
      %p218 = por %p216, %p217
      %p219 = scmp.ne.s32.totalorder %s208, %s211
      %p220 = scmp.eq.s32.totalorder %s25, 1
      %p221 = por %p219, %p220
      %p222 = scmp.ne.s32.totalorder %s211, %s212
      %p223 = scmp.eq.s32.totalorder %s25, 0
      %p224 = por %p222, %p223
      %p225 = scmp.ne.s32.totalorder %s211, %s212
      %p226 = scmp.eq.s32.totalorder %s26, 1
      %p227 = por %p225, %p226
      %p229 = scmp.ne.s32.totalorder %s212, %s228
      %p230 = scmp.eq.s32.totalorder %s26, 0
      %p231 = por %p229, %p230
      %p232 = scmp.le.s32.totalorder 1, %s20
      %p233 = scmp.lt.s32.totalorder %s20, 3
      %p234 = pnand %p232, %p233
      %p235 = pneg %p234
      // Predicated region
      $region9: #{tpu_custom_call.1} parent=5 // pred_check
        _
      $region10: #{tpu_custom_call.1} parent=5 // pred_check_branch
        %237 = sbr.rel (%p234) target = $region12
      $region11: #{tpu_custom_call.1} parent=5 // pred_region
        %s238 = ssub.s32 %s20, 1
        // Predicated region
        $region13: #{tpu_custom_call.1} parent=11 // pred_check
          %p239 = pneg %p107
        $region14: #{tpu_custom_call.1} parent=11 // pred_check_branch
          %241 = sbr.rel (%p239) target = $region16
        $region15: #{tpu_custom_call.1} parent=11 // pred_region
          _
        $region16: #{tpu_custom_call.1} parent=11 // pred_fallthru
          _
        // Predicated region
        $region17: #{tpu_custom_call.1} parent=11 // pred_check
          %p242 = pneg %p128
        $region18: #{tpu_custom_call.1} parent=11 // pred_check_branch
          %244 = sbr.rel (%p242) target = $region20
        $region19: #{tpu_custom_call.1} parent=11 // pred_region
          _
        $region20: #{tpu_custom_call.1} parent=11 // pred_fallthru
          _
        // Predicated region
        $region21: #{tpu_custom_call.1} parent=11 // pred_check
          %p245 = pneg %p149
        $region22: #{tpu_custom_call.1} parent=11 // pred_check_branch
          %247 = sbr.rel (%p245) target = $region24
        $region23: #{tpu_custom_call.1} parent=11 // pred_region
          _
        $region24: #{tpu_custom_call.1} parent=11 // pred_fallthru
          _
        // Predicated region
        $region25: #{tpu_custom_call.1} parent=11 // pred_check
          %p248 = pneg %p170
        $region26: #{tpu_custom_call.1} parent=11 // pred_check_branch
          %250 = sbr.rel (%p248) target = $region28
        $region27: #{tpu_custom_call.1} parent=11 // pred_region
          _
        $region28: #{tpu_custom_call.1} parent=11 // pred_fallthru
          _
      $region12: #{tpu_custom_call.1} parent=5 // pred_fallthru
        _
      %p251 = scmp.lt.s32.totalorder %s20, 2
      // Predicated region
      $region29: #{tpu_custom_call.1} parent=5 // pred_check
        %p252 = pneg %p251
      $region30: #{tpu_custom_call.1} parent=5 // pred_check_branch
        %254 = sbr.rel (%p252) target = $region32
      $region31: #{tpu_custom_call.1} parent=5 // pred_region
        // Predicated region
        $region33: #{tpu_custom_call.1} parent=31 // pred_check
          %p255 = pneg %p52
        $region34: #{tpu_custom_call.1} parent=31 // pred_check_branch
          %257 = sbr.rel (%p255) target = $region36
        $region35: #{tpu_custom_call.1} parent=31 // pred_region
          %p258 = scmp.lt.s32.totalorder %s27, 1
          %s259 = scalar_select %p258, %s27, 1
          %s260 = smul.addr %s259, 4
          %s261 = scalar_lea.vmem %s0, %s260
        $region36: #{tpu_custom_call.1} parent=31 // pred_fallthru
          _
        // Predicated region
        $region37: #{tpu_custom_call.1} parent=31 // pred_check
          %p262 = pneg %p80
        $region38: #{tpu_custom_call.1} parent=31 // pred_check_branch
          %264 = sbr.rel (%p262) target = $region40
        $region39: #{tpu_custom_call.1} parent=31 // pred_region
          %p265 = scmp.lt.s32.totalorder %s27, 1
          %s266 = scalar_select %p265, %s27, 1
          %p267 = scmp.lt.s32.totalorder %s28, 0
          %s268 = scalar_select %p267, %s28, 0
          %s269 = sadd.s32 %s268, %s266
          %s270 = smul.addr %s269, 4
          %s271 = scalar_lea.vmem %s1, %s270
        $region40: #{tpu_custom_call.1} parent=31 // pred_fallthru
          _
      $region32: #{tpu_custom_call.1} parent=5 // pred_fallthru
        _
      %p272 = scmp.le.s32.totalorder 1, %s20
      %p273 = scmp.lt.s32.totalorder %s20, 3
      %p274 = pnand %p272, %p273
      %p275 = pneg %p274
      // Predicated region
      $region41: #{tpu_custom_call.1} parent=5 // pred_check
        _
      $region42: #{tpu_custom_call.1} parent=5 // pred_check_branch
        %277 = sbr.rel (%p274) target = $region44
      $region43: #{tpu_custom_call.1} parent=5 // pred_region
        %s278 = ssub.s32 %s20, 1
        %p279 = scmp.lt.s32.totalorder %s29, 1
        %s280 = scalar_select %p279, %s29, 1
        %s281 = smul.addr %s280, 4
        %s282 = scalar_lea.vmem %s0, %s281
        %p283 = pneg %p58
        %p284 = pneg %p55
        %p285 = scmp.lt.s32.totalorder %s29, 1
        %s286 = scalar_select %p285, %s29, 1
        %p287 = scmp.lt.s32.totalorder %s30, 0
        %s288 = scalar_select %p287, %s30, 0
        %s289 = sadd.s32 %s288, %s286
        %s290 = smul.addr %s289, 4
        %s291 = scalar_lea.vmem %s1, %s290
        %p292 = pneg %p86
        %p293 = pneg %p83
        %p294 = pneg %p107
        %p295 = pneg %p104
        %p296 = pneg %p128
        %p297 = pneg %p125
        %p298 = pneg %p149
        %p299 = pneg %p146
        %p300 = pneg %p170
        %p301 = pneg %p167
        %p302 = pneg %p196
        %p303 = pneg %p193
        %s304 = sand.u32 %s183, 1
        %s305 = scalar_lea.sflag [#allocation5], %s304
        %s306 = sand.u32 %s183, 1
        %s307 = smul.addr %s306, 4
        %s308 = scalar_lea.vmem [#allocation4], %s307
        %p309 = pneg %p224
        %p310 = pneg %p221
        %s311 = sand.u32 %s211, 1
        %s312 = scalar_lea.sflag [#allocation7], %s311
        %s313 = sand.u32 %s211, 1
        %s314 = smul.addr %s313, 128
        %s315 = scalar_lea.vmem [#allocation6], %s314
        %p316 = scmp.lt.s32.totalorder %s29, 1
        %s317 = scalar_select %p316, %s29, 1
        %s318 = smul.addr %s317, 4
        %s319 = scalar_lea.vmem %s0, %s318
        %p320 = scmp.lt.s32.totalorder %s29, 1
        %s321 = scalar_select %p320, %s29, 1
        %p322 = scmp.lt.s32.totalorder %s30, 0
        %s323 = scalar_select %p322, %s30, 0
        %s324 = sadd.s32 %s323, %s321
        %s325 = smul.addr %s324, 4
        %s326 = scalar_lea.vmem %s1, %s325
        %p327 = scmp.eq.s32.totalorder %s30, 0
        // Predicated region
        $region45: #{tpu_custom_call.1} parent=43 // pred_check
          %p328 = pneg %p327
        $region46: #{tpu_custom_call.1} parent=43 // pred_check_branch
          %330 = sbr.rel (%p328) target = $region48
        $region47: #{tpu_custom_call.1} parent=43 // pred_region
          %v331 = vld [vmem:[%s319] sm:$0xf]
          %v332 = vld [vmem:[%s2] sm:$0xff]
          %v333 = vld [vmem:[%s3] sm:$0xff]
          %335 = vset.pattern.permute.xlu0 0
          %336 = vperm.xlu0 %335, %v333
          %v337 = vpop.permute.xlu0 %336
          %vm339 = vcmask 31744
          %v341 = vsel %vm339, %v332, 0
          %vm343 = vcmask 1043456
          %v345 = vsel %vm343, %v331, 0
          %347 = vmatprep.subr.mxu0 0.0
          %v348 = vand.u32 %v345, 4294901760
          %349 = vmatpush1.msra.mxu0 %v348
          %350 = vmatprep.subr.mxu0 0.0
          %351 = vmatpush1.msra.mxu0 0.0
          %352 = vmatprep.subr.mxu0 0.0
          %353 = vmatpush1.msra.mxu0 0.0
          %354 = vmatprep.subr.mxu0 0.0
          %355 = vmatpush1.msra.mxu0 0.0
          %356 = vmatprep.subr.mxu0 0.0
          %357 = vmatpush1.msra.mxu0 0.0
          %358 = vmatprep.subr.mxu0 0.0
          %359 = vmatpush1.msra.mxu0 0.0
          %360 = vmatprep.subr.mxu0 0.0
          %361 = vmatpush1.msra.mxu0 0.0
          %362 = vmatprep.subr.mxu0 0.0
          %363 = vmatpush1.msra.mxu0 0.0
          %364 = vmatprep.subr.mxu0 0.0
          %365 = vmatpush1.msra.mxu0 0.0
          %366 = vmatprep.subr.mxu0 0.0
          %367 = vmatpush1.msra.mxu0 0.0
          %368 = vmatprep.subr.mxu0 0.0
          %369 = vmatpush1.msra.mxu0 0.0
          %370 = vmatprep.subr.mxu0 0.0
          %371 = vmatpush1.msra.mxu0 0.0
          %372 = vmatprep.subr.mxu0 0.0
          %373 = vmatpush1.msra.mxu0 0.0
          %374 = vmatprep.subr.mxu0 0.0
          %375 = vmatpush1.msra.mxu0 0.0
          %376 = vmatprep.subr.mxu0 0.0
          %377 = vmatpush1.msra.mxu0 0.0
          %378 = vmatprep.subr.mxu0 0.0
          %379 = vmatpush1.msra.mxu0 0.0
          %380 = vmatprep.subr.mxu0 0.0
          %381 = vmatpush1.msra.mxu0 0.0
          %382 = vmatprep.subr.mxu0 0.0
          %383 = vmatpush1.msra.mxu0 0.0
          %384 = vmatprep.subr.mxu0 0.0
          %385 = vmatpush1.msra.mxu0 0.0
          %386 = vmatprep.subr.mxu0 0.0
          %387 = vmatpush1.msra.mxu0 0.0
          %388 = vmatprep.subr.mxu0 0.0
          %389 = vmatpush1.msra.mxu0 0.0
          %390 = vmatprep.subr.mxu0 0.0
          %391 = vmatpush1.msra.mxu0 0.0
          %392 = vmatprep.subr.mxu0 0.0
          %393 = vmatpush1.msra.mxu0 0.0
          %394 = vmatprep.subr.mxu0 0.0
          %395 = vmatpush1.msra.mxu0 0.0
          %396 = vmatprep.subr.mxu0 0.0
          %397 = vmatpush1.msra.mxu0 0.0
          %398 = vmatprep.subr.mxu0 0.0
          %399 = vmatpush1.msra.mxu0 0.0
          %400 = vmatprep.subr.mxu0 0.0
          %401 = vmatpush1.msra.mxu0 0.0
          %402 = vmatprep.subr.mxu0 0.0
          %403 = vmatpush1.msra.mxu0 0.0
          %404 = vmatprep.subr.mxu0 0.0
          %405 = vmatpush1.msra.mxu0 0.0
          %406 = vmatprep.subr.mxu0 0.0
          %407 = vmatpush1.msra.mxu0 0.0
          %408 = vmatprep.subr.mxu0 0.0
          %409 = vmatpush1.msra.mxu0 0.0
          %410 = vmatprep.subr.mxu0 0.0
          %411 = vmatpush1.msra.mxu0 0.0
          %412 = vmatprep.mubr.f32.mxu0 0.0
          %v413 = vand.u32 %v341, 4294901760
          %v414 = vsub.f32 %v341, %v413
          %v415 = vand.u32 %v414, 4294901760
          %v416 = vsub.f32 %v414, %v415
          %v417 = vand.u32 %v416, 4294901760
          %418 = vmatmul.mubr.f32.gmra.mrb[0].mxu0 %v417
          %v419 = vpop.f32.mrb[0].mxu0
          %v420 = vadd.f32 %v337, %v419
          %v421 = vpop.f32.mrb[0].mxu0
          %422 = vdwg.mxu0
          %423 = vmatprep.subr.mxu0 0.0
          %v424 = vand.u32 %v345, 4294901760
          %v425 = vsub.f32 %v345, %v424
          %v426 = vand.u32 %v425, 4294901760
          %v427 = vsub.f32 %v425, %v426
          %v428 = vand.u32 %v427, 4294901760
          %429 = vmatpush1.msra.mxu0 %v428
          %430 = vmatprep.subr.mxu0 0.0
          %431 = vmatpush1.msra.mxu0 0.0
          %432 = vmatprep.subr.mxu0 0.0
          %433 = vmatpush1.msra.mxu0 0.0
          %434 = vmatprep.subr.mxu0 0.0
          %435 = vmatpush1.msra.mxu0 0.0
          %436 = vmatprep.subr.mxu0 0.0
          %437 = vmatpush1.msra.mxu0 0.0
          %438 = vmatprep.subr.mxu0 0.0
          %439 = vmatpush1.msra.mxu0 0.0
          %440 = vmatprep.subr.mxu0 0.0
          %441 = vmatpush1.msra.mxu0 0.0
          %442 = vmatprep.subr.mxu0 0.0
          %443 = vmatpush1.msra.mxu0 0.0
          %444 = vmatprep.subr.mxu0 0.0
          %445 = vmatpush1.msra.mxu0 0.0
          %446 = vmatprep.subr.mxu0 0.0
          %447 = vmatpush1.msra.mxu0 0.0
          %448 = vmatprep.subr.mxu0 0.0
          %449 = vmatpush1.msra.mxu0 0.0
          %450 = vmatprep.subr.mxu0 0.0
          %451 = vmatpush1.msra.mxu0 0.0
          %452 = vmatprep.subr.mxu0 0.0
          %453 = vmatpush1.msra.mxu0 0.0
          %454 = vmatprep.subr.mxu0 0.0
          %455 = vmatpush1.msra.mxu0 0.0
          %456 = vmatprep.subr.mxu0 0.0
          %457 = vmatpush1.msra.mxu0 0.0
          %458 = vmatprep.subr.mxu0 0.0
          %459 = vmatpush1.msra.mxu0 0.0
          %460 = vmatprep.subr.mxu0 0.0
          %461 = vmatpush1.msra.mxu0 0.0
          %462 = vmatprep.subr.mxu0 0.0
          %463 = vmatpush1.msra.mxu0 0.0
          %464 = vmatprep.subr.mxu0 0.0
          %465 = vmatpush1.msra.mxu0 0.0
          %466 = vmatprep.subr.mxu0 0.0
          %467 = vmatpush1.msra.mxu0 0.0
          %468 = vmatprep.subr.mxu0 0.0
          %469 = vmatpush1.msra.mxu0 0.0
          %470 = vmatprep.subr.mxu0 0.0
          %471 = vmatpush1.msra.mxu0 0.0
          %472 = vmatprep.subr.mxu0 0.0
          %473 = vmatpush1.msra.mxu0 0.0
          %474 = vmatprep.subr.mxu0 0.0
          %475 = vmatpush1.msra.mxu0 0.0
          %476 = vmatprep.subr.mxu0 0.0
          %477 = vmatpush1.msra.mxu0 0.0
          %478 = vmatprep.subr.mxu0 0.0
          %479 = vmatpush1.msra.mxu0 0.0
          %480 = vmatprep.subr.mxu0 0.0
          %481 = vmatpush1.msra.mxu0 0.0
          %482 = vmatprep.subr.mxu0 0.0
          %483 = vmatpush1.msra.mxu0 0.0
          %484 = vmatprep.subr.mxu0 0.0
          %485 = vmatpush1.msra.mxu0 0.0
          %486 = vmatprep.subr.mxu0 0.0
          %487 = vmatpush1.msra.mxu0 0.0
          %488 = vmatprep.subr.mxu0 0.0
          %489 = vmatpush1.msra.mxu0 0.0
          %490 = vmatprep.subr.mxu0 0.0
          %491 = vmatpush1.msra.mxu0 0.0
          %492 = vmatprep.mubr.f32.mxu0 0.0
          %v493 = vand.u32 %v341, 4294901760
          %494 = vmatmul.mubr.f32.gmra.mrb[0].mxu0 %v493
          %v495 = vpop.f32.mrb[0].mxu0
          %v496 = vadd.f32 %v420, %v495
          %v497 = vpop.f32.mrb[0].mxu0
          %498 = vdwg.mxu0
          %499 = vmatprep.subr.mxu0 0.0
          %v500 = vand.u32 %v345, 4294901760
          %v501 = vsub.f32 %v345, %v500
          %502 = vmatpush1.msra.mxu0 %v501
          %503 = vmatprep.subr.mxu0 0.0
          %504 = vmatpush1.msra.mxu0 0.0
          %505 = vmatprep.subr.mxu0 0.0
          %506 = vmatpush1.msra.mxu0 0.0
          %507 = vmatprep.subr.mxu0 0.0
          %508 = vmatpush1.msra.mxu0 0.0
          %509 = vmatprep.subr.mxu0 0.0
          %510 = vmatpush1.msra.mxu0 0.0
          %511 = vmatprep.subr.mxu0 0.0
          %512 = vmatpush1.msra.mxu0 0.0
          %513 = vmatprep.subr.mxu0 0.0
          %514 = vmatpush1.msra.mxu0 0.0
          %515 = vmatprep.subr.mxu0 0.0
          %516 = vmatpush1.msra.mxu0 0.0
          %517 = vmatprep.subr.mxu0 0.0
          %518 = vmatpush1.msra.mxu0 0.0
          %519 = vmatprep.subr.mxu0 0.0
          %520 = vmatpush1.msra.mxu0 0.0
          %521 = vmatprep.subr.mxu0 0.0
          %522 = vmatpush1.msra.mxu0 0.0
          %523 = vmatprep.subr.mxu0 0.0
          %524 = vmatpush1.msra.mxu0 0.0
          %525 = vmatprep.subr.mxu0 0.0
          %526 = vmatpush1.msra.mxu0 0.0
          %527 = vmatprep.subr.mxu0 0.0
          %528 = vmatpush1.msra.mxu0 0.0
          %529 = vmatprep.subr.mxu0 0.0
          %530 = vmatpush1.msra.mxu0 0.0
          %531 = vmatprep.subr.mxu0 0.0
          %532 = vmatpush1.msra.mxu0 0.0
          %533 = vmatprep.subr.mxu0 0.0
          %534 = vmatpush1.msra.mxu0 0.0
          %535 = vmatprep.subr.mxu0 0.0
          %536 = vmatpush1.msra.mxu0 0.0
          %537 = vmatprep.subr.mxu0 0.0
          %538 = vmatpush1.msra.mxu0 0.0
          %539 = vmatprep.subr.mxu0 0.0
          %540 = vmatpush1.msra.mxu0 0.0
          %541 = vmatprep.subr.mxu0 0.0
          %542 = vmatpush1.msra.mxu0 0.0
          %543 = vmatprep.subr.mxu0 0.0
          %544 = vmatpush1.msra.mxu0 0.0
          %545 = vmatprep.subr.mxu0 0.0
          %546 = vmatpush1.msra.mxu0 0.0
          %547 = vmatprep.subr.mxu0 0.0
          %548 = vmatpush1.msra.mxu0 0.0
          %549 = vmatprep.subr.mxu0 0.0
          %550 = vmatpush1.msra.mxu0 0.0
          %551 = vmatprep.subr.mxu0 0.0
          %552 = vmatpush1.msra.mxu0 0.0
          %553 = vmatprep.subr.mxu0 0.0
          %554 = vmatpush1.msra.mxu0 0.0
          %555 = vmatprep.subr.mxu0 0.0
          %556 = vmatpush1.msra.mxu0 0.0
          %557 = vmatprep.subr.mxu0 0.0
          %558 = vmatpush1.msra.mxu0 0.0
          %559 = vmatprep.subr.mxu0 0.0
          %560 = vmatpush1.msra.mxu0 0.0
          %561 = vmatprep.subr.mxu0 0.0
          %562 = vmatpush1.msra.mxu0 0.0
          %563 = vmatprep.subr.mxu0 0.0
          %564 = vmatpush1.msra.mxu0 0.0
          %565 = vmatprep.mubr.f32.mxu0 0.0
          %v566 = vand.u32 %v341, 4294901760
          %v567 = vsub.f32 %v341, %v566
          %568 = vmatmul.mubr.f32.gmra.mrb[0].mxu0 %v567
          %v569 = vpop.f32.mrb[0].mxu0
          %v570 = vadd.f32 %v496, %v569
          %v571 = vpop.f32.mrb[0].mxu0
          %572 = vdwg.mxu0
          %573 = vmatprep.subr.mxu0 0.0
          %v574 = vand.u32 %v345, 4294901760
          %575 = vmatpush1.msra.mxu0 %v574
          %576 = vmatprep.subr.mxu0 0.0
          %577 = vmatpush1.msra.mxu0 0.0
          %578 = vmatprep.subr.mxu0 0.0
          %579 = vmatpush1.msra.mxu0 0.0
          %580 = vmatprep.subr.mxu0 0.0
          %581 = vmatpush1.msra.mxu0 0.0
          %582 = vmatprep.subr.mxu0 0.0
          %583 = vmatpush1.msra.mxu0 0.0
          %584 = vmatprep.subr.mxu0 0.0
          %585 = vmatpush1.msra.mxu0 0.0
          %586 = vmatprep.subr.mxu0 0.0
          %587 = vmatpush1.msra.mxu0 0.0
          %588 = vmatprep.subr.mxu0 0.0
          %589 = vmatpush1.msra.mxu0 0.0
          %590 = vmatprep.subr.mxu0 0.0
          %591 = vmatpush1.msra.mxu0 0.0
          %592 = vmatprep.subr.mxu0 0.0
          %593 = vmatpush1.msra.mxu0 0.0
          %594 = vmatprep.subr.mxu0 0.0
          %595 = vmatpush1.msra.mxu0 0.0
          %596 = vmatprep.subr.mxu0 0.0
          %597 = vmatpush1.msra.mxu0 0.0
          %598 = vmatprep.subr.mxu0 0.0
          %599 = vmatpush1.msra.mxu0 0.0
          %600 = vmatprep.subr.mxu0 0.0
          %601 = vmatpush1.msra.mxu0 0.0
          %602 = vmatprep.subr.mxu0 0.0
          %603 = vmatpush1.msra.mxu0 0.0
          %604 = vmatprep.subr.mxu0 0.0
          %605 = vmatpush1.msra.mxu0 0.0
          %606 = vmatprep.subr.mxu0 0.0
          %607 = vmatpush1.msra.mxu0 0.0
          %608 = vmatprep.subr.mxu0 0.0
          %609 = vmatpush1.msra.mxu0 0.0
          %610 = vmatprep.subr.mxu0 0.0
          %611 = vmatpush1.msra.mxu0 0.0
          %612 = vmatprep.subr.mxu0 0.0
          %613 = vmatpush1.msra.mxu0 0.0
          %614 = vmatprep.subr.mxu0 0.0
          %615 = vmatpush1.msra.mxu0 0.0
          %616 = vmatprep.subr.mxu0 0.0
          %617 = vmatpush1.msra.mxu0 0.0
          %618 = vmatprep.subr.mxu0 0.0
          %619 = vmatpush1.msra.mxu0 0.0
          %620 = vmatprep.subr.mxu0 0.0
          %621 = vmatpush1.msra.mxu0 0.0
          %622 = vmatprep.subr.mxu0 0.0
          %623 = vmatpush1.msra.mxu0 0.0
          %624 = vmatprep.subr.mxu0 0.0
          %625 = vmatpush1.msra.mxu0 0.0
          %626 = vmatprep.subr.mxu0 0.0
          %627 = vmatpush1.msra.mxu0 0.0
          %628 = vmatprep.subr.mxu0 0.0
          %629 = vmatpush1.msra.mxu0 0.0
          %630 = vmatprep.subr.mxu0 0.0
          %631 = vmatpush1.msra.mxu0 0.0
          %632 = vmatprep.subr.mxu0 0.0
          %633 = vmatpush1.msra.mxu0 0.0
          %634 = vmatprep.subr.mxu0 0.0
          %635 = vmatpush1.msra.mxu0 0.0
          %636 = vmatprep.subr.mxu0 0.0
          %637 = vmatpush1.msra.mxu0 0.0
          %638 = vmatprep.mubr.f32.mxu0 0.0
          %v639 = vand.u32 %v341, 4294901760
          %v640 = vsub.f32 %v341, %v639
          %v641 = vand.u32 %v640, 4294901760
          %642 = vmatmul.mubr.f32.gmra.mrb[0].mxu0 %v641
          %v643 = vpop.f32.mrb[0].mxu0
          %v644 = vadd.f32 %v570, %v643
          %v645 = vpop.f32.mrb[0].mxu0
          %646 = vdwg.mxu0
          %647 = vmatprep.subr.mxu0 0.0
          %v648 = vand.u32 %v345, 4294901760
          %v649 = vsub.f32 %v345, %v648
          %v650 = vand.u32 %v649, 4294901760
          %651 = vmatpush1.msra.mxu0 %v650
          %652 = vmatprep.subr.mxu0 0.0
          %653 = vmatpush1.msra.mxu0 0.0
          %654 = vmatprep.subr.mxu0 0.0
          %655 = vmatpush1.msra.mxu0 0.0
          %656 = vmatprep.subr.mxu0 0.0
          %657 = vmatpush1.msra.mxu0 0.0
          %658 = vmatprep.subr.mxu0 0.0
          %659 = vmatpush1.msra.mxu0 0.0
          %660 = vmatprep.subr.mxu0 0.0
          %661 = vmatpush1.msra.mxu0 0.0
          %662 = vmatprep.subr.mxu0 0.0
          %663 = vmatpush1.msra.mxu0 0.0
          %664 = vmatprep.subr.mxu0 0.0
          %665 = vmatpush1.msra.mxu0 0.0
          %666 = vmatprep.subr.mxu0 0.0
          %667 = vmatpush1.msra.mxu0 0.0
          %668 = vmatprep.subr.mxu0 0.0
          %669 = vmatpush1.msra.mxu0 0.0
          %670 = vmatprep.subr.mxu0 0.0
          %671 = vmatpush1.msra.mxu0 0.0
          %672 = vmatprep.subr.mxu0 0.0
          %673 = vmatpush1.msra.mxu0 0.0
          %674 = vmatprep.subr.mxu0 0.0
          %675 = vmatpush1.msra.mxu0 0.0
          %676 = vmatprep.subr.mxu0 0.0
          %677 = vmatpush1.msra.mxu0 0.0
          %678 = vmatprep.subr.mxu0 0.0
          %679 = vmatpush1.msra.mxu0 0.0
          %680 = vmatprep.subr.mxu0 0.0
          %681 = vmatpush1.msra.mxu0 0.0
          %682 = vmatprep.subr.mxu0 0.0
          %683 = vmatpush1.msra.mxu0 0.0
          %684 = vmatprep.subr.mxu0 0.0
          %685 = vmatpush1.msra.mxu0 0.0
          %686 = vmatprep.subr.mxu0 0.0
          %687 = vmatpush1.msra.mxu0 0.0
          %688 = vmatprep.subr.mxu0 0.0
          %689 = vmatpush1.msra.mxu0 0.0
          %690 = vmatprep.subr.mxu0 0.0
          %691 = vmatpush1.msra.mxu0 0.0
          %692 = vmatprep.subr.mxu0 0.0
          %693 = vmatpush1.msra.mxu0 0.0
          %694 = vmatprep.subr.mxu0 0.0
          %695 = vmatpush1.msra.mxu0 0.0
          %696 = vmatprep.subr.mxu0 0.0
          %697 = vmatpush1.msra.mxu0 0.0
          %698 = vmatprep.subr.mxu0 0.0
          %699 = vmatpush1.msra.mxu0 0.0
          %700 = vmatprep.subr.mxu0 0.0
          %701 = vmatpush1.msra.mxu0 0.0
          %702 = vmatprep.subr.mxu0 0.0
          %703 = vmatpush1.msra.mxu0 0.0
          %704 = vmatprep.subr.mxu0 0.0
          %705 = vmatpush1.msra.mxu0 0.0
          %706 = vmatprep.subr.mxu0 0.0
          %707 = vmatpush1.msra.mxu0 0.0
          %708 = vmatprep.subr.mxu0 0.0
          %709 = vmatpush1.msra.mxu0 0.0
          %710 = vmatprep.subr.mxu0 0.0
          %711 = vmatpush1.msra.mxu0 0.0
          %712 = vmatprep.subr.mxu0 0.0
          %713 = vmatpush1.msra.mxu0 0.0
          %714 = vmatprep.mubr.f32.mxu0 0.0
          %v715 = vand.u32 %v341, 4294901760
          %716 = vmatmul.mubr.f32.gmra.mrb[0].mxu0 %v715
          %v717 = vpop.f32.mrb[0].mxu0
          %v718 = vadd.f32 %v644, %v717
          %v719 = vpop.f32.mrb[0].mxu0
          %720 = vdwg.mxu0
          %721 = vmatprep.subr.mxu0 0.0
          %v722 = vand.u32 %v345, 4294901760
          %723 = vmatpush1.msra.mxu0 %v722
          %724 = vmatprep.subr.mxu0 0.0
          %725 = vmatpush1.msra.mxu0 0.0
          %726 = vmatprep.subr.mxu0 0.0
          %727 = vmatpush1.msra.mxu0 0.0
          %728 = vmatprep.subr.mxu0 0.0
          %729 = vmatpush1.msra.mxu0 0.0
          %730 = vmatprep.subr.mxu0 0.0
          %731 = vmatpush1.msra.mxu0 0.0
          %732 = vmatprep.subr.mxu0 0.0
          %733 = vmatpush1.msra.mxu0 0.0
          %734 = vmatprep.subr.mxu0 0.0
          %735 = vmatpush1.msra.mxu0 0.0
          %736 = vmatprep.subr.mxu0 0.0
          %737 = vmatpush1.msra.mxu0 0.0
          %738 = vmatprep.subr.mxu0 0.0
          %739 = vmatpush1.msra.mxu0 0.0
          %740 = vmatprep.subr.mxu0 0.0
          %741 = vmatpush1.msra.mxu0 0.0
          %742 = vmatprep.subr.mxu0 0.0
          %743 = vmatpush1.msra.mxu0 0.0
          %744 = vmatprep.subr.mxu0 0.0
          %745 = vmatpush1.msra.mxu0 0.0
          %746 = vmatprep.subr.mxu0 0.0
          %747 = vmatpush1.msra.mxu0 0.0
          %748 = vmatprep.subr.mxu0 0.0
          %749 = vmatpush1.msra.mxu0 0.0
          %750 = vmatprep.subr.mxu0 0.0
          %751 = vmatpush1.msra.mxu0 0.0
          %752 = vmatprep.subr.mxu0 0.0
          %753 = vmatpush1.msra.mxu0 0.0
          %754 = vmatprep.subr.mxu0 0.0
          %755 = vmatpush1.msra.mxu0 0.0
          %756 = vmatprep.subr.mxu0 0.0
          %757 = vmatpush1.msra.mxu0 0.0
          %758 = vmatprep.subr.mxu0 0.0
          %759 = vmatpush1.msra.mxu0 0.0
          %760 = vmatprep.subr.mxu0 0.0
          %761 = vmatpush1.msra.mxu0 0.0
          %762 = vmatprep.subr.mxu0 0.0
          %763 = vmatpush1.msra.mxu0 0.0
          %764 = vmatprep.subr.mxu0 0.0
          %765 = vmatpush1.msra.mxu0 0.0
          %766 = vmatprep.subr.mxu0 0.0
          %767 = vmatpush1.msra.mxu0 0.0
          %768 = vmatprep.subr.mxu0 0.0
          %769 = vmatpush1.msra.mxu0 0.0
          %770 = vmatprep.subr.mxu0 0.0
          %771 = vmatpush1.msra.mxu0 0.0
          %772 = vmatprep.subr.mxu0 0.0
          %773 = vmatpush1.msra.mxu0 0.0
          %774 = vmatprep.subr.mxu0 0.0
          %775 = vmatpush1.msra.mxu0 0.0
          %776 = vmatprep.subr.mxu0 0.0
          %777 = vmatpush1.msra.mxu0 0.0
          %778 = vmatprep.subr.mxu0 0.0
          %779 = vmatpush1.msra.mxu0 0.0
          %780 = vmatprep.subr.mxu0 0.0
          %781 = vmatpush1.msra.mxu0 0.0
          %782 = vmatprep.subr.mxu0 0.0
          %783 = vmatpush1.msra.mxu0 0.0
          %784 = vmatprep.subr.mxu0 0.0
          %785 = vmatpush1.msra.mxu0 0.0
          %786 = vmatprep.mubr.f32.mxu0 0.0
          %v787 = vand.u32 %v341, 4294901760
          %788 = vmatmul.mubr.f32.gmra.mrb[0].mxu0 %v787
          %v789 = vpop.f32.mrb[0].mxu0
          %v790 = vadd.f32 %v718, %v789
          %v791 = vpop.f32.mrb[0].mxu0
          %792 = vdwg.mxu0
          %793 = vst [vmem:[#allocation2] sm:$0xff] %v790
          %v794 = vlaneseq
          %v795 = vshrl.u32 %v794, 7
          %v796 = vadd.s32 %v795, 8
          %v797 = vadd.s32 %v795, 16
          %v798 = vadd.s32 %v795, 24
          %v799 = vadd.s32 %v795, 32
          %v800 = vadd.s32 %v795, 40
          %v801 = vadd.s32 %v795, 48
          %v802 = vadd.s32 %v795, 56
          %v803 = vadd.s32 %v795, 64
          %v804 = vadd.s32 %v795, 72
          %v805 = vadd.s32 %v795, 80
          %v806 = vadd.s32 %v795, 88
          %v807 = vadd.s32 %v795, 96
          %v808 = vadd.s32 %v795, 104
          %v809 = vadd.s32 %v795, 112
          %v810 = vadd.s32 %v795, 120
          %vm811 = vcmp.lt.s32.totalorder %v795, 8
          %vm812 = vcmp.lt.s32.totalorder %v796, 8
          %vm813 = vcmp.lt.s32.totalorder %v797, 8
          %vm814 = vcmp.lt.s32.totalorder %v798, 8
          %vm815 = vcmp.lt.s32.totalorder %v799, 8
          %vm816 = vcmp.lt.s32.totalorder %v800, 8
          %vm817 = vcmp.lt.s32.totalorder %v801, 8
          %vm818 = vcmp.lt.s32.totalorder %v802, 8
          %vm819 = vcmp.lt.s32.totalorder %v803, 8
          %vm820 = vcmp.lt.s32.totalorder %v804, 8
          %vm821 = vcmp.lt.s32.totalorder %v805, 8
          %vm822 = vcmp.lt.s32.totalorder %v806, 8
          %vm823 = vcmp.lt.s32.totalorder %v807, 8
          %vm824 = vcmp.lt.s32.totalorder %v808, 8
          %vm825 = vcmp.lt.s32.totalorder %v809, 8
          %vm826 = vcmp.lt.s32.totalorder %v810, 8
          %v827 = vsel %vm811, %v795, 4294967295
          %v828 = vsel %vm812, %v796, 4294967295
          %v829 = vsel %vm813, %v797, 4294967295
          %v830 = vsel %vm814, %v798, 4294967295
          %v831 = vsel %vm815, %v799, 4294967295
          %v832 = vsel %vm816, %v800, 4294967295
          %v833 = vsel %vm817, %v801, 4294967295
          %v834 = vsel %vm818, %v802, 4294967295
          %v835 = vsel %vm819, %v803, 4294967295
          %v836 = vsel %vm820, %v804, 4294967295
          %v837 = vsel %vm821, %v805, 4294967295
          %v838 = vsel %vm822, %v806, 4294967295
          %v839 = vsel %vm823, %v807, 4294967295
          %v840 = vsel %vm824, %v808, 4294967295
          %v841 = vsel %vm825, %v809, 4294967295
          %v842 = vsel %vm826, %v810, 4294967295
          %vm843 = vcmask 7168
          %844 = vst.msk [vmem:[#allocation3] sm:$0xff] %vm843, %v827
          %845 = vst.msk [vmem:[#allocation3 + $0x8] sm:$0xff] %vm843, %v828
          %846 = vst.msk [vmem:[#allocation3 + $0x10] sm:$0xff] %vm843, %v829
          %847 = vst.msk [vmem:[#allocation3 + $0x18] sm:$0xff] %vm843, %v830
          %848 = vst.msk [vmem:[#allocation3 + $0x20] sm:$0xff] %vm843, %v831
          %849 = vst.msk [vmem:[#allocation3 + $0x28] sm:$0xff] %vm843, %v832
          %850 = vst.msk [vmem:[#allocation3 + $0x30] sm:$0xff] %vm843, %v833
          %851 = vst.msk [vmem:[#allocation3 + $0x38] sm:$0xff] %vm843, %v834
          %852 = vst.msk [vmem:[#allocation3 + $0x40] sm:$0xff] %vm843, %v835
          %853 = vst.msk [vmem:[#allocation3 + $0x48] sm:$0xff] %vm843, %v836
          %854 = vst.msk [vmem:[#allocation3 + $0x50] sm:$0xff] %vm843, %v837
          %855 = vst.msk [vmem:[#allocation3 + $0x58] sm:$0xff] %vm843, %v838
          %856 = vst.msk [vmem:[#allocation3 + $0x60] sm:$0xff] %vm843, %v839
          %857 = vst.msk [vmem:[#allocation3 + $0x68] sm:$0xff] %vm843, %v840
          %858 = vst.msk [vmem:[#allocation3 + $0x70] sm:$0xff] %vm843, %v841
          %859 = vst.msk [vmem:[#allocation3 + $0x78] sm:$0xff] %vm843, %v842
          %860 = vst [vmem:[%s308] sm:$0xf] 0.0
        $region48: #{tpu_custom_call.1} parent=43 // pred_fallthru
          _
        %v861 = vld [vmem:[%s326] sm:$0xf]
        %v862 = vld [vmem:[%s4] sm:$0xff]
        %v863 = vld [vmem:[%s4 + $0x8] sm:$0xf]
        %v864 = vld [vmem:[%s5] sm:$0xff]
        %v865 = vld [vmem:[%s5 + $0x8] sm:$0xf]
        %867 = vset.pattern.permute.xlu0 0
        %868 = vperm.xlu0 %867, %v864
        %v869 = vpop.permute.xlu0 %868
        %872 = vset.pattern.permute.xlu0 0
        %873 = vperm.xlu0 %872, %v865
        %v874 = vpop.permute.xlu0 %873
        %vm876 = vcmask 31744
        %v878 = vsel %vm876, %v862, 0
        %v881 = vsel %vm876, %v863, 0
        %vm883 = vcmask 1043456
        %v885 = vsel %vm883, %v861, 0
        %887 = vmatprep.subr.mxu0 0.0
        %v888 = vand.u32 %v885, 4294901760
        %889 = vmatpush1.msra.mxu0 %v888
        %890 = vmatprep.subr.mxu0 0.0
        %891 = vmatpush1.msra.mxu0 0.0
        %892 = vmatprep.subr.mxu0 0.0
        %893 = vmatpush1.msra.mxu0 0.0
        %894 = vmatprep.subr.mxu0 0.0
        %895 = vmatpush1.msra.mxu0 0.0
        %896 = vmatprep.subr.mxu0 0.0
        %897 = vmatpush1.msra.mxu0 0.0
        %898 = vmatprep.subr.mxu0 0.0
        %899 = vmatpush1.msra.mxu0 0.0
        %900 = vmatprep.subr.mxu0 0.0
        %901 = vmatpush1.msra.mxu0 0.0
        %902 = vmatprep.subr.mxu0 0.0
        %903 = vmatpush1.msra.mxu0 0.0
        %904 = vmatprep.subr.mxu0 0.0
        %905 = vmatpush1.msra.mxu0 0.0
        %906 = vmatprep.subr.mxu0 0.0
        %907 = vmatpush1.msra.mxu0 0.0
        %908 = vmatprep.subr.mxu0 0.0
        %909 = vmatpush1.msra.mxu0 0.0
        %910 = vmatprep.subr.mxu0 0.0
        %911 = vmatpush1.msra.mxu0 0.0
        %912 = vmatprep.subr.mxu0 0.0
        %913 = vmatpush1.msra.mxu0 0.0
        %914 = vmatprep.subr.mxu0 0.0
        %915 = vmatpush1.msra.mxu0 0.0
        %916 = vmatprep.subr.mxu0 0.0
        %917 = vmatpush1.msra.mxu0 0.0
        %918 = vmatprep.subr.mxu0 0.0
        %919 = vmatpush1.msra.mxu0 0.0
        %920 = vmatprep.subr.mxu0 0.0
        %921 = vmatpush1.msra.mxu0 0.0
        %922 = vmatprep.subr.mxu0 0.0
        %923 = vmatpush1.msra.mxu0 0.0
        %924 = vmatprep.subr.mxu0 0.0
        %925 = vmatpush1.msra.mxu0 0.0
        %926 = vmatprep.subr.mxu0 0.0
        %927 = vmatpush1.msra.mxu0 0.0
        %928 = vmatprep.subr.mxu0 0.0
        %929 = vmatpush1.msra.mxu0 0.0
        %930 = vmatprep.subr.mxu0 0.0
        %931 = vmatpush1.msra.mxu0 0.0
        %932 = vmatprep.subr.mxu0 0.0
        %933 = vmatpush1.msra.mxu0 0.0
        %934 = vmatprep.subr.mxu0 0.0
        %935 = vmatpush1.msra.mxu0 0.0
        %936 = vmatprep.subr.mxu0 0.0
        %937 = vmatpush1.msra.mxu0 0.0
        %938 = vmatprep.subr.mxu0 0.0
        %939 = vmatpush1.msra.mxu0 0.0
        %940 = vmatprep.subr.mxu0 0.0
        %941 = vmatpush1.msra.mxu0 0.0
        %942 = vmatprep.subr.mxu0 0.0
        %943 = vmatpush1.msra.mxu0 0.0
        %944 = vmatprep.subr.mxu0 0.0
        %945 = vmatpush1.msra.mxu0 0.0
        %946 = vmatprep.subr.mxu0 0.0
        %947 = vmatpush1.msra.mxu0 0.0
        %948 = vmatprep.subr.mxu0 0.0
        %949 = vmatpush1.msra.mxu0 0.0
        %950 = vmatprep.subr.mxu0 0.0
        %951 = vmatpush1.msra.mxu0 0.0
        %952 = vmatprep.mubr.f32.mxu0 0.0
        %v953 = vand.u32 %v878, 4294901760
        %v954 = vsub.f32 %v878, %v953
        %v955 = vand.u32 %v954, 4294901760
        %v956 = vsub.f32 %v954, %v955
        %v957 = vand.u32 %v956, 4294901760
        %958 = vmatmul.mubr.f32.gmra.mrb[0].mxu0 %v957
        %v959 = vpop.f32.mrb[0].mxu0
        %v960 = vadd.f32 %v869, %v959
        %v961 = vpop.f32.mrb[0].mxu0
        %962 = vmatprep.mubr.f32.mxu0 0.0
        %v963 = vand.u32 %v881, 4294901760
        %v964 = vsub.f32 %v881, %v963
        %v965 = vand.u32 %v964, 4294901760
        %v966 = vsub.f32 %v964, %v965
        %v967 = vand.u32 %v966, 4294901760
        %968 = vmatmul.mubr.f32.gmra.mrb[0].mxu0 %v967
        %v969 = vpop.f32.mrb[0].mxu0
        %v970 = vadd.f32 %v874, %v969
        %v971 = vpop.f32.mrb[0].mxu0
        %972 = vdwg.mxu0
        %973 = vmatprep.subr.mxu0 0.0
        %v974 = vand.u32 %v885, 4294901760
        %v975 = vsub.f32 %v885, %v974
        %v976 = vand.u32 %v975, 4294901760
        %v977 = vsub.f32 %v975, %v976
        %v978 = vand.u32 %v977, 4294901760
        %979 = vmatpush1.msra.mxu0 %v978
        %980 = vmatprep.subr.mxu0 0.0
        %981 = vmatpush1.msra.mxu0 0.0
        %982 = vmatprep.subr.mxu0 0.0
        %983 = vmatpush1.msra.mxu0 0.0
        %984 = vmatprep.subr.mxu0 0.0
        %985 = vmatpush1.msra.mxu0 0.0
        %986 = vmatprep.subr.mxu0 0.0
        %987 = vmatpush1.msra.mxu0 0.0
        %988 = vmatprep.subr.mxu0 0.0
        %989 = vmatpush1.msra.mxu0 0.0
        %990 = vmatprep.subr.mxu0 0.0
        %991 = vmatpush1.msra.mxu0 0.0
        %992 = vmatprep.subr.mxu0 0.0
        %993 = vmatpush1.msra.mxu0 0.0
        %994 = vmatprep.subr.mxu0 0.0
        %995 = vmatpush1.msra.mxu0 0.0
        %996 = vmatprep.subr.mxu0 0.0
        %997 = vmatpush1.msra.mxu0 0.0
        %998 = vmatprep.subr.mxu0 0.0
        %999 = vmatpush1.msra.mxu0 0.0
        %1000 = vmatprep.subr.mxu0 0.0
        %1001 = vmatpush1.msra.mxu0 0.0
        %1002 = vmatprep.subr.mxu0 0.0
        %1003 = vmatpush1.msra.mxu0 0.0
        %1004 = vmatprep.subr.mxu0 0.0
        %1005 = vmatpush1.msra.mxu0 0.0
        %1006 = vmatprep.subr.mxu0 0.0
        %1007 = vmatpush1.msra.mxu0 0.0
        %1008 = vmatprep.subr.mxu0 0.0
        %1009 = vmatpush1.msra.mxu0 0.0
        %1010 = vmatprep.subr.mxu0 0.0
        %1011 = vmatpush1.msra.mxu0 0.0
        %1012 = vmatprep.subr.mxu0 0.0
        %1013 = vmatpush1.msra.mxu0 0.0
        %1014 = vmatprep.subr.mxu0 0.0
        %1015 = vmatpush1.msra.mxu0 0.0
        %1016 = vmatprep.subr.mxu0 0.0
        %1017 = vmatpush1.msra.mxu0 0.0
        %1018 = vmatprep.subr.mxu0 0.0
        %1019 = vmatpush1.msra.mxu0 0.0
        %1020 = vmatprep.subr.mxu0 0.0
        %1021 = vmatpush1.msra.mxu0 0.0
        %1022 = vmatprep.subr.mxu0 0.0
        %1023 = vmatpush1.msra.mxu0 0.0
        %1024 = vmatprep.subr.mxu0 0.0
        %1025 = vmatpush1.msra.mxu0 0.0
        %1026 = vmatprep.subr.mxu0 0.0
        %1027 = vmatpush1.msra.mxu0 0.0
        %1028 = vmatprep.subr.mxu0 0.0
        %1029 = vmatpush1.msra.mxu0 0.0
        %1030 = vmatprep.subr.mxu0 0.0
        %1031 = vmatpush1.msra.mxu0 0.0
        %1032 = vmatprep.subr.mxu0 0.0
        %1033 = vmatpush1.msra.mxu0 0.0
        %1034 = vmatprep.subr.mxu0 0.0
        %1035 = vmatpush1.msra.mxu0 0.0
        %1036 = vmatprep.subr.mxu0 0.0
        %1037 = vmatpush1.msra.mxu0 0.0
        %1038 = vmatprep.subr.mxu0 0.0
        %1039 = vmatpush1.msra.mxu0 0.0
        %1040 = vmatprep.subr.mxu0 0.0
        %1041 = vmatpush1.msra.mxu0 0.0
        %1042 = vmatprep.mubr.f32.mxu0 0.0
        %v1043 = vand.u32 %v878, 4294901760
        %1044 = vmatmul.mubr.f32.gmra.mrb[0].mxu0 %v1043
        %v1045 = vpop.f32.mrb[0].mxu0
        %v1046 = vadd.f32 %v960, %v1045
        %v1047 = vpop.f32.mrb[0].mxu0
        %1048 = vmatprep.mubr.f32.mxu0 0.0
        %v1049 = vand.u32 %v881, 4294901760
        %1050 = vmatmul.mubr.f32.gmra.mrb[0].mxu0 %v1049
        %v1051 = vpop.f32.mrb[0].mxu0
        %v1052 = vadd.f32 %v970, %v1051
        %v1053 = vpop.f32.mrb[0].mxu0
        %1054 = vdwg.mxu0
        %1055 = vmatprep.subr.mxu0 0.0
        %v1056 = vand.u32 %v885, 4294901760
        %v1057 = vsub.f32 %v885, %v1056
        %1058 = vmatpush1.msra.mxu0 %v1057
        %1059 = vmatprep.subr.mxu0 0.0
        %1060 = vmatpush1.msra.mxu0 0.0
        %1061 = vmatprep.subr.mxu0 0.0
        %1062 = vmatpush1.msra.mxu0 0.0
        %1063 = vmatprep.subr.mxu0 0.0
        %1064 = vmatpush1.msra.mxu0 0.0
        %1065 = vmatprep.subr.mxu0 0.0
        %1066 = vmatpush1.msra.mxu0 0.0
        %1067 = vmatprep.subr.mxu0 0.0
        %1068 = vmatpush1.msra.mxu0 0.0
        %1069 = vmatprep.subr.mxu0 0.0
        %1070 = vmatpush1.msra.mxu0 0.0
        %1071 = vmatprep.subr.mxu0 0.0
        %1072 = vmatpush1.msra.mxu0 0.0
        %1073 = vmatprep.subr.mxu0 0.0
        %1074 = vmatpush1.msra.mxu0 0.0
        %1075 = vmatprep.subr.mxu0 0.0
        %1076 = vmatpush1.msra.mxu0 0.0
        %1077 = vmatprep.subr.mxu0 0.0
        %1078 = vmatpush1.msra.mxu0 0.0
        %1079 = vmatprep.subr.mxu0 0.0
        %1080 = vmatpush1.msra.mxu0 0.0
        %1081 = vmatprep.subr.mxu0 0.0
        %1082 = vmatpush1.msra.mxu0 0.0
        %1083 = vmatprep.subr.mxu0 0.0
        %1084 = vmatpush1.msra.mxu0 0.0
        %1085 = vmatprep.subr.mxu0 0.0
        %1086 = vmatpush1.msra.mxu0 0.0
        %1087 = vmatprep.subr.mxu0 0.0
        %1088 = vmatpush1.msra.mxu0 0.0
        %1089 = vmatprep.subr.mxu0 0.0
        %1090 = vmatpush1.msra.mxu0 0.0
        %1091 = vmatprep.subr.mxu0 0.0
        %1092 = vmatpush1.msra.mxu0 0.0
        %1093 = vmatprep.subr.mxu0 0.0
        %1094 = vmatpush1.msra.mxu0 0.0
        %1095 = vmatprep.subr.mxu0 0.0
        %1096 = vmatpush1.msra.mxu0 0.0
        %1097 = vmatprep.subr.mxu0 0.0
        %1098 = vmatpush1.msra.mxu0 0.0
        %1099 = vmatprep.subr.mxu0 0.0
        %1100 = vmatpush1.msra.mxu0 0.0
        %1101 = vmatprep.subr.mxu0 0.0
        %1102 = vmatpush1.msra.mxu0 0.0
        %1103 = vmatprep.subr.mxu0 0.0
        %1104 = vmatpush1.msra.mxu0 0.0
        %1105 = vmatprep.subr.mxu0 0.0
        %1106 = vmatpush1.msra.mxu0 0.0
        %1107 = vmatprep.subr.mxu0 0.0
        %1108 = vmatpush1.msra.mxu0 0.0
        %1109 = vmatprep.subr.mxu0 0.0
        %1110 = vmatpush1.msra.mxu0 0.0
        %1111 = vmatprep.subr.mxu0 0.0
        %1112 = vmatpush1.msra.mxu0 0.0
        %1113 = vmatprep.subr.mxu0 0.0
        %1114 = vmatpush1.msra.mxu0 0.0
        %1115 = vmatprep.subr.mxu0 0.0
        %1116 = vmatpush1.msra.mxu0 0.0
        %1117 = vmatprep.subr.mxu0 0.0
        %1118 = vmatpush1.msra.mxu0 0.0
        %1119 = vmatprep.subr.mxu0 0.0
        %1120 = vmatpush1.msra.mxu0 0.0
        %1121 = vmatprep.mubr.f32.mxu0 0.0
        %v1122 = vand.u32 %v878, 4294901760
        %v1123 = vsub.f32 %v878, %v1122
        %1124 = vmatmul.mubr.f32.gmra.mrb[0].mxu0 %v1123
        %v1125 = vpop.f32.mrb[0].mxu0
        %v1126 = vadd.f32 %v1046, %v1125
        %v1127 = vpop.f32.mrb[0].mxu0
        %1128 = vmatprep.mubr.f32.mxu0 0.0
        %v1129 = vand.u32 %v881, 4294901760
        %v1130 = vsub.f32 %v881, %v1129
        %1131 = vmatmul.mubr.f32.gmra.mrb[0].mxu0 %v1130
        %v1132 = vpop.f32.mrb[0].mxu0
        %v1133 = vadd.f32 %v1052, %v1132
        %v1134 = vpop.f32.mrb[0].mxu0
        %1135 = vdwg.mxu0
        %1136 = vmatprep.subr.mxu0 0.0
        %v1137 = vand.u32 %v885, 4294901760
        %1138 = vmatpush1.msra.mxu0 %v1137
        %1139 = vmatprep.subr.mxu0 0.0
        %1140 = vmatpush1.msra.mxu0 0.0
        %1141 = vmatprep.subr.mxu0 0.0
        %1142 = vmatpush1.msra.mxu0 0.0
        %1143 = vmatprep.subr.mxu0 0.0
        %1144 = vmatpush1.msra.mxu0 0.0
        %1145 = vmatprep.subr.mxu0 0.0
        %1146 = vmatpush1.msra.mxu0 0.0
        %1147 = vmatprep.subr.mxu0 0.0
        %1148 = vmatpush1.msra.mxu0 0.0
        %1149 = vmatprep.subr.mxu0 0.0
        %1150 = vmatpush1.msra.mxu0 0.0
        %1151 = vmatprep.subr.mxu0 0.0
        %1152 = vmatpush1.msra.mxu0 0.0
        %1153 = vmatprep.subr.mxu0 0.0
        %1154 = vmatpush1.msra.mxu0 0.0
        %1155 = vmatprep.subr.mxu0 0.0
        %1156 = vmatpush1.msra.mxu0 0.0
        %1157 = vmatprep.subr.mxu0 0.0
        %1158 = vmatpush1.msra.mxu0 0.0
        %1159 = vmatprep.subr.mxu0 0.0
        %1160 = vmatpush1.msra.mxu0 0.0
        %1161 = vmatprep.subr.mxu0 0.0
        %1162 = vmatpush1.msra.mxu0 0.0
        %1163 = vmatprep.subr.mxu0 0.0
        %1164 = vmatpush1.msra.mxu0 0.0
        %1165 = vmatprep.subr.mxu0 0.0
        %1166 = vmatpush1.msra.mxu0 0.0
        %1167 = vmatprep.subr.mxu0 0.0
        %1168 = vmatpush1.msra.mxu0 0.0
        %1169 = vmatprep.subr.mxu0 0.0
        %1170 = vmatpush1.msra.mxu0 0.0
        %1171 = vmatprep.subr.mxu0 0.0
        %1172 = vmatpush1.msra.mxu0 0.0
        %1173 = vmatprep.subr.mxu0 0.0
        %1174 = vmatpush1.msra.mxu0 0.0
        %1175 = vmatprep.subr.mxu0 0.0
        %1176 = vmatpush1.msra.mxu0 0.0
        %1177 = vmatprep.subr.mxu0 0.0
        %1178 = vmatpush1.msra.mxu0 0.0
        %1179 = vmatprep.subr.mxu0 0.0
        %1180 = vmatpush1.msra.mxu0 0.0
        %1181 = vmatprep.subr.mxu0 0.0
        %1182 = vmatpush1.msra.mxu0 0.0
        %1183 = vmatprep.subr.mxu0 0.0
        %1184 = vmatpush1.msra.mxu0 0.0
        %1185 = vmatprep.subr.mxu0 0.0
        %1186 = vmatpush1.msra.mxu0 0.0
        %1187 = vmatprep.subr.mxu0 0.0
        %1188 = vmatpush1.msra.mxu0 0.0
        %1189 = vmatprep.subr.mxu0 0.0
        %1190 = vmatpush1.msra.mxu0 0.0
        %1191 = vmatprep.subr.mxu0 0.0
        %1192 = vmatpush1.msra.mxu0 0.0
        %1193 = vmatprep.subr.mxu0 0.0
        %1194 = vmatpush1.msra.mxu0 0.0
        %1195 = vmatprep.subr.mxu0 0.0
        %1196 = vmatpush1.msra.mxu0 0.0
        %1197 = vmatprep.subr.mxu0 0.0
        %1198 = vmatpush1.msra.mxu0 0.0
        %1199 = vmatprep.subr.mxu0 0.0
        %1200 = vmatpush1.msra.mxu0 0.0
        %1201 = vmatprep.mubr.f32.mxu0 0.0
        %v1202 = vand.u32 %v878, 4294901760
        %v1203 = vsub.f32 %v878, %v1202
        %v1204 = vand.u32 %v1203, 4294901760
        %1205 = vmatmul.mubr.f32.gmra.mrb[0].mxu0 %v1204
        %v1206 = vpop.f32.mrb[0].mxu0
        %v1207 = vadd.f32 %v1126, %v1206
        %v1208 = vpop.f32.mrb[0].mxu0
        %1209 = vmatprep.mubr.f32.mxu0 0.0
        %v1210 = vand.u32 %v881, 4294901760
        %v1211 = vsub.f32 %v881, %v1210
        %v1212 = vand.u32 %v1211, 4294901760
        %1213 = vmatmul.mubr.f32.gmra.mrb[0].mxu0 %v1212
        %v1214 = vpop.f32.mrb[0].mxu0
        %v1215 = vadd.f32 %v1133, %v1214
        %v1216 = vpop.f32.mrb[0].mxu0
        %1217 = vdwg.mxu0
        %1218 = vmatprep.subr.mxu0 0.0
        %v1219 = vand.u32 %v885, 4294901760
        %v1220 = vsub.f32 %v885, %v1219
        %v1221 = vand.u32 %v1220, 4294901760
        %1222 = vmatpush1.msra.mxu0 %v1221
        %1223 = vmatprep.subr.mxu0 0.0
        %1224 = vmatpush1.msra.mxu0 0.0
        %1225 = vmatprep.subr.mxu0 0.0
        %1226 = vmatpush1.msra.mxu0 0.0
        %1227 = vmatprep.subr.mxu0 0.0
        %1228 = vmatpush1.msra.mxu0 0.0
        %1229 = vmatprep.subr.mxu0 0.0
        %1230 = vmatpush1.msra.mxu0 0.0
        %1231 = vmatprep.subr.mxu0 0.0
        %1232 = vmatpush1.msra.mxu0 0.0
        %1233 = vmatprep.subr.mxu0 0.0
        %1234 = vmatpush1.msra.mxu0 0.0
        %1235 = vmatprep.subr.mxu0 0.0
        %1236 = vmatpush1.msra.mxu0 0.0
        %1237 = vmatprep.subr.mxu0 0.0
        %1238 = vmatpush1.msra.mxu0 0.0
        %1239 = vmatprep.subr.mxu0 0.0
        %1240 = vmatpush1.msra.mxu0 0.0
        %1241 = vmatprep.subr.mxu0 0.0
        %1242 = vmatpush1.msra.mxu0 0.0
        %1243 = vmatprep.subr.mxu0 0.0
        %1244 = vmatpush1.msra.mxu0 0.0
        %1245 = vmatprep.subr.mxu0 0.0
        %1246 = vmatpush1.msra.mxu0 0.0
        %1247 = vmatprep.subr.mxu0 0.0
        %1248 = vmatpush1.msra.mxu0 0.0
        %1249 = vmatprep.subr.mxu0 0.0
        %1250 = vmatpush1.msra.mxu0 0.0
        %1251 = vmatprep.subr.mxu0 0.0
        %1252 = vmatpush1.msra.mxu0 0.0
        %1253 = vmatprep.subr.mxu0 0.0
        %1254 = vmatpush1.msra.mxu0 0.0
        %1255 = vmatprep.subr.mxu0 0.0
        %1256 = vmatpush1.msra.mxu0 0.0
        %1257 = vmatprep.subr.mxu0 0.0
        %1258 = vmatpush1.msra.mxu0 0.0
        %1259 = vmatprep.subr.mxu0 0.0
        %1260 = vmatpush1.msra.mxu0 0.0
        %1261 = vmatprep.subr.mxu0 0.0
        %1262 = vmatpush1.msra.mxu0 0.0
        %1263 = vmatprep.subr.mxu0 0.0
        %1264 = vmatpush1.msra.mxu0 0.0
        %1265 = vmatprep.subr.mxu0 0.0
        %1266 = vmatpush1.msra.mxu0 0.0
        %1267 = vmatprep.subr.mxu0 0.0
        %1268 = vmatpush1.msra.mxu0 0.0
        %1269 = vmatprep.subr.mxu0 0.0
        %1270 = vmatpush1.msra.mxu0 0.0
        %1271 = vmatprep.subr.mxu0 0.0
        %1272 = vmatpush1.msra.mxu0 0.0
        %1273 = vmatprep.subr.mxu0 0.0
        %1274 = vmatpush1.msra.mxu0 0.0
        %1275 = vmatprep.subr.mxu0 0.0
        %1276 = vmatpush1.msra.mxu0 0.0
        %1277 = vmatprep.subr.mxu0 0.0
        %1278 = vmatpush1.msra.mxu0 0.0
        %1279 = vmatprep.subr.mxu0 0.0
        %1280 = vmatpush1.msra.mxu0 0.0
        %1281 = vmatprep.subr.mxu0 0.0
        %1282 = vmatpush1.msra.mxu0 0.0
        %1283 = vmatprep.subr.mxu0 0.0
        %1284 = vmatpush1.msra.mxu0 0.0
        %1285 = vmatprep.mubr.f32.mxu0 0.0
        %v1286 = vand.u32 %v878, 4294901760
        %1287 = vmatmul.mubr.f32.gmra.mrb[0].mxu0 %v1286
        %v1288 = vpop.f32.mrb[0].mxu0
        %v1289 = vadd.f32 %v1207, %v1288
        %v1290 = vpop.f32.mrb[0].mxu0
        %1291 = vmatprep.mubr.f32.mxu0 0.0
        %v1292 = vand.u32 %v881, 4294901760
        %1293 = vmatmul.mubr.f32.gmra.mrb[0].mxu0 %v1292
        %v1294 = vpop.f32.mrb[0].mxu0
        %v1295 = vadd.f32 %v1215, %v1294
        %v1296 = vpop.f32.mrb[0].mxu0
        %1297 = vdwg.mxu0
        %1298 = vmatprep.subr.mxu0 0.0
        %v1299 = vand.u32 %v885, 4294901760
        %1300 = vmatpush1.msra.mxu0 %v1299
        %1301 = vmatprep.subr.mxu0 0.0
        %1302 = vmatpush1.msra.mxu0 0.0
        %1303 = vmatprep.subr.mxu0 0.0
        %1304 = vmatpush1.msra.mxu0 0.0
        %1305 = vmatprep.subr.mxu0 0.0
        %1306 = vmatpush1.msra.mxu0 0.0
        %1307 = vmatprep.subr.mxu0 0.0
        %1308 = vmatpush1.msra.mxu0 0.0
        %1309 = vmatprep.subr.mxu0 0.0
        %1310 = vmatpush1.msra.mxu0 0.0
        %1311 = vmatprep.subr.mxu0 0.0
        %1312 = vmatpush1.msra.mxu0 0.0
        %1313 = vmatprep.subr.mxu0 0.0
        %1314 = vmatpush1.msra.mxu0 0.0
        %1315 = vmatprep.subr.mxu0 0.0
        %1316 = vmatpush1.msra.mxu0 0.0
        %1317 = vmatprep.subr.mxu0 0.0
        %1318 = vmatpush1.msra.mxu0 0.0
        %1319 = vmatprep.subr.mxu0 0.0
        %1320 = vmatpush1.msra.mxu0 0.0
        %1321 = vmatprep.subr.mxu0 0.0
        %1322 = vmatpush1.msra.mxu0 0.0
        %1323 = vmatprep.subr.mxu0 0.0
        %1324 = vmatpush1.msra.mxu0 0.0
        %1325 = vmatprep.subr.mxu0 0.0
        %1326 = vmatpush1.msra.mxu0 0.0
        %1327 = vmatprep.subr.mxu0 0.0
        %1328 = vmatpush1.msra.mxu0 0.0
        %1329 = vmatprep.subr.mxu0 0.0
        %1330 = vmatpush1.msra.mxu0 0.0
        %1331 = vmatprep.subr.mxu0 0.0
        %1332 = vmatpush1.msra.mxu0 0.0
        %1333 = vmatprep.subr.mxu0 0.0
        %1334 = vmatpush1.msra.mxu0 0.0
        %1335 = vmatprep.subr.mxu0 0.0
        %1336 = vmatpush1.msra.mxu0 0.0
        %1337 = vmatprep.subr.mxu0 0.0
        %1338 = vmatpush1.msra.mxu0 0.0
        %1339 = vmatprep.subr.mxu0 0.0
        %1340 = vmatpush1.msra.mxu0 0.0
        %1341 = vmatprep.subr.mxu0 0.0
        %1342 = vmatpush1.msra.mxu0 0.0
        %1343 = vmatprep.subr.mxu0 0.0
        %1344 = vmatpush1.msra.mxu0 0.0
        %1345 = vmatprep.subr.mxu0 0.0
        %1346 = vmatpush1.msra.mxu0 0.0
        %1347 = vmatprep.subr.mxu0 0.0
        %1348 = vmatpush1.msra.mxu0 0.0
        %1349 = vmatprep.subr.mxu0 0.0
        %1350 = vmatpush1.msra.mxu0 0.0
        %1351 = vmatprep.subr.mxu0 0.0
        %1352 = vmatpush1.msra.mxu0 0.0
        %1353 = vmatprep.subr.mxu0 0.0
        %1354 = vmatpush1.msra.mxu0 0.0
        %1355 = vmatprep.subr.mxu0 0.0
        %1356 = vmatpush1.msra.mxu0 0.0
        %1357 = vmatprep.subr.mxu0 0.0
        %1358 = vmatpush1.msra.mxu0 0.0
        %1359 = vmatprep.subr.mxu0 0.0
        %1360 = vmatpush1.msra.mxu0 0.0
        %1361 = vmatprep.subr.mxu0 0.0
        %1362 = vmatpush1.msra.mxu0 0.0
        %1363 = vmatprep.mubr.f32.mxu0 0.0
        %v1364 = vand.u32 %v878, 4294901760
        %1365 = vmatmul.mubr.f32.gmra.mrb[0].mxu0 %v1364
        %v1366 = vpop.f32.mrb[0].mxu0
        %v1367 = vadd.f32 %v1289, %v1366
        %v1368 = vpop.f32.mrb[0].mxu0
        %1369 = vmatprep.mubr.f32.mxu0 0.0
        %v1370 = vand.u32 %v881, 4294901760
        %1371 = vmatmul.mubr.f32.gmra.mrb[0].mxu0 %v1370
        %v1372 = vpop.f32.mrb[0].mxu0
        %v1373 = vadd.f32 %v1295, %v1372
        %v1374 = vpop.f32.mrb[0].mxu0
        %1375 = vdwg.mxu0
        %v1376 = vld [vmem:[#allocation2] sm:$0xff]
        %1377 = vxpose.xlu0.b32.start [1/16] %v1376, 128
        %1378 = vxpose.xlu0.b32.cont [2/16] 0.0, 128
        %1379 = vxpose.xlu0.b32.cont [3/16] 0.0, 128
        %1380 = vxpose.xlu0.b32.cont [4/16] 0.0, 128
        %1381 = vxpose.xlu0.b32.cont [5/16] 0.0, 128
        %1382 = vxpose.xlu0.b32.cont [6/16] 0.0, 128
        %1383 = vxpose.xlu0.b32.cont [7/16] 0.0, 128
        %1384 = vxpose.xlu0.b32.cont [8/16] 0.0, 128
        %1385 = vxpose.xlu0.b32.cont [9/16] 0.0, 128
        %1386 = vxpose.xlu0.b32.cont [10/16] 0.0, 128
        %1387 = vxpose.xlu0.b32.cont [11/16] 0.0, 128
        %1388 = vxpose.xlu0.b32.cont [12/16] 0.0, 128
        %1389 = vxpose.xlu0.b32.cont [13/16] 0.0, 128
        %1390 = vxpose.xlu0.b32.cont [14/16] 0.0, 128
        %1391 = vxpose.xlu0.b32.cont [15/16] 0.0, 128
        %1392 = vxpose.xlu0.b32.end [16/16] 0.0, 128
        %v1393 = vpop.trf.xlu0
        %v1394 = vpop.trf.xlu0
        %v1395 = vpop.trf.xlu0
        %v1396 = vpop.trf.xlu0
        %v1397 = vpop.trf.xlu0
        %v1398 = vpop.trf.xlu0
        %v1399 = vpop.trf.xlu0
        %v1400 = vpop.trf.xlu0
        %v1401 = vpop.trf.xlu0
        %v1402 = vpop.trf.xlu0
        %v1403 = vpop.trf.xlu0
        %v1404 = vpop.trf.xlu0
        %v1405 = vpop.trf.xlu0
        %v1406 = vpop.trf.xlu0
        %v1407 = vpop.trf.xlu0
        %v1408 = vpop.trf.xlu0
        %vm1409 = vcmask 64512
        %v1411 = vsel %vm1409, %v1393, 0
        %v1414 = vsel %vm1409, %v1394, 0
        %v1417 = vsel %vm1409, %v1395, 0
        %v1420 = vsel %vm1409, %v1396, 0
        %v1423 = vsel %vm1409, %v1397, 0
        %v1426 = vsel %vm1409, %v1398, 0
        %v1429 = vsel %vm1409, %v1399, 0
        %v1432 = vsel %vm1409, %v1400, 0
        %v1435 = vsel %vm1409, %v1401, 0
        %v1438 = vsel %vm1409, %v1402, 0
        %v1441 = vsel %vm1409, %v1403, 0
        %v1444 = vsel %vm1409, %v1404, 0
        %v1447 = vsel %vm1409, %v1405, 0
        %v1450 = vsel %vm1409, %v1406, 0
        %v1453 = vsel %vm1409, %v1407, 0
        %v1456 = vsel %vm1409, %v1408, 0
        %1458 = vmatprep.subr.mxu0 0.0
        %v1459 = vand.u32 %v1367, 4294901760
        %1460 = vmatpush1.msra.mxu0 %v1459
        %1461 = vmatprep.subr.mxu0 0.0
        %1462 = vmatpush1.msra.mxu0 0.0
        %1463 = vmatprep.subr.mxu0 0.0
        %1464 = vmatpush1.msra.mxu0 0.0
        %1465 = vmatprep.subr.mxu0 0.0
        %1466 = vmatpush1.msra.mxu0 0.0
        %1467 = vmatprep.subr.mxu0 0.0
        %1468 = vmatpush1.msra.mxu0 0.0
        %1469 = vmatprep.subr.mxu0 0.0
        %1470 = vmatpush1.msra.mxu0 0.0
        %1471 = vmatprep.subr.mxu0 0.0
        %1472 = vmatpush1.msra.mxu0 0.0
        %1473 = vmatprep.subr.mxu0 0.0
        %1474 = vmatpush1.msra.mxu0 0.0
        %1475 = vmatprep.subr.mxu0 0.0
        %1476 = vmatpush1.msra.mxu0 0.0
        %1477 = vmatprep.subr.mxu0 0.0
        %1478 = vmatpush1.msra.mxu0 0.0
        %1479 = vmatprep.subr.mxu0 0.0
        %1480 = vmatpush1.msra.mxu0 0.0
        %1481 = vmatprep.subr.mxu0 0.0
        %1482 = vmatpush1.msra.mxu0 0.0
        %1483 = vmatprep.subr.mxu0 0.0
        %1484 = vmatpush1.msra.mxu0 0.0
        %1485 = vmatprep.subr.mxu0 0.0
        %1486 = vmatpush1.msra.mxu0 0.0
        %1487 = vmatprep.subr.mxu0 0.0
        %1488 = vmatpush1.msra.mxu0 0.0
        %1489 = vmatprep.subr.mxu0 0.0
        %1490 = vmatpush1.msra.mxu0 0.0
        %1491 = vmatprep.subr.mxu0 0.0
        %1492 = vmatpush1.msra.mxu0 0.0
        %1493 = vmatprep.subr.mxu0 0.0
        %1494 = vmatpush1.msra.mxu0 0.0
        %1495 = vmatprep.subr.mxu0 0.0
        %1496 = vmatpush1.msra.mxu0 0.0
        %1497 = vmatprep.subr.mxu0 0.0
        %1498 = vmatpush1.msra.mxu0 0.0
        %1499 = vmatprep.subr.mxu0 0.0
        %1500 = vmatpush1.msra.mxu0 0.0
        %1501 = vmatprep.subr.mxu0 0.0
        %1502 = vmatpush1.msra.mxu0 0.0
        %1503 = vmatprep.subr.mxu0 0.0
        %1504 = vmatpush1.msra.mxu0 0.0
        %1505 = vmatprep.subr.mxu0 0.0
        %1506 = vmatpush1.msra.mxu0 0.0
        %1507 = vmatprep.subr.mxu0 0.0
        %1508 = vmatpush1.msra.mxu0 0.0
        %1509 = vmatprep.subr.mxu0 0.0
        %1510 = vmatpush1.msra.mxu0 0.0
        %1511 = vmatprep.subr.mxu0 0.0
        %1512 = vmatpush1.msra.mxu0 0.0
        %1513 = vmatprep.subr.mxu0 0.0
        %1514 = vmatpush1.msra.mxu0 0.0
        %1515 = vmatprep.subr.mxu0 0.0
        %1516 = vmatpush1.msra.mxu0 0.0
        %1517 = vmatprep.subr.mxu0 0.0
        %1518 = vmatpush1.msra.mxu0 0.0
        %1519 = vmatprep.subr.mxu0 0.0
        %1520 = vmatpush1.msra.mxu0 0.0
        %1521 = vmatprep.subr.mxu0 0.0
        %1522 = vmatpush1.msra.mxu0 0.0
        %1523 = vmatprep.mubr.f32.mxu0 0.0
        %v1524 = vand.u32 %v1411, 4294901760
        %v1525 = vsub.f32 %v1411, %v1524
        %v1526 = vand.u32 %v1525, 4294901760
        %v1527 = vsub.f32 %v1525, %v1526
        %v1528 = vand.u32 %v1527, 4294901760
        %1529 = vmatmul.mubr.f32.gmra.mrb[0].mxu0 %v1528
        %v1530 = vpop.f32.mrb[0].mxu0
        %v1531 = vadd.f32 0.0, %v1530
        %v1532 = vpop.f32.mrb[0].mxu0
        %1533 = vmatprep.mubr.f32.mxu0 0.0
        %v1534 = vand.u32 %v1414, 4294901760
        %v1535 = vsub.f32 %v1414, %v1534
        %v1536 = vand.u32 %v1535, 4294901760
        %v1537 = vsub.f32 %v1535, %v1536
        %v1538 = vand.u32 %v1537, 4294901760
        %1539 = vmatmul.mubr.f32.gmra.mrb[0].mxu0 %v1538
        %v1540 = vpop.f32.mrb[0].mxu0
        %v1541 = vadd.f32 0.0, %v1540
        %v1542 = vpop.f32.mrb[0].mxu0
        %1543 = vmatprep.mubr.f32.mxu0 0.0
        %v1544 = vand.u32 %v1417, 4294901760
        %v1545 = vsub.f32 %v1417, %v1544
        %v1546 = vand.u32 %v1545, 4294901760
        %v1547 = vsub.f32 %v1545, %v1546
        %v1548 = vand.u32 %v1547, 4294901760
        %1549 = vmatmul.mubr.f32.gmra.mrb[0].mxu0 %v1548
        %v1550 = vpop.f32.mrb[0].mxu0
        %v1551 = vadd.f32 0.0, %v1550
        %v1552 = vpop.f32.mrb[0].mxu0
        %1553 = vmatprep.mubr.f32.mxu0 0.0
        %v1554 = vand.u32 %v1420, 4294901760
        %v1555 = vsub.f32 %v1420, %v1554
        %v1556 = vand.u32 %v1555, 4294901760
        %v1557 = vsub.f32 %v1555, %v1556
        %v1558 = vand.u32 %v1557, 4294901760
        %1559 = vmatmul.mubr.f32.gmra.mrb[0].mxu0 %v1558
        %v1560 = vpop.f32.mrb[0].mxu0
        %v1561 = vadd.f32 0.0, %v1560
        %v1562 = vpop.f32.mrb[0].mxu0
        %1563 = vmatprep.mubr.f32.mxu0 0.0
        %v1564 = vand.u32 %v1423, 4294901760
        %v1565 = vsub.f32 %v1423, %v1564
        %v1566 = vand.u32 %v1565, 4294901760
        %v1567 = vsub.f32 %v1565, %v1566
        %v1568 = vand.u32 %v1567, 4294901760
        %1569 = vmatmul.mubr.f32.gmra.mrb[0].mxu0 %v1568
        %v1570 = vpop.f32.mrb[0].mxu0
        %v1571 = vadd.f32 0.0, %v1570
        %v1572 = vpop.f32.mrb[0].mxu0
        %1573 = vmatprep.mubr.f32.mxu0 0.0
        %v1574 = vand.u32 %v1426, 4294901760
        %v1575 = vsub.f32 %v1426, %v1574
        %v1576 = vand.u32 %v1575, 4294901760
        %v1577 = vsub.f32 %v1575, %v1576
        %v1578 = vand.u32 %v1577, 4294901760
        %1579 = vmatmul.mubr.f32.gmra.mrb[0].mxu0 %v1578
        %v1580 = vpop.f32.mrb[0].mxu0
        %v1581 = vadd.f32 0.0, %v1580
        %v1582 = vpop.f32.mrb[0].mxu0
        %1583 = vmatprep.mubr.f32.mxu0 0.0
        %v1584 = vand.u32 %v1429, 4294901760
        %v1585 = vsub.f32 %v1429, %v1584
        %v1586 = vand.u32 %v1585, 4294901760
        %v1587 = vsub.f32 %v1585, %v1586
        %v1588 = vand.u32 %v1587, 4294901760
        %1589 = vmatmul.mubr.f32.gmra.mrb[0].mxu0 %v1588
        %v1590 = vpop.f32.mrb[0].mxu0
        %v1591 = vadd.f32 0.0, %v1590
        %v1592 = vpop.f32.mrb[0].mxu0
        %1593 = vmatprep.mubr.f32.mxu0 0.0
        %v1594 = vand.u32 %v1432, 4294901760
        %v1595 = vsub.f32 %v1432, %v1594
        %v1596 = vand.u32 %v1595, 4294901760
        %v1597 = vsub.f32 %v1595, %v1596
        %v1598 = vand.u32 %v1597, 4294901760
        %1599 = vmatmul.mubr.f32.gmra.mrb[0].mxu0 %v1598
        %v1600 = vpop.f32.mrb[0].mxu0
        %v1601 = vadd.f32 0.0, %v1600
        %v1602 = vpop.f32.mrb[0].mxu0
        %1603 = vmatprep.mubr.f32.mxu0 0.0
        %v1604 = vand.u32 %v1435, 4294901760
        %v1605 = vsub.f32 %v1435, %v1604
        %v1606 = vand.u32 %v1605, 4294901760
        %v1607 = vsub.f32 %v1605, %v1606
        %v1608 = vand.u32 %v1607, 4294901760
        %1609 = vmatmul.mubr.f32.gmra.mrb[0].mxu0 %v1608
        %v1610 = vpop.f32.mrb[0].mxu0
        %v1611 = vadd.f32 0.0, %v1610
        %v1612 = vpop.f32.mrb[0].mxu0
        %1613 = vmatprep.mubr.f32.mxu0 0.0
        %v1614 = vand.u32 %v1438, 4294901760
        %v1615 = vsub.f32 %v1438, %v1614
        %v1616 = vand.u32 %v1615, 4294901760
        %v1617 = vsub.f32 %v1615, %v1616
        %v1618 = vand.u32 %v1617, 4294901760
        %1619 = vmatmul.mubr.f32.gmra.mrb[0].mxu0 %v1618
        %v1620 = vpop.f32.mrb[0].mxu0
        %v1621 = vadd.f32 0.0, %v1620
        %v1622 = vpop.f32.mrb[0].mxu0
        %1623 = vmatprep.mubr.f32.mxu0 0.0
        %v1624 = vand.u32 %v1441, 4294901760
        %v1625 = vsub.f32 %v1441, %v1624
        %v1626 = vand.u32 %v1625, 4294901760
        %v1627 = vsub.f32 %v1625, %v1626
        %v1628 = vand.u32 %v1627, 4294901760
        %1629 = vmatmul.mubr.f32.gmra.mrb[0].mxu0 %v1628
        %v1630 = vpop.f32.mrb[0].mxu0
        %v1631 = vadd.f32 0.0, %v1630
        %v1632 = vpop.f32.mrb[0].mxu0
        %1633 = vmatprep.mubr.f32.mxu0 0.0
        %v1634 = vand.u32 %v1444, 4294901760
        %v1635 = vsub.f32 %v1444, %v1634
        %v1636 = vand.u32 %v1635, 4294901760
        %v1637 = vsub.f32 %v1635, %v1636
        %v1638 = vand.u32 %v1637, 4294901760
        %1639 = vmatmul.mubr.f32.gmra.mrb[0].mxu0 %v1638
        %v1640 = vpop.f32.mrb[0].mxu0
        %v1641 = vadd.f32 0.0, %v1640
        %v1642 = vpop.f32.mrb[0].mxu0
        %1643 = vmatprep.mubr.f32.mxu0 0.0
        %v1644 = vand.u32 %v1447, 4294901760
        %v1645 = vsub.f32 %v1447, %v1644
        %v1646 = vand.u32 %v1645, 4294901760
        %v1647 = vsub.f32 %v1645, %v1646
        %v1648 = vand.u32 %v1647, 4294901760
        %1649 = vmatmul.mubr.f32.gmra.mrb[0].mxu0 %v1648
        %v1650 = vpop.f32.mrb[0].mxu0
        %v1651 = vadd.f32 0.0, %v1650
        %v1652 = vpop.f32.mrb[0].mxu0
        %1653 = vmatprep.mubr.f32.mxu0 0.0
        %v1654 = vand.u32 %v1450, 4294901760
        %v1655 = vsub.f32 %v1450, %v1654
        %v1656 = vand.u32 %v1655, 4294901760
        %v1657 = vsub.f32 %v1655, %v1656
        %v1658 = vand.u32 %v1657, 4294901760
        %1659 = vmatmul.mubr.f32.gmra.mrb[0].mxu0 %v1658
        %v1660 = vpop.f32.mrb[0].mxu0
        %v1661 = vadd.f32 0.0, %v1660
        %v1662 = vpop.f32.mrb[0].mxu0
        %1663 = vmatprep.mubr.f32.mxu0 0.0
        %v1664 = vand.u32 %v1453, 4294901760
        %v1665 = vsub.f32 %v1453, %v1664
        %v1666 = vand.u32 %v1665, 4294901760
        %v1667 = vsub.f32 %v1665, %v1666
        %v1668 = vand.u32 %v1667, 4294901760
        %1669 = vmatmul.mubr.f32.gmra.mrb[0].mxu0 %v1668
        %v1670 = vpop.f32.mrb[0].mxu0
        %v1671 = vadd.f32 0.0, %v1670
        %v1672 = vpop.f32.mrb[0].mxu0
        %1673 = vmatprep.mubr.f32.mxu0 0.0
        %v1674 = vand.u32 %v1456, 4294901760
        %v1675 = vsub.f32 %v1456, %v1674
        %v1676 = vand.u32 %v1675, 4294901760
        %v1677 = vsub.f32 %v1675, %v1676
        %v1678 = vand.u32 %v1677, 4294901760
        %1679 = vmatmul.mubr.f32.gmra.mrb[0].mxu0 %v1678
        %v1680 = vpop.f32.mrb[0].mxu0
        %v1681 = vadd.f32 0.0, %v1680
        %v1682 = vpop.f32.mrb[0].mxu0
        %1683 = vdwg.mxu0
        %1684 = vmatprep.subr.mxu0 0.0
        %v1685 = vand.u32 %v1367, 4294901760
        %v1686 = vsub.f32 %v1367, %v1685
        %v1687 = vand.u32 %v1686, 4294901760
        %v1688 = vsub.f32 %v1686, %v1687
        %v1689 = vand.u32 %v1688, 4294901760
        %1690 = vmatpush1.msra.mxu0 %v1689
        %1691 = vmatprep.subr.mxu0 0.0
        %1692 = vmatpush1.msra.mxu0 0.0
        %1693 = vmatprep.subr.mxu0 0.0
        %1694 = vmatpush1.msra.mxu0 0.0
        %1695 = vmatprep.subr.mxu0 0.0
        %1696 = vmatpush1.msra.mxu0 0.0
        %1697 = vmatprep.subr.mxu0 0.0
        %1698 = vmatpush1.msra.mxu0 0.0
        %1699 = vmatprep.subr.mxu0 0.0
        %1700 = vmatpush1.msra.mxu0 0.0
        %1701 = vmatprep.subr.mxu0 0.0
        %1702 = vmatpush1.msra.mxu0 0.0
        %1703 = vmatprep.subr.mxu0 0.0
        %1704 = vmatpush1.msra.mxu0 0.0
        %1705 = vmatprep.subr.mxu0 0.0
        %1706 = vmatpush1.msra.mxu0 0.0
        %1707 = vmatprep.subr.mxu0 0.0
        %1708 = vmatpush1.msra.mxu0 0.0
        %1709 = vmatprep.subr.mxu0 0.0
        %1710 = vmatpush1.msra.mxu0 0.0
        %1711 = vmatprep.subr.mxu0 0.0
        %1712 = vmatpush1.msra.mxu0 0.0
        %1713 = vmatprep.subr.mxu0 0.0
        %1714 = vmatpush1.msra.mxu0 0.0
        %1715 = vmatprep.subr.mxu0 0.0
        %1716 = vmatpush1.msra.mxu0 0.0
        %1717 = vmatprep.subr.mxu0 0.0
        %1718 = vmatpush1.msra.mxu0 0.0
        %1719 = vmatprep.subr.mxu0 0.0
        %1720 = vmatpush1.msra.mxu0 0.0
        %1721 = vmatprep.subr.mxu0 0.0
        %1722 = vmatpush1.msra.mxu0 0.0
        %1723 = vmatprep.subr.mxu0 0.0
        %1724 = vmatpush1.msra.mxu0 0.0
        %1725 = vmatprep.subr.mxu0 0.0
        %1726 = vmatpush1.msra.mxu0 0.0
        %1727 = vmatprep.subr.mxu0 0.0
        %1728 = vmatpush1.msra.mxu0 0.0
        %1729 = vmatprep.subr.mxu0 0.0
        %1730 = vmatpush1.msra.mxu0 0.0
        %1731 = vmatprep.subr.mxu0 0.0
        %1732 = vmatpush1.msra.mxu0 0.0
        %1733 = vmatprep.subr.mxu0 0.0
        %1734 = vmatpush1.msra.mxu0 0.0
        %1735 = vmatprep.subr.mxu0 0.0
        %1736 = vmatpush1.msra.mxu0 0.0
        %1737 = vmatprep.subr.mxu0 0.0
        %1738 = vmatpush1.msra.mxu0 0.0
        %1739 = vmatprep.subr.mxu0 0.0
        %1740 = vmatpush1.msra.mxu0 0.0
        %1741 = vmatprep.subr.mxu0 0.0
        %1742 = vmatpush1.msra.mxu0 0.0
        %1743 = vmatprep.subr.mxu0 0.0
        %1744 = vmatpush1.msra.mxu0 0.0
        %1745 = vmatprep.subr.mxu0 0.0
        %1746 = vmatpush1.msra.mxu0 0.0
        %1747 = vmatprep.subr.mxu0 0.0
        %1748 = vmatpush1.msra.mxu0 0.0
        %1749 = vmatprep.subr.mxu0 0.0
        %1750 = vmatpush1.msra.mxu0 0.0
        %1751 = vmatprep.subr.mxu0 0.0
        %1752 = vmatpush1.msra.mxu0 0.0
        %1753 = vmatprep.mubr.f32.mxu0 0.0
        %v1754 = vand.u32 %v1411, 4294901760
        %1755 = vmatmul.mubr.f32.gmra.mrb[0].mxu0 %v1754
        %v1756 = vpop.f32.mrb[0].mxu0
        %v1757 = vadd.f32 %v1531, %v1756
        %v1758 = vpop.f32.mrb[0].mxu0
        %1759 = vmatprep.mubr.f32.mxu0 0.0
        %v1760 = vand.u32 %v1414, 4294901760
        %1761 = vmatmul.mubr.f32.gmra.mrb[0].mxu0 %v1760
        %v1762 = vpop.f32.mrb[0].mxu0
        %v1763 = vadd.f32 %v1541, %v1762
        %v1764 = vpop.f32.mrb[0].mxu0
        %1765 = vmatprep.mubr.f32.mxu0 0.0
        %v1766 = vand.u32 %v1417, 4294901760
        %1767 = vmatmul.mubr.f32.gmra.mrb[0].mxu0 %v1766
        %v1768 = vpop.f32.mrb[0].mxu0
        %v1769 = vadd.f32 %v1551, %v1768
        %v1770 = vpop.f32.mrb[0].mxu0
        %1771 = vmatprep.mubr.f32.mxu0 0.0
        %v1772 = vand.u32 %v1420, 4294901760
        %1773 = vmatmul.mubr.f32.gmra.mrb[0].mxu0 %v1772
        %v1774 = vpop.f32.mrb[0].mxu0
        %v1775 = vadd.f32 %v1561, %v1774
        %v1776 = vpop.f32.mrb[0].mxu0
        %1777 = vmatprep.mubr.f32.mxu0 0.0
        %v1778 = vand.u32 %v1423, 4294901760
        %1779 = vmatmul.mubr.f32.gmra.mrb[0].mxu0 %v1778
        %v1780 = vpop.f32.mrb[0].mxu0
        %v1781 = vadd.f32 %v1571, %v1780
        %v1782 = vpop.f32.mrb[0].mxu0
        %1783 = vmatprep.mubr.f32.mxu0 0.0
        %v1784 = vand.u32 %v1426, 4294901760
        %1785 = vmatmul.mubr.f32.gmra.mrb[0].mxu0 %v1784
        %v1786 = vpop.f32.mrb[0].mxu0
        %v1787 = vadd.f32 %v1581, %v1786
        %v1788 = vpop.f32.mrb[0].mxu0
        %1789 = vmatprep.mubr.f32.mxu0 0.0
        %v1790 = vand.u32 %v1429, 4294901760
        %1791 = vmatmul.mubr.f32.gmra.mrb[0].mxu0 %v1790
        %v1792 = vpop.f32.mrb[0].mxu0
        %v1793 = vadd.f32 %v1591, %v1792
        %v1794 = vpop.f32.mrb[0].mxu0
        %1795 = vmatprep.mubr.f32.mxu0 0.0
        %v1796 = vand.u32 %v1432, 4294901760
        %1797 = vmatmul.mubr.f32.gmra.mrb[0].mxu0 %v1796
        %v1798 = vpop.f32.mrb[0].mxu0
        %v1799 = vadd.f32 %v1601, %v1798
        %v1800 = vpop.f32.mrb[0].mxu0
        %1801 = vmatprep.mubr.f32.mxu0 0.0
        %v1802 = vand.u32 %v1435, 4294901760
        %1803 = vmatmul.mubr.f32.gmra.mrb[0].mxu0 %v1802
        %v1804 = vpop.f32.mrb[0].mxu0
        %v1805 = vadd.f32 %v1611, %v1804
        %v1806 = vpop.f32.mrb[0].mxu0
        %1807 = vmatprep.mubr.f32.mxu0 0.0
        %v1808 = vand.u32 %v1438, 4294901760
        %1809 = vmatmul.mubr.f32.gmra.mrb[0].mxu0 %v1808
        %v1810 = vpop.f32.mrb[0].mxu0
        %v1811 = vadd.f32 %v1621, %v1810
        %v1812 = vpop.f32.mrb[0].mxu0
        %1813 = vmatprep.mubr.f32.mxu0 0.0
        %v1814 = vand.u32 %v1441, 4294901760
        %1815 = vmatmul.mubr.f32.gmra.mrb[0].mxu0 %v1814
        %v1816 = vpop.f32.mrb[0].mxu0
        %v1817 = vadd.f32 %v1631, %v1816
        %v1818 = vpop.f32.mrb[0].mxu0
        %1819 = vmatprep.mubr.f32.mxu0 0.0
        %v1820 = vand.u32 %v1444, 4294901760
        %1821 = vmatmul.mubr.f32.gmra.mrb[0].mxu0 %v1820
        %v1822 = vpop.f32.mrb[0].mxu0
        %v1823 = vadd.f32 %v1641, %v1822
        %v1824 = vpop.f32.mrb[0].mxu0
        %1825 = vmatprep.mubr.f32.mxu0 0.0
        %v1826 = vand.u32 %v1447, 4294901760
        %1827 = vmatmul.mubr.f32.gmra.mrb[0].mxu0 %v1826
        %v1828 = vpop.f32.mrb[0].mxu0
        %v1829 = vadd.f32 %v1651, %v1828
        %v1830 = vpop.f32.mrb[0].mxu0
        %1831 = vmatprep.mubr.f32.mxu0 0.0
        %v1832 = vand.u32 %v1450, 4294901760
        %1833 = vmatmul.mubr.f32.gmra.mrb[0].mxu0 %v1832
        %v1834 = vpop.f32.mrb[0].mxu0
        %v1835 = vadd.f32 %v1661, %v1834
        %v1836 = vpop.f32.mrb[0].mxu0
        %1837 = vmatprep.mubr.f32.mxu0 0.0
        %v1838 = vand.u32 %v1453, 4294901760
        %1839 = vmatmul.mubr.f32.gmra.mrb[0].mxu0 %v1838
        %v1840 = vpop.f32.mrb[0].mxu0
        %v1841 = vadd.f32 %v1671, %v1840
        %v1842 = vpop.f32.mrb[0].mxu0
        %1843 = vmatprep.mubr.f32.mxu0 0.0
        %v1844 = vand.u32 %v1456, 4294901760
        %1845 = vmatmul.mubr.f32.gmra.mrb[0].mxu0 %v1844
        %v1846 = vpop.f32.mrb[0].mxu0
        %v1847 = vadd.f32 %v1681, %v1846
        %v1848 = vpop.f32.mrb[0].mxu0
        %1849 = vdwg.mxu0
        %1850 = vmatprep.subr.mxu0 0.0
        %v1851 = vand.u32 %v1367, 4294901760
        %v1852 = vsub.f32 %v1367, %v1851
        %1853 = vmatpush1.msra.mxu0 %v1852
        %1854 = vmatprep.subr.mxu0 0.0
        %1855 = vmatpush1.msra.mxu0 0.0
        %1856 = vmatprep.subr.mxu0 0.0
        %1857 = vmatpush1.msra.mxu0 0.0
        %1858 = vmatprep.subr.mxu0 0.0
        %1859 = vmatpush1.msra.mxu0 0.0
        %1860 = vmatprep.subr.mxu0 0.0
        %1861 = vmatpush1.msra.mxu0 0.0
        %1862 = vmatprep.subr.mxu0 0.0
        %1863 = vmatpush1.msra.mxu0 0.0
        %1864 = vmatprep.subr.mxu0 0.0
        %1865 = vmatpush1.msra.mxu0 0.0
        %1866 = vmatprep.subr.mxu0 0.0
        %1867 = vmatpush1.msra.mxu0 0.0
        %1868 = vmatprep.subr.mxu0 0.0
        %1869 = vmatpush1.msra.mxu0 0.0
        %1870 = vmatprep.subr.mxu0 0.0
        %1871 = vmatpush1.msra.mxu0 0.0
        %1872 = vmatprep.subr.mxu0 0.0
        %1873 = vmatpush1.msra.mxu0 0.0
        %1874 = vmatprep.subr.mxu0 0.0
        %1875 = vmatpush1.msra.mxu0 0.0
        %1876 = vmatprep.subr.mxu0 0.0
        %1877 = vmatpush1.msra.mxu0 0.0
        %1878 = vmatprep.subr.mxu0 0.0
        %1879 = vmatpush1.msra.mxu0 0.0
        %1880 = vmatprep.subr.mxu0 0.0
        %1881 = vmatpush1.msra.mxu0 0.0
        %1882 = vmatprep.subr.mxu0 0.0
        %1883 = vmatpush1.msra.mxu0 0.0
        %1884 = vmatprep.subr.mxu0 0.0
        %1885 = vmatpush1.msra.mxu0 0.0
        %1886 = vmatprep.subr.mxu0 0.0
        %1887 = vmatpush1.msra.mxu0 0.0
        %1888 = vmatprep.subr.mxu0 0.0
        %1889 = vmatpush1.msra.mxu0 0.0
        %1890 = vmatprep.subr.mxu0 0.0
        %1891 = vmatpush1.msra.mxu0 0.0
        %1892 = vmatprep.subr.mxu0 0.0
        %1893 = vmatpush1.msra.mxu0 0.0
        %1894 = vmatprep.subr.mxu0 0.0
        %1895 = vmatpush1.msra.mxu0 0.0
        %1896 = vmatprep.subr.mxu0 0.0
        %1897 = vmatpush1.msra.mxu0 0.0
        %1898 = vmatprep.subr.mxu0 0.0
        %1899 = vmatpush1.msra.mxu0 0.0
        %1900 = vmatprep.subr.mxu0 0.0
        %1901 = vmatpush1.msra.mxu0 0.0
        %1902 = vmatprep.subr.mxu0 0.0
        %1903 = vmatpush1.msra.mxu0 0.0
        %1904 = vmatprep.subr.mxu0 0.0
        %1905 = vmatpush1.msra.mxu0 0.0
        %1906 = vmatprep.subr.mxu0 0.0
        %1907 = vmatpush1.msra.mxu0 0.0
        %1908 = vmatprep.subr.mxu0 0.0
        %1909 = vmatpush1.msra.mxu0 0.0
        %1910 = vmatprep.subr.mxu0 0.0
        %1911 = vmatpush1.msra.mxu0 0.0
        %1912 = vmatprep.subr.mxu0 0.0
        %1913 = vmatpush1.msra.mxu0 0.0
        %1914 = vmatprep.subr.mxu0 0.0
        %1915 = vmatpush1.msra.mxu0 0.0
        %1916 = vmatprep.mubr.f32.mxu0 0.0
        %v1917 = vand.u32 %v1411, 4294901760
        %v1918 = vsub.f32 %v1411, %v1917
        %1919 = vmatmul.mubr.f32.gmra.mrb[0].mxu0 %v1918
        %v1920 = vpop.f32.mrb[0].mxu0
        %v1921 = vadd.f32 %v1757, %v1920
        %v1922 = vpop.f32.mrb[0].mxu0
        %1923 = vmatprep.mubr.f32.mxu0 0.0
        %v1924 = vand.u32 %v1414, 4294901760
        %v1925 = vsub.f32 %v1414, %v1924
        %1926 = vmatmul.mubr.f32.gmra.mrb[0].mxu0 %v1925
        %v1927 = vpop.f32.mrb[0].mxu0
        %v1928 = vadd.f32 %v1763, %v1927
        %v1929 = vpop.f32.mrb[0].mxu0
        %1930 = vmatprep.mubr.f32.mxu0 0.0
        %v1931 = vand.u32 %v1417, 4294901760
        %v1932 = vsub.f32 %v1417, %v1931
        %1933 = vmatmul.mubr.f32.gmra.mrb[0].mxu0 %v1932
        %v1934 = vpop.f32.mrb[0].mxu0
        %v1935 = vadd.f32 %v1769, %v1934
        %v1936 = vpop.f32.mrb[0].mxu0
        %1937 = vmatprep.mubr.f32.mxu0 0.0
        %v1938 = vand.u32 %v1420, 4294901760
        %v1939 = vsub.f32 %v1420, %v1938
        %1940 = vmatmul.mubr.f32.gmra.mrb[0].mxu0 %v1939
        %v1941 = vpop.f32.mrb[0].mxu0
        %v1942 = vadd.f32 %v1775, %v1941
        %v1943 = vpop.f32.mrb[0].mxu0
        %1944 = vmatprep.mubr.f32.mxu0 0.0
        %v1945 = vand.u32 %v1423, 4294901760
        %v1946 = vsub.f32 %v1423, %v1945
        %1947 = vmatmul.mubr.f32.gmra.mrb[0].mxu0 %v1946
        %v1948 = vpop.f32.mrb[0].mxu0
        %v1949 = vadd.f32 %v1781, %v1948
        %v1950 = vpop.f32.mrb[0].mxu0
        %1951 = vmatprep.mubr.f32.mxu0 0.0
        %v1952 = vand.u32 %v1426, 4294901760
        %v1953 = vsub.f32 %v1426, %v1952
        %1954 = vmatmul.mubr.f32.gmra.mrb[0].mxu0 %v1953
        %v1955 = vpop.f32.mrb[0].mxu0
        %v1956 = vadd.f32 %v1787, %v1955
        %v1957 = vpop.f32.mrb[0].mxu0
        %1958 = vmatprep.mubr.f32.mxu0 0.0
        %v1959 = vand.u32 %v1429, 4294901760
        %v1960 = vsub.f32 %v1429, %v1959
        %1961 = vmatmul.mubr.f32.gmra.mrb[0].mxu0 %v1960
        %v1962 = vpop.f32.mrb[0].mxu0
        %v1963 = vadd.f32 %v1793, %v1962
        %v1964 = vpop.f32.mrb[0].mxu0
        %1965 = vmatprep.mubr.f32.mxu0 0.0
        %v1966 = vand.u32 %v1432, 4294901760
        %v1967 = vsub.f32 %v1432, %v1966
        %1968 = vmatmul.mubr.f32.gmra.mrb[0].mxu0 %v1967
        %v1969 = vpop.f32.mrb[0].mxu0
        %v1970 = vadd.f32 %v1799, %v1969
        %v1971 = vpop.f32.mrb[0].mxu0
        %1972 = vmatprep.mubr.f32.mxu0 0.0
        %v1973 = vand.u32 %v1435, 4294901760
        %v1974 = vsub.f32 %v1435, %v1973
        %1975 = vmatmul.mubr.f32.gmra.mrb[0].mxu0 %v1974
        %v1976 = vpop.f32.mrb[0].mxu0
        %v1977 = vadd.f32 %v1805, %v1976
        %v1978 = vpop.f32.mrb[0].mxu0
        %1979 = vmatprep.mubr.f32.mxu0 0.0
        %v1980 = vand.u32 %v1438, 4294901760
        %v1981 = vsub.f32 %v1438, %v1980
        %1982 = vmatmul.mubr.f32.gmra.mrb[0].mxu0 %v1981
        %v1983 = vpop.f32.mrb[0].mxu0
        %v1984 = vadd.f32 %v1811, %v1983
        %v1985 = vpop.f32.mrb[0].mxu0
        %1986 = vmatprep.mubr.f32.mxu0 0.0
        %v1987 = vand.u32 %v1441, 4294901760
        %v1988 = vsub.f32 %v1441, %v1987
        %1989 = vmatmul.mubr.f32.gmra.mrb[0].mxu0 %v1988
        %v1990 = vpop.f32.mrb[0].mxu0
        %v1991 = vadd.f32 %v1817, %v1990
        %v1992 = vpop.f32.mrb[0].mxu0
        %1993 = vmatprep.mubr.f32.mxu0 0.0
        %v1994 = vand.u32 %v1444, 4294901760
        %v1995 = vsub.f32 %v1444, %v1994
        %1996 = vmatmul.mubr.f32.gmra.mrb[0].mxu0 %v1995
        %v1997 = vpop.f32.mrb[0].mxu0
        %v1998 = vadd.f32 %v1823, %v1997
        %v1999 = vpop.f32.mrb[0].mxu0
        %2000 = vmatprep.mubr.f32.mxu0 0.0
        %v2001 = vand.u32 %v1447, 4294901760
        %v2002 = vsub.f32 %v1447, %v2001
        %2003 = vmatmul.mubr.f32.gmra.mrb[0].mxu0 %v2002
        %v2004 = vpop.f32.mrb[0].mxu0
        %v2005 = vadd.f32 %v1829, %v2004
        %v2006 = vpop.f32.mrb[0].mxu0
        %2007 = vmatprep.mubr.f32.mxu0 0.0
        %v2008 = vand.u32 %v1450, 4294901760
        %v2009 = vsub.f32 %v1450, %v2008
        %2010 = vmatmul.mubr.f32.gmra.mrb[0].mxu0 %v2009
        %v2011 = vpop.f32.mrb[0].mxu0
        %v2012 = vadd.f32 %v1835, %v2011
        %v2013 = vpop.f32.mrb[0].mxu0
        %2014 = vmatprep.mubr.f32.mxu0 0.0
        %v2015 = vand.u32 %v1453, 4294901760
        %v2016 = vsub.f32 %v1453, %v2015
        %2017 = vmatmul.mubr.f32.gmra.mrb[0].mxu0 %v2016
        %v2018 = vpop.f32.mrb[0].mxu0
        %v2019 = vadd.f32 %v1841, %v2018
        %v2020 = vpop.f32.mrb[0].mxu0
        %2021 = vmatprep.mubr.f32.mxu0 0.0
        %v2022 = vand.u32 %v1456, 4294901760
        %v2023 = vsub.f32 %v1456, %v2022
        %2024 = vmatmul.mubr.f32.gmra.mrb[0].mxu0 %v2023
        %v2025 = vpop.f32.mrb[0].mxu0
        %v2026 = vadd.f32 %v1847, %v2025
        %v2027 = vpop.f32.mrb[0].mxu0
        %2028 = vdwg.mxu0
        %2029 = vmatprep.subr.mxu0 0.0
        %v2030 = vand.u32 %v1367, 4294901760
        %2031 = vmatpush1.msra.mxu0 %v2030
        %2032 = vmatprep.subr.mxu0 0.0
        %2033 = vmatpush1.msra.mxu0 0.0
        %2034 = vmatprep.subr.mxu0 0.0
        %2035 = vmatpush1.msra.mxu0 0.0
        %2036 = vmatprep.subr.mxu0 0.0
        %2037 = vmatpush1.msra.mxu0 0.0
        %2038 = vmatprep.subr.mxu0 0.0
        %2039 = vmatpush1.msra.mxu0 0.0
        %2040 = vmatprep.subr.mxu0 0.0
        %2041 = vmatpush1.msra.mxu0 0.0
        %2042 = vmatprep.subr.mxu0 0.0
        %2043 = vmatpush1.msra.mxu0 0.0
        %2044 = vmatprep.subr.mxu0 0.0
        %2045 = vmatpush1.msra.mxu0 0.0
        %2046 = vmatprep.subr.mxu0 0.0
        %2047 = vmatpush1.msra.mxu0 0.0
        %2048 = vmatprep.subr.mxu0 0.0
        %2049 = vmatpush1.msra.mxu0 0.0
        %2050 = vmatprep.subr.mxu0 0.0
        %2051 = vmatpush1.msra.mxu0 0.0
        %2052 = vmatprep.subr.mxu0 0.0
        %2053 = vmatpush1.msra.mxu0 0.0
        %2054 = vmatprep.subr.mxu0 0.0
        %2055 = vmatpush1.msra.mxu0 0.0
        %2056 = vmatprep.subr.mxu0 0.0
        %2057 = vmatpush1.msra.mxu0 0.0
        %2058 = vmatprep.subr.mxu0 0.0
        %2059 = vmatpush1.msra.mxu0 0.0
        %2060 = vmatprep.subr.mxu0 0.0
        %2061 = vmatpush1.msra.mxu0 0.0
        %2062 = vmatprep.subr.mxu0 0.0
        %2063 = vmatpush1.msra.mxu0 0.0
        %2064 = vmatprep.subr.mxu0 0.0
        %2065 = vmatpush1.msra.mxu0 0.0
        %2066 = vmatprep.subr.mxu0 0.0
        %2067 = vmatpush1.msra.mxu0 0.0
        %2068 = vmatprep.subr.mxu0 0.0
        %2069 = vmatpush1.msra.mxu0 0.0
        %2070 = vmatprep.subr.mxu0 0.0
        %2071 = vmatpush1.msra.mxu0 0.0
        %2072 = vmatprep.subr.mxu0 0.0
        %2073 = vmatpush1.msra.mxu0 0.0
        %2074 = vmatprep.subr.mxu0 0.0
        %2075 = vmatpush1.msra.mxu0 0.0
        %2076 = vmatprep.subr.mxu0 0.0
        %2077 = vmatpush1.msra.mxu0 0.0
        %2078 = vmatprep.subr.mxu0 0.0
        %2079 = vmatpush1.msra.mxu0 0.0
        %2080 = vmatprep.subr.mxu0 0.0
        %2081 = vmatpush1.msra.mxu0 0.0
        %2082 = vmatprep.subr.mxu0 0.0
        %2083 = vmatpush1.msra.mxu0 0.0
        %2084 = vmatprep.subr.mxu0 0.0
        %2085 = vmatpush1.msra.mxu0 0.0
        %2086 = vmatprep.subr.mxu0 0.0
        %2087 = vmatpush1.msra.mxu0 0.0
        %2088 = vmatprep.subr.mxu0 0.0
        %2089 = vmatpush1.msra.mxu0 0.0
        %2090 = vmatprep.subr.mxu0 0.0
        %2091 = vmatpush1.msra.mxu0 0.0
        %2092 = vmatprep.subr.mxu0 0.0
        %2093 = vmatpush1.msra.mxu0 0.0
        %2094 = vmatprep.mubr.f32.mxu0 0.0
        %v2095 = vand.u32 %v1411, 4294901760
        %v2096 = vsub.f32 %v1411, %v2095
        %v2097 = vand.u32 %v2096, 4294901760
        %2098 = vmatmul.mubr.f32.gmra.mrb[0].mxu0 %v2097
        %v2099 = vpop.f32.mrb[0].mxu0
        %v2100 = vadd.f32 %v1921, %v2099
        %v2101 = vpop.f32.mrb[0].mxu0
        %2102 = vmatprep.mubr.f32.mxu0 0.0
        %v2103 = vand.u32 %v1414, 4294901760
        %v2104 = vsub.f32 %v1414, %v2103
        %v2105 = vand.u32 %v2104, 4294901760
        %2106 = vmatmul.mubr.f32.gmra.mrb[0].mxu0 %v2105
        %v2107 = vpop.f32.mrb[0].mxu0
        %v2108 = vadd.f32 %v1928, %v2107
        %v2109 = vpop.f32.mrb[0].mxu0
        %2110 = vmatprep.mubr.f32.mxu0 0.0
        %v2111 = vand.u32 %v1417, 4294901760
        %v2112 = vsub.f32 %v1417, %v2111
        %v2113 = vand.u32 %v2112, 4294901760
        %2114 = vmatmul.mubr.f32.gmra.mrb[0].mxu0 %v2113
        %v2115 = vpop.f32.mrb[0].mxu0
        %v2116 = vadd.f32 %v1935, %v2115
        %v2117 = vpop.f32.mrb[0].mxu0
        %2118 = vmatprep.mubr.f32.mxu0 0.0
        %v2119 = vand.u32 %v1420, 4294901760
        %v2120 = vsub.f32 %v1420, %v2119
        %v2121 = vand.u32 %v2120, 4294901760
        %2122 = vmatmul.mubr.f32.gmra.mrb[0].mxu0 %v2121
        %v2123 = vpop.f32.mrb[0].mxu0
        %v2124 = vadd.f32 %v1942, %v2123
        %v2125 = vpop.f32.mrb[0].mxu0
        %2126 = vmatprep.mubr.f32.mxu0 0.0
        %v2127 = vand.u32 %v1423, 4294901760
        %v2128 = vsub.f32 %v1423, %v2127
        %v2129 = vand.u32 %v2128, 4294901760
        %2130 = vmatmul.mubr.f32.gmra.mrb[0].mxu0 %v2129
        %v2131 = vpop.f32.mrb[0].mxu0
        %v2132 = vadd.f32 %v1949, %v2131
        %v2133 = vpop.f32.mrb[0].mxu0
        %2134 = vmatprep.mubr.f32.mxu0 0.0
        %v2135 = vand.u32 %v1426, 4294901760
        %v2136 = vsub.f32 %v1426, %v2135
        %v2137 = vand.u32 %v2136, 4294901760
        %2138 = vmatmul.mubr.f32.gmra.mrb[0].mxu0 %v2137
        %v2139 = vpop.f32.mrb[0].mxu0
        %v2140 = vadd.f32 %v1956, %v2139
        %v2141 = vpop.f32.mrb[0].mxu0
        %2142 = vmatprep.mubr.f32.mxu0 0.0
        %v2143 = vand.u32 %v1429, 4294901760
        %v2144 = vsub.f32 %v1429, %v2143
        %v2145 = vand.u32 %v2144, 4294901760
        %2146 = vmatmul.mubr.f32.gmra.mrb[0].mxu0 %v2145
        %v2147 = vpop.f32.mrb[0].mxu0
        %v2148 = vadd.f32 %v1963, %v2147
        %v2149 = vpop.f32.mrb[0].mxu0
        %2150 = vmatprep.mubr.f32.mxu0 0.0
        %v2151 = vand.u32 %v1432, 4294901760
        %v2152 = vsub.f32 %v1432, %v2151
        %v2153 = vand.u32 %v2152, 4294901760
        %2154 = vmatmul.mubr.f32.gmra.mrb[0].mxu0 %v2153
        %v2155 = vpop.f32.mrb[0].mxu0
        %v2156 = vadd.f32 %v1970, %v2155
        %v2157 = vpop.f32.mrb[0].mxu0
        %2158 = vmatprep.mubr.f32.mxu0 0.0
        %v2159 = vand.u32 %v1435, 4294901760
        %v2160 = vsub.f32 %v1435, %v2159
        %v2161 = vand.u32 %v2160, 4294901760
        %2162 = vmatmul.mubr.f32.gmra.mrb[0].mxu0 %v2161
        %v2163 = vpop.f32.mrb[0].mxu0
        %v2164 = vadd.f32 %v1977, %v2163
        %v2165 = vpop.f32.mrb[0].mxu0
        %2166 = vmatprep.mubr.f32.mxu0 0.0
        %v2167 = vand.u32 %v1438, 4294901760
        %v2168 = vsub.f32 %v1438, %v2167
        %v2169 = vand.u32 %v2168, 4294901760
        %2170 = vmatmul.mubr.f32.gmra.mrb[0].mxu0 %v2169
        %v2171 = vpop.f32.mrb[0].mxu0
        %v2172 = vadd.f32 %v1984, %v2171
        %v2173 = vpop.f32.mrb[0].mxu0
        %2174 = vmatprep.mubr.f32.mxu0 0.0
        %v2175 = vand.u32 %v1441, 4294901760
        %v2176 = vsub.f32 %v1441, %v2175
        %v2177 = vand.u32 %v2176, 4294901760
        %2178 = vmatmul.mubr.f32.gmra.mrb[0].mxu0 %v2177
        %v2179 = vpop.f32.mrb[0].mxu0
        %v2180 = vadd.f32 %v1991, %v2179
        %v2181 = vpop.f32.mrb[0].mxu0
        %2182 = vmatprep.mubr.f32.mxu0 0.0
        %v2183 = vand.u32 %v1444, 4294901760
        %v2184 = vsub.f32 %v1444, %v2183
        %v2185 = vand.u32 %v2184, 4294901760
        %2186 = vmatmul.mubr.f32.gmra.mrb[0].mxu0 %v2185
        %v2187 = vpop.f32.mrb[0].mxu0
        %v2188 = vadd.f32 %v1998, %v2187
        %v2189 = vpop.f32.mrb[0].mxu0
        %2190 = vmatprep.mubr.f32.mxu0 0.0
        %v2191 = vand.u32 %v1447, 4294901760
        %v2192 = vsub.f32 %v1447, %v2191
        %v2193 = vand.u32 %v2192, 4294901760
        %2194 = vmatmul.mubr.f32.gmra.mrb[0].mxu0 %v2193
        %v2195 = vpop.f32.mrb[0].mxu0
        %v2196 = vadd.f32 %v2005, %v2195
        %v2197 = vpop.f32.mrb[0].mxu0
        %2198 = vmatprep.mubr.f32.mxu0 0.0
        %v2199 = vand.u32 %v1450, 4294901760
        %v2200 = vsub.f32 %v1450, %v2199
        %v2201 = vand.u32 %v2200, 4294901760
        %2202 = vmatmul.mubr.f32.gmra.mrb[0].mxu0 %v2201
        %v2203 = vpop.f32.mrb[0].mxu0
        %v2204 = vadd.f32 %v2012, %v2203
        %v2205 = vpop.f32.mrb[0].mxu0
        %2206 = vmatprep.mubr.f32.mxu0 0.0
        %v2207 = vand.u32 %v1453, 4294901760
        %v2208 = vsub.f32 %v1453, %v2207
        %v2209 = vand.u32 %v2208, 4294901760
        %2210 = vmatmul.mubr.f32.gmra.mrb[0].mxu0 %v2209
        %v2211 = vpop.f32.mrb[0].mxu0
        %v2212 = vadd.f32 %v2019, %v2211
        %v2213 = vpop.f32.mrb[0].mxu0
        %2214 = vmatprep.mubr.f32.mxu0 0.0
        %v2215 = vand.u32 %v1456, 4294901760
        %v2216 = vsub.f32 %v1456, %v2215
        %v2217 = vand.u32 %v2216, 4294901760
        %2218 = vmatmul.mubr.f32.gmra.mrb[0].mxu0 %v2217
        %v2219 = vpop.f32.mrb[0].mxu0
        %v2220 = vadd.f32 %v2026, %v2219
        %v2221 = vpop.f32.mrb[0].mxu0
        %2222 = vdwg.mxu0
        %2223 = vmatprep.subr.mxu0 0.0
        %v2224 = vand.u32 %v1367, 4294901760
        %v2225 = vsub.f32 %v1367, %v2224
        %v2226 = vand.u32 %v2225, 4294901760
        %2227 = vmatpush1.msra.mxu0 %v2226
        %2228 = vmatprep.subr.mxu0 0.0
        %2229 = vmatpush1.msra.mxu0 0.0
        %2230 = vmatprep.subr.mxu0 0.0
        %2231 = vmatpush1.msra.mxu0 0.0
        %2232 = vmatprep.subr.mxu0 0.0
        %2233 = vmatpush1.msra.mxu0 0.0
        %2234 = vmatprep.subr.mxu0 0.0
        %2235 = vmatpush1.msra.mxu0 0.0
        %2236 = vmatprep.subr.mxu0 0.0
        %2237 = vmatpush1.msra.mxu0 0.0
        %2238 = vmatprep.subr.mxu0 0.0
        %2239 = vmatpush1.msra.mxu0 0.0
        %2240 = vmatprep.subr.mxu0 0.0
        %2241 = vmatpush1.msra.mxu0 0.0
        %2242 = vmatprep.subr.mxu0 0.0
        %2243 = vmatpush1.msra.mxu0 0.0
        %2244 = vmatprep.subr.mxu0 0.0
        %2245 = vmatpush1.msra.mxu0 0.0
        %2246 = vmatprep.subr.mxu0 0.0
        %2247 = vmatpush1.msra.mxu0 0.0
        %2248 = vmatprep.subr.mxu0 0.0
        %2249 = vmatpush1.msra.mxu0 0.0
        %2250 = vmatprep.subr.mxu0 0.0
        %2251 = vmatpush1.msra.mxu0 0.0
        %2252 = vmatprep.subr.mxu0 0.0
        %2253 = vmatpush1.msra.mxu0 0.0
        %2254 = vmatprep.subr.mxu0 0.0
        %2255 = vmatpush1.msra.mxu0 0.0
        %2256 = vmatprep.subr.mxu0 0.0
        %2257 = vmatpush1.msra.mxu0 0.0
        %2258 = vmatprep.subr.mxu0 0.0
        %2259 = vmatpush1.msra.mxu0 0.0
        %2260 = vmatprep.subr.mxu0 0.0
        %2261 = vmatpush1.msra.mxu0 0.0
        %2262 = vmatprep.subr.mxu0 0.0
        %2263 = vmatpush1.msra.mxu0 0.0
        %2264 = vmatprep.subr.mxu0 0.0
        %2265 = vmatpush1.msra.mxu0 0.0
        %2266 = vmatprep.subr.mxu0 0.0
        %2267 = vmatpush1.msra.mxu0 0.0
        %2268 = vmatprep.subr.mxu0 0.0
        %2269 = vmatpush1.msra.mxu0 0.0
        %2270 = vmatprep.subr.mxu0 0.0
        %2271 = vmatpush1.msra.mxu0 0.0
        %2272 = vmatprep.subr.mxu0 0.0
        %2273 = vmatpush1.msra.mxu0 0.0
        %2274 = vmatprep.subr.mxu0 0.0
        %2275 = vmatpush1.msra.mxu0 0.0
        %2276 = vmatprep.subr.mxu0 0.0
        %2277 = vmatpush1.msra.mxu0 0.0
        %2278 = vmatprep.subr.mxu0 0.0
        %2279 = vmatpush1.msra.mxu0 0.0
        %2280 = vmatprep.subr.mxu0 0.0
        %2281 = vmatpush1.msra.mxu0 0.0
        %2282 = vmatprep.subr.mxu0 0.0
        %2283 = vmatpush1.msra.mxu0 0.0
        %2284 = vmatprep.subr.mxu0 0.0
        %2285 = vmatpush1.msra.mxu0 0.0
        %2286 = vmatprep.subr.mxu0 0.0
        %2287 = vmatpush1.msra.mxu0 0.0
        %2288 = vmatprep.subr.mxu0 0.0
        %2289 = vmatpush1.msra.mxu0 0.0
        %2290 = vmatprep.mubr.f32.mxu0 0.0
        %v2291 = vand.u32 %v1411, 4294901760
        %2292 = vmatmul.mubr.f32.gmra.mrb[0].mxu0 %v2291
        %v2293 = vpop.f32.mrb[0].mxu0
        %v2294 = vadd.f32 %v2100, %v2293
        %v2295 = vpop.f32.mrb[0].mxu0
        %2296 = vmatprep.mubr.f32.mxu0 0.0
        %v2297 = vand.u32 %v1414, 4294901760
        %2298 = vmatmul.mubr.f32.gmra.mrb[0].mxu0 %v2297
        %v2299 = vpop.f32.mrb[0].mxu0
        %v2300 = vadd.f32 %v2108, %v2299
        %v2301 = vpop.f32.mrb[0].mxu0
        %2302 = vmatprep.mubr.f32.mxu0 0.0
        %v2303 = vand.u32 %v1417, 4294901760
        %2304 = vmatmul.mubr.f32.gmra.mrb[0].mxu0 %v2303
        %v2305 = vpop.f32.mrb[0].mxu0
        %v2306 = vadd.f32 %v2116, %v2305
        %v2307 = vpop.f32.mrb[0].mxu0
        %2308 = vmatprep.mubr.f32.mxu0 0.0
        %v2309 = vand.u32 %v1420, 4294901760
        %2310 = vmatmul.mubr.f32.gmra.mrb[0].mxu0 %v2309
        %v2311 = vpop.f32.mrb[0].mxu0
        %v2312 = vadd.f32 %v2124, %v2311
        %v2313 = vpop.f32.mrb[0].mxu0
        %2314 = vmatprep.mubr.f32.mxu0 0.0
        %v2315 = vand.u32 %v1423, 4294901760
        %2316 = vmatmul.mubr.f32.gmra.mrb[0].mxu0 %v2315
        %v2317 = vpop.f32.mrb[0].mxu0
        %v2318 = vadd.f32 %v2132, %v2317
        %v2319 = vpop.f32.mrb[0].mxu0
        %2320 = vmatprep.mubr.f32.mxu0 0.0
        %v2321 = vand.u32 %v1426, 4294901760
        %2322 = vmatmul.mubr.f32.gmra.mrb[0].mxu0 %v2321
        %v2323 = vpop.f32.mrb[0].mxu0
        %v2324 = vadd.f32 %v2140, %v2323
        %v2325 = vpop.f32.mrb[0].mxu0
        %2326 = vmatprep.mubr.f32.mxu0 0.0
        %v2327 = vand.u32 %v1429, 4294901760
        %2328 = vmatmul.mubr.f32.gmra.mrb[0].mxu0 %v2327
        %v2329 = vpop.f32.mrb[0].mxu0
        %v2330 = vadd.f32 %v2148, %v2329
        %v2331 = vpop.f32.mrb[0].mxu0
        %2332 = vmatprep.mubr.f32.mxu0 0.0
        %v2333 = vand.u32 %v1432, 4294901760
        %2334 = vmatmul.mubr.f32.gmra.mrb[0].mxu0 %v2333
        %v2335 = vpop.f32.mrb[0].mxu0
        %v2336 = vadd.f32 %v2156, %v2335
        %v2337 = vpop.f32.mrb[0].mxu0
        %2338 = vmatprep.mubr.f32.mxu0 0.0
        %v2339 = vand.u32 %v1435, 4294901760
        %2340 = vmatmul.mubr.f32.gmra.mrb[0].mxu0 %v2339
        %v2341 = vpop.f32.mrb[0].mxu0
        %v2342 = vadd.f32 %v2164, %v2341
        %v2343 = vpop.f32.mrb[0].mxu0
        %2344 = vmatprep.mubr.f32.mxu0 0.0
        %v2345 = vand.u32 %v1438, 4294901760
        %2346 = vmatmul.mubr.f32.gmra.mrb[0].mxu0 %v2345
        %v2347 = vpop.f32.mrb[0].mxu0
        %v2348 = vadd.f32 %v2172, %v2347
        %v2349 = vpop.f32.mrb[0].mxu0
        %2350 = vmatprep.mubr.f32.mxu0 0.0
        %v2351 = vand.u32 %v1441, 4294901760
        %2352 = vmatmul.mubr.f32.gmra.mrb[0].mxu0 %v2351
        %v2353 = vpop.f32.mrb[0].mxu0
        %v2354 = vadd.f32 %v2180, %v2353
        %v2355 = vpop.f32.mrb[0].mxu0
        %2356 = vmatprep.mubr.f32.mxu0 0.0
        %v2357 = vand.u32 %v1444, 4294901760
        %2358 = vmatmul.mubr.f32.gmra.mrb[0].mxu0 %v2357
        %v2359 = vpop.f32.mrb[0].mxu0
        %v2360 = vadd.f32 %v2188, %v2359
        %v2361 = vpop.f32.mrb[0].mxu0
        %2362 = vmatprep.mubr.f32.mxu0 0.0
        %v2363 = vand.u32 %v1447, 4294901760
        %2364 = vmatmul.mubr.f32.gmra.mrb[0].mxu0 %v2363
        %v2365 = vpop.f32.mrb[0].mxu0
        %v2366 = vadd.f32 %v2196, %v2365
        %v2367 = vpop.f32.mrb[0].mxu0
        %2368 = vmatprep.mubr.f32.mxu0 0.0
        %v2369 = vand.u32 %v1450, 4294901760
        %2370 = vmatmul.mubr.f32.gmra.mrb[0].mxu0 %v2369
        %v2371 = vpop.f32.mrb[0].mxu0
        %v2372 = vadd.f32 %v2204, %v2371
        %v2373 = vpop.f32.mrb[0].mxu0
        %2374 = vmatprep.mubr.f32.mxu0 0.0
        %v2375 = vand.u32 %v1453, 4294901760
        %2376 = vmatmul.mubr.f32.gmra.mrb[0].mxu0 %v2375
        %v2377 = vpop.f32.mrb[0].mxu0
        %v2378 = vadd.f32 %v2212, %v2377
        %v2379 = vpop.f32.mrb[0].mxu0
        %2380 = vmatprep.mubr.f32.mxu0 0.0
        %v2381 = vand.u32 %v1456, 4294901760
        %2382 = vmatmul.mubr.f32.gmra.mrb[0].mxu0 %v2381
        %v2383 = vpop.f32.mrb[0].mxu0
        %v2384 = vadd.f32 %v2220, %v2383
        %v2385 = vpop.f32.mrb[0].mxu0
        %2386 = vdwg.mxu0
        %2387 = vmatprep.subr.mxu0 0.0
        %v2388 = vand.u32 %v1367, 4294901760
        %2389 = vmatpush1.msra.mxu0 %v2388
        %2390 = vmatprep.subr.mxu0 0.0
        %2391 = vmatpush1.msra.mxu0 0.0
        %2392 = vmatprep.subr.mxu0 0.0
        %2393 = vmatpush1.msra.mxu0 0.0
        %2394 = vmatprep.subr.mxu0 0.0
        %2395 = vmatpush1.msra.mxu0 0.0
        %2396 = vmatprep.subr.mxu0 0.0
        %2397 = vmatpush1.msra.mxu0 0.0
        %2398 = vmatprep.subr.mxu0 0.0
        %2399 = vmatpush1.msra.mxu0 0.0
        %2400 = vmatprep.subr.mxu0 0.0
        %2401 = vmatpush1.msra.mxu0 0.0
        %2402 = vmatprep.subr.mxu0 0.0
        %2403 = vmatpush1.msra.mxu0 0.0
        %2404 = vmatprep.subr.mxu0 0.0
        %2405 = vmatpush1.msra.mxu0 0.0
        %2406 = vmatprep.subr.mxu0 0.0
        %2407 = vmatpush1.msra.mxu0 0.0
        %2408 = vmatprep.subr.mxu0 0.0
        %2409 = vmatpush1.msra.mxu0 0.0
        %2410 = vmatprep.subr.mxu0 0.0
        %2411 = vmatpush1.msra.mxu0 0.0
        %2412 = vmatprep.subr.mxu0 0.0
        %2413 = vmatpush1.msra.mxu0 0.0
        %2414 = vmatprep.subr.mxu0 0.0
        %2415 = vmatpush1.msra.mxu0 0.0
        %2416 = vmatprep.subr.mxu0 0.0
        %2417 = vmatpush1.msra.mxu0 0.0
        %2418 = vmatprep.subr.mxu0 0.0
        %2419 = vmatpush1.msra.mxu0 0.0
        %2420 = vmatprep.subr.mxu0 0.0
        %2421 = vmatpush1.msra.mxu0 0.0
        %2422 = vmatprep.subr.mxu0 0.0
        %2423 = vmatpush1.msra.mxu0 0.0
        %2424 = vmatprep.subr.mxu0 0.0
        %2425 = vmatpush1.msra.mxu0 0.0
        %2426 = vmatprep.subr.mxu0 0.0
        %2427 = vmatpush1.msra.mxu0 0.0
        %2428 = vmatprep.subr.mxu0 0.0
        %2429 = vmatpush1.msra.mxu0 0.0
        %2430 = vmatprep.subr.mxu0 0.0
        %2431 = vmatpush1.msra.mxu0 0.0
        %2432 = vmatprep.subr.mxu0 0.0
        %2433 = vmatpush1.msra.mxu0 0.0
        %2434 = vmatprep.subr.mxu0 0.0
        %2435 = vmatpush1.msra.mxu0 0.0
        %2436 = vmatprep.subr.mxu0 0.0
        %2437 = vmatpush1.msra.mxu0 0.0
        %2438 = vmatprep.subr.mxu0 0.0
        %2439 = vmatpush1.msra.mxu0 0.0
        %2440 = vmatprep.subr.mxu0 0.0
        %2441 = vmatpush1.msra.mxu0 0.0
        %2442 = vmatprep.subr.mxu0 0.0
        %2443 = vmatpush1.msra.mxu0 0.0
        %2444 = vmatprep.subr.mxu0 0.0
        %2445 = vmatpush1.msra.mxu0 0.0
        %2446 = vmatprep.subr.mxu0 0.0
        %2447 = vmatpush1.msra.mxu0 0.0
        %2448 = vmatprep.subr.mxu0 0.0
        %2449 = vmatpush1.msra.mxu0 0.0
        %2450 = vmatprep.subr.mxu0 0.0
        %2451 = vmatpush1.msra.mxu0 0.0
        %2452 = vmatprep.mubr.f32.mxu0 0.0
        %v2453 = vand.u32 %v1411, 4294901760
        %2454 = vmatmul.mubr.f32.gmra.mrb[0].mxu0 %v2453
        %v2455 = vpop.f32.mrb[0].mxu0
        %v2456 = vadd.f32 %v2294, %v2455
        %v2457 = vpop.f32.mrb[0].mxu0
        %2458 = vmatprep.mubr.f32.mxu0 0.0
        %v2459 = vand.u32 %v1414, 4294901760
        %2460 = vmatmul.mubr.f32.gmra.mrb[0].mxu0 %v2459
        %v2461 = vpop.f32.mrb[0].mxu0
        %v2462 = vadd.f32 %v2300, %v2461
        %v2463 = vpop.f32.mrb[0].mxu0
        %2464 = vmatprep.mubr.f32.mxu0 0.0
        %v2465 = vand.u32 %v1417, 4294901760
        %2466 = vmatmul.mubr.f32.gmra.mrb[0].mxu0 %v2465
        %v2467 = vpop.f32.mrb[0].mxu0
        %v2468 = vadd.f32 %v2306, %v2467
        %v2469 = vpop.f32.mrb[0].mxu0
        %2470 = vmatprep.mubr.f32.mxu0 0.0
        %v2471 = vand.u32 %v1420, 4294901760
        %2472 = vmatmul.mubr.f32.gmra.mrb[0].mxu0 %v2471
        %v2473 = vpop.f32.mrb[0].mxu0
        %v2474 = vadd.f32 %v2312, %v2473
        %v2475 = vpop.f32.mrb[0].mxu0
        %2476 = vmatprep.mubr.f32.mxu0 0.0
        %v2477 = vand.u32 %v1423, 4294901760
        %2478 = vmatmul.mubr.f32.gmra.mrb[0].mxu0 %v2477
        %v2479 = vpop.f32.mrb[0].mxu0
        %v2480 = vadd.f32 %v2318, %v2479
        %v2481 = vpop.f32.mrb[0].mxu0
        %2482 = vmatprep.mubr.f32.mxu0 0.0
        %v2483 = vand.u32 %v1426, 4294901760
        %2484 = vmatmul.mubr.f32.gmra.mrb[0].mxu0 %v2483
        %v2485 = vpop.f32.mrb[0].mxu0
        %v2486 = vadd.f32 %v2324, %v2485
        %v2487 = vpop.f32.mrb[0].mxu0
        %2488 = vmatprep.mubr.f32.mxu0 0.0
        %v2489 = vand.u32 %v1429, 4294901760
        %2490 = vmatmul.mubr.f32.gmra.mrb[0].mxu0 %v2489
        %v2491 = vpop.f32.mrb[0].mxu0
        %v2492 = vadd.f32 %v2330, %v2491
        %v2493 = vpop.f32.mrb[0].mxu0
        %2494 = vmatprep.mubr.f32.mxu0 0.0
        %v2495 = vand.u32 %v1432, 4294901760
        %2496 = vmatmul.mubr.f32.gmra.mrb[0].mxu0 %v2495
        %v2497 = vpop.f32.mrb[0].mxu0
        %v2498 = vadd.f32 %v2336, %v2497
        %v2499 = vpop.f32.mrb[0].mxu0
        %2500 = vmatprep.mubr.f32.mxu0 0.0
        %v2501 = vand.u32 %v1435, 4294901760
        %2502 = vmatmul.mubr.f32.gmra.mrb[0].mxu0 %v2501
        %v2503 = vpop.f32.mrb[0].mxu0
        %v2504 = vadd.f32 %v2342, %v2503
        %v2505 = vpop.f32.mrb[0].mxu0
        %2506 = vmatprep.mubr.f32.mxu0 0.0
        %v2507 = vand.u32 %v1438, 4294901760
        %2508 = vmatmul.mubr.f32.gmra.mrb[0].mxu0 %v2507
        %v2509 = vpop.f32.mrb[0].mxu0
        %v2510 = vadd.f32 %v2348, %v2509
        %v2511 = vpop.f32.mrb[0].mxu0
        %2512 = vmatprep.mubr.f32.mxu0 0.0
        %v2513 = vand.u32 %v1441, 4294901760
        %2514 = vmatmul.mubr.f32.gmra.mrb[0].mxu0 %v2513
        %v2515 = vpop.f32.mrb[0].mxu0
        %v2516 = vadd.f32 %v2354, %v2515
        %v2517 = vpop.f32.mrb[0].mxu0
        %2518 = vmatprep.mubr.f32.mxu0 0.0
        %v2519 = vand.u32 %v1444, 4294901760
        %2520 = vmatmul.mubr.f32.gmra.mrb[0].mxu0 %v2519
        %v2521 = vpop.f32.mrb[0].mxu0
        %v2522 = vadd.f32 %v2360, %v2521
        %v2523 = vpop.f32.mrb[0].mxu0
        %2524 = vmatprep.mubr.f32.mxu0 0.0
        %v2525 = vand.u32 %v1447, 4294901760
        %2526 = vmatmul.mubr.f32.gmra.mrb[0].mxu0 %v2525
        %v2527 = vpop.f32.mrb[0].mxu0
        %v2528 = vadd.f32 %v2366, %v2527
        %v2529 = vpop.f32.mrb[0].mxu0
        %2530 = vmatprep.mubr.f32.mxu0 0.0
        %v2531 = vand.u32 %v1450, 4294901760
        %2532 = vmatmul.mubr.f32.gmra.mrb[0].mxu0 %v2531
        %v2533 = vpop.f32.mrb[0].mxu0
        %v2534 = vadd.f32 %v2372, %v2533
        %v2535 = vpop.f32.mrb[0].mxu0
        %2536 = vmatprep.mubr.f32.mxu0 0.0
        %v2537 = vand.u32 %v1453, 4294901760
        %2538 = vmatmul.mubr.f32.gmra.mrb[0].mxu0 %v2537
        %v2539 = vpop.f32.mrb[0].mxu0
        %v2540 = vadd.f32 %v2378, %v2539
        %v2541 = vpop.f32.mrb[0].mxu0
        %2542 = vmatprep.mubr.f32.mxu0 0.0
        %v2543 = vand.u32 %v1456, 4294901760
        %2544 = vmatmul.mubr.f32.gmra.mrb[0].mxu0 %v2543
        %v2545 = vpop.f32.mrb[0].mxu0
        %v2546 = vadd.f32 %v2384, %v2545
        %v2547 = vpop.f32.mrb[0].mxu0
        %2548 = vdwg.mxu0
        %v2549 = vld [vmem:[#allocation3] sm:$0xff]
        %v2550 = vld [vmem:[#allocation3 + $0x8] sm:$0xff]
        %v2551 = vld [vmem:[#allocation3 + $0x10] sm:$0xff]
        %v2552 = vld [vmem:[#allocation3 + $0x18] sm:$0xff]
        %v2553 = vld [vmem:[#allocation3 + $0x20] sm:$0xff]
        %v2554 = vld [vmem:[#allocation3 + $0x28] sm:$0xff]
        %v2555 = vld [vmem:[#allocation3 + $0x30] sm:$0xff]
        %v2556 = vld [vmem:[#allocation3 + $0x38] sm:$0xff]
        %v2557 = vld [vmem:[#allocation3 + $0x40] sm:$0xff]
        %v2558 = vld [vmem:[#allocation3 + $0x48] sm:$0xff]
        %v2559 = vld [vmem:[#allocation3 + $0x50] sm:$0xff]
        %v2560 = vld [vmem:[#allocation3 + $0x58] sm:$0xff]
        %v2561 = vld [vmem:[#allocation3 + $0x60] sm:$0xff]
        %v2562 = vld [vmem:[#allocation3 + $0x68] sm:$0xff]
        %v2563 = vld [vmem:[#allocation3 + $0x70] sm:$0xff]
        %v2564 = vld [vmem:[#allocation3 + $0x78] sm:$0xff]
        %v2565 = vlaneseq
        %v2566 = vand.u32 %v2565, 127
        %s2567 = smul.u32 %s30, 128
        %v2568 = vstv %s2567
        %v2569 = vadd.s32 %v2566, %v2568
        %2570 = vset.pattern.permute.xlu0 0
        %2571 = vperm.xlu0 %2570, %v2549
        %v2572 = vpop.permute.xlu0 %2571
        %2573 = vset.pattern.permute.xlu0 0
        %2574 = vperm.xlu0 %2573, %v2550
        %v2575 = vpop.permute.xlu0 %2574
        %2576 = vset.pattern.permute.xlu0 0
        %2577 = vperm.xlu0 %2576, %v2551
        %v2578 = vpop.permute.xlu0 %2577
        %2579 = vset.pattern.permute.xlu0 0
        %2580 = vperm.xlu0 %2579, %v2552
        %v2581 = vpop.permute.xlu0 %2580
        %2582 = vset.pattern.permute.xlu0 0
        %2583 = vperm.xlu0 %2582, %v2553
        %v2584 = vpop.permute.xlu0 %2583
        %2585 = vset.pattern.permute.xlu0 0
        %2586 = vperm.xlu0 %2585, %v2554
        %v2587 = vpop.permute.xlu0 %2586
        %2588 = vset.pattern.permute.xlu0 0
        %2589 = vperm.xlu0 %2588, %v2555
        %v2590 = vpop.permute.xlu0 %2589
        %2591 = vset.pattern.permute.xlu0 0
        %2592 = vperm.xlu0 %2591, %v2556
        %v2593 = vpop.permute.xlu0 %2592
        %2594 = vset.pattern.permute.xlu0 0
        %2595 = vperm.xlu0 %2594, %v2557
        %v2596 = vpop.permute.xlu0 %2595
        %2597 = vset.pattern.permute.xlu0 0
        %2598 = vperm.xlu0 %2597, %v2558
        %v2599 = vpop.permute.xlu0 %2598
        %2600 = vset.pattern.permute.xlu0 0
        %2601 = vperm.xlu0 %2600, %v2559
        %v2602 = vpop.permute.xlu0 %2601
        %2603 = vset.pattern.permute.xlu0 0
        %2604 = vperm.xlu0 %2603, %v2560
        %v2605 = vpop.permute.xlu0 %2604
        %2606 = vset.pattern.permute.xlu0 0
        %2607 = vperm.xlu0 %2606, %v2561
        %v2608 = vpop.permute.xlu0 %2607
        %2609 = vset.pattern.permute.xlu0 0
        %2610 = vperm.xlu0 %2609, %v2562
        %v2611 = vpop.permute.xlu0 %2610
        %2612 = vset.pattern.permute.xlu0 0
        %2613 = vperm.xlu0 %2612, %v2563
        %v2614 = vpop.permute.xlu0 %2613
        %2615 = vset.pattern.permute.xlu0 0
        %2616 = vperm.xlu0 %2615, %v2564
        %v2617 = vpop.permute.xlu0 %2616
        %vm2618 = vcmp.gt.s32.totalorder %v2569, %v2572
        %vm2619 = vcmp.gt.s32.totalorder %v2569, %v2575
        %vm2620 = vcmp.gt.s32.totalorder %v2569, %v2578
        %vm2621 = vcmp.gt.s32.totalorder %v2569, %v2581
        %vm2622 = vcmp.gt.s32.totalorder %v2569, %v2584
        %vm2623 = vcmp.gt.s32.totalorder %v2569, %v2587
        %vm2624 = vcmp.gt.s32.totalorder %v2569, %v2590
        %vm2625 = vcmp.gt.s32.totalorder %v2569, %v2593
        %vm2626 = vcmp.gt.s32.totalorder %v2569, %v2596
        %vm2627 = vcmp.gt.s32.totalorder %v2569, %v2599
        %vm2628 = vcmp.gt.s32.totalorder %v2569, %v2602
        %vm2629 = vcmp.gt.s32.totalorder %v2569, %v2605
        %vm2630 = vcmp.gt.s32.totalorder %v2569, %v2608
        %vm2631 = vcmp.gt.s32.totalorder %v2569, %v2611
        %vm2632 = vcmp.gt.s32.totalorder %v2569, %v2614
        %vm2633 = vcmp.gt.s32.totalorder %v2569, %v2617
        %v2634 = vsel %vm2618, -inf, %v2456
        %v2635 = vsel %vm2619, -inf, %v2462
        %v2636 = vsel %vm2620, -inf, %v2468
        %v2637 = vsel %vm2621, -inf, %v2474
        %v2638 = vsel %vm2622, -inf, %v2480
        %v2639 = vsel %vm2623, -inf, %v2486
        %v2640 = vsel %vm2624, -inf, %v2492
        %v2641 = vsel %vm2625, -inf, %v2498
        %v2642 = vsel %vm2626, -inf, %v2504
        %v2643 = vsel %vm2627, -inf, %v2510
        %v2644 = vsel %vm2628, -inf, %v2516
        %v2645 = vsel %vm2629, -inf, %v2522
        %v2646 = vsel %vm2630, -inf, %v2528
        %v2647 = vsel %vm2631, -inf, %v2534
        %v2648 = vsel %vm2632, -inf, %v2540
        %v2649 = vsel %vm2633, -inf, %v2546
        %v2650 = vmax.f32 %v2634, %v2638
        %v2651 = vmax.f32 %v2635, %v2639
        %v2652 = vmax.f32 %v2636, %v2640
        %v2653 = vmax.f32 %v2637, %v2641
        %v2654 = vmax.f32 %v2650, %v2642
        %v2655 = vmax.f32 %v2651, %v2643
        %v2656 = vmax.f32 %v2652, %v2644
        %v2657 = vmax.f32 %v2653, %v2645
        %v2658 = vmax.f32 %v2654, %v2646
        %v2659 = vmax.f32 %v2655, %v2647
        %v2660 = vmax.f32 %v2656, %v2648
        %v2661 = vmax.f32 %v2657, %v2649
        %v2662 = vmax.f32 %v2658, %v2659
        %v2663 = vmax.f32 %v2660, %v2661
        %v2664 = vmax.f32 %v2662, %v2663
        %v2665 = vrot.slane %v2664, 4
        %v2666 = vmax.f32 %v2664, %v2665
        %v2667 = vrot.slane %v2666, 2
        %v2668 = vmax.f32 %v2666, %v2667
        %v2669 = vrot.slane %v2668, 1
        %v2670 = vmax.f32 %v2668, %v2669
        %v2671 = vmax.f32 %v2670, -3e+38
        %v2672 = vsub.f32 %v2634, %v2671
        %v2673 = vsub.f32 %v2635, %v2671
        %v2674 = vsub.f32 %v2636, %v2671
        %v2675 = vsub.f32 %v2637, %v2671
        %v2676 = vsub.f32 %v2638, %v2671
        %v2677 = vsub.f32 %v2639, %v2671
        %v2678 = vsub.f32 %v2640, %v2671
        %v2679 = vsub.f32 %v2641, %v2671
        %v2680 = vsub.f32 %v2642, %v2671
        %v2681 = vsub.f32 %v2643, %v2671
        %v2682 = vsub.f32 %v2644, %v2671
        %v2683 = vsub.f32 %v2645, %v2671
        %v2684 = vsub.f32 %v2646, %v2671
        %v2685 = vsub.f32 %v2647, %v2671
        %v2686 = vsub.f32 %v2648, %v2671
        %v2687 = vsub.f32 %v2649, %v2671
        %v2688 = vmul.f32 %v2672, 1.442695
        %v2689 = vpow.pop %v2688
        %v2690 = vmul.f32 %v2673, 1.442695
        %v2691 = vpow.pop %v2690
        %v2692 = vmul.f32 %v2674, 1.442695
        %v2693 = vpow.pop %v2692
        %v2694 = vmul.f32 %v2675, 1.442695
        %v2695 = vpow.pop %v2694
        %v2696 = vmul.f32 %v2676, 1.442695
        %v2697 = vpow.pop %v2696
        %v2698 = vmul.f32 %v2677, 1.442695
        %v2699 = vpow.pop %v2698
        %v2700 = vmul.f32 %v2678, 1.442695
        %v2701 = vpow.pop %v2700
        %v2702 = vmul.f32 %v2679, 1.442695
        %v2703 = vpow.pop %v2702
        %v2704 = vmul.f32 %v2680, 1.442695
        %v2705 = vpow.pop %v2704
        %v2706 = vmul.f32 %v2681, 1.442695
        %v2707 = vpow.pop %v2706
        %v2708 = vmul.f32 %v2682, 1.442695
        %v2709 = vpow.pop %v2708
        %v2710 = vmul.f32 %v2683, 1.442695
        %v2711 = vpow.pop %v2710
        %v2712 = vmul.f32 %v2684, 1.442695
        %v2713 = vpow.pop %v2712
        %v2714 = vmul.f32 %v2685, 1.442695
        %v2715 = vpow.pop %v2714
        %v2716 = vmul.f32 %v2686, 1.442695
        %v2717 = vpow.pop %v2716
        %v2718 = vmul.f32 %v2687, 1.442695
        %v2719 = vpow.pop %v2718
        %v2720 = vadd.f32 %v2689, %v2691
        %v2721 = vadd.f32 %v2720, %v2693
        %v2722 = vadd.f32 %v2721, %v2695
        %v2723 = vadd.f32 %v2722, %v2697
        %v2724 = vadd.f32 %v2723, %v2699
        %v2725 = vadd.f32 %v2724, %v2701
        %v2726 = vadd.f32 %v2725, %v2703
        %v2727 = vadd.f32 %v2726, %v2705
        %v2728 = vadd.f32 %v2727, %v2707
        %v2729 = vadd.f32 %v2728, %v2709
        %v2730 = vadd.f32 %v2729, %v2711
        %v2731 = vadd.f32 %v2730, %v2713
        %v2732 = vadd.f32 %v2731, %v2715
        %v2733 = vadd.f32 %v2732, %v2717
        %v2734 = vadd.f32 %v2733, %v2719
        %v2735 = vrot.slane %v2734, 4
        %v2736 = vadd.f32 %v2734, %v2735
        %v2737 = vrot.slane %v2736, 2
        %v2738 = vadd.f32 %v2736, %v2737
        %v2739 = vrot.slane %v2738, 1
        %v2740 = vadd.f32 %v2738, %v2739
        %v2741 = vmax.f32 %v2740, 1e-20
        %v2742 = vrcp.pop %v2741
        %v2743 = vmul.f32 %v2741, %v2742
        %v2744 = vsub.f32 2.0, %v2743
        %v2745 = vmul.f32 %v2742, %v2744
        %v2746 = vmul.f32 %v2689, %v2745
        %v2747 = vmul.f32 %v2691, %v2745
        %v2748 = vmul.f32 %v2693, %v2745
        %v2749 = vmul.f32 %v2695, %v2745
        %v2750 = vmul.f32 %v2697, %v2745
        %v2751 = vmul.f32 %v2699, %v2745
        %v2752 = vmul.f32 %v2701, %v2745
        %v2753 = vmul.f32 %v2703, %v2745
        %v2754 = vmul.f32 %v2705, %v2745
        %v2755 = vmul.f32 %v2707, %v2745
        %v2756 = vmul.f32 %v2709, %v2745
        %v2757 = vmul.f32 %v2711, %v2745
        %v2758 = vmul.f32 %v2713, %v2745
        %v2759 = vmul.f32 %v2715, %v2745
        %v2760 = vmul.f32 %v2717, %v2745
        %v2761 = vmul.f32 %v2719, %v2745
        %2762 = vst [vmem:[%s315] sm:$0xff] %v2746
        %2763 = vst [vmem:[%s315 + $0x8] sm:$0xff] %v2747
        %2764 = vst [vmem:[%s315 + $0x10] sm:$0xff] %v2748
        %2765 = vst [vmem:[%s315 + $0x18] sm:$0xff] %v2749
        %2766 = vst [vmem:[%s315 + $0x20] sm:$0xff] %v2750
        %2767 = vst [vmem:[%s315 + $0x28] sm:$0xff] %v2751
        %2768 = vst [vmem:[%s315 + $0x30] sm:$0xff] %v2752
        %2769 = vst [vmem:[%s315 + $0x38] sm:$0xff] %v2753
        %2770 = vst [vmem:[%s315 + $0x40] sm:$0xff] %v2754
        %2771 = vst [vmem:[%s315 + $0x48] sm:$0xff] %v2755
        %2772 = vst [vmem:[%s315 + $0x50] sm:$0xff] %v2756
        %2773 = vst [vmem:[%s315 + $0x58] sm:$0xff] %v2757
        %2774 = vst [vmem:[%s315 + $0x60] sm:$0xff] %v2758
        %2775 = vst [vmem:[%s315 + $0x68] sm:$0xff] %v2759
        %2776 = vst [vmem:[%s315 + $0x70] sm:$0xff] %v2760
        %2777 = vst [vmem:[%s315 + $0x78] sm:$0xff] %v2761
        %v2778 = vld [vmem:[%s308] sm:$0xf]
        %2779 = vmatprep.subr.mxu0 0.0
        %v2780 = vand.u32 %v2746, 4294901760
        %2781 = vmatpush1.xpose.msra.mxu0 %v2780
        %2782 = vmatprep.subr.mxu0 0.0
        %v2783 = vand.u32 %v2747, 4294901760
        %2784 = vmatpush1.xpose.msra.mxu0 %v2783
        %2785 = vmatprep.subr.mxu0 0.0
        %v2786 = vand.u32 %v2748, 4294901760
        %2787 = vmatpush1.xpose.msra.mxu0 %v2786
        %2788 = vmatprep.subr.mxu0 0.0
        %v2789 = vand.u32 %v2749, 4294901760
        %2790 = vmatpush1.xpose.msra.mxu0 %v2789
        %2791 = vmatprep.subr.mxu0 0.0
        %v2792 = vand.u32 %v2750, 4294901760
        %2793 = vmatpush1.xpose.msra.mxu0 %v2792
        %2794 = vmatprep.subr.mxu0 0.0
        %v2795 = vand.u32 %v2751, 4294901760
        %2796 = vmatpush1.xpose.msra.mxu0 %v2795
        %2797 = vmatprep.subr.mxu0 0.0
        %v2798 = vand.u32 %v2752, 4294901760
        %2799 = vmatpush1.xpose.msra.mxu0 %v2798
        %2800 = vmatprep.subr.mxu0 0.0
        %v2801 = vand.u32 %v2753, 4294901760
        %2802 = vmatpush1.xpose.msra.mxu0 %v2801
        %2803 = vmatprep.subr.mxu0 0.0
        %v2804 = vand.u32 %v2754, 4294901760
        %2805 = vmatpush1.xpose.msra.mxu0 %v2804
        %2806 = vmatprep.subr.mxu0 0.0
        %v2807 = vand.u32 %v2755, 4294901760
        %2808 = vmatpush1.xpose.msra.mxu0 %v2807
        %2809 = vmatprep.subr.mxu0 0.0
        %v2810 = vand.u32 %v2756, 4294901760
        %2811 = vmatpush1.xpose.msra.mxu0 %v2810
        %2812 = vmatprep.subr.mxu0 0.0
        %v2813 = vand.u32 %v2757, 4294901760
        %2814 = vmatpush1.xpose.msra.mxu0 %v2813
        %2815 = vmatprep.subr.mxu0 0.0
        %v2816 = vand.u32 %v2758, 4294901760
        %2817 = vmatpush1.xpose.msra.mxu0 %v2816
        %2818 = vmatprep.subr.mxu0 0.0
        %v2819 = vand.u32 %v2759, 4294901760
        %2820 = vmatpush1.xpose.msra.mxu0 %v2819
        %2821 = vmatprep.subr.mxu0 0.0
        %v2822 = vand.u32 %v2760, 4294901760
        %2823 = vmatpush1.xpose.msra.mxu0 %v2822
        %2824 = vmatprep.subr.mxu0 0.0
        %v2825 = vand.u32 %v2761, 4294901760
        %2826 = vmatpush1.xpose.msra.mxu0 %v2825
        %2827 = vmatprep.subr.mxu0 0.0
        %2828 = vmatpush1.xpose.msra.mxu0 0.0
        %2829 = vmatprep.subr.mxu0 0.0
        %2830 = vmatpush1.xpose.msra.mxu0 0.0
        %2831 = vmatprep.subr.mxu0 0.0
        %2832 = vmatpush1.xpose.msra.mxu0 0.0
        %2833 = vmatprep.subr.mxu0 0.0
        %2834 = vmatpush1.xpose.msra.mxu0 0.0
        %2835 = vmatprep.subr.mxu0 0.0
        %2836 = vmatpush1.xpose.msra.mxu0 0.0
        %2837 = vmatprep.subr.mxu0 0.0
        %2838 = vmatpush1.xpose.msra.mxu0 0.0
        %2839 = vmatprep.subr.mxu0 0.0
        %2840 = vmatpush1.xpose.msra.mxu0 0.0
        %2841 = vmatprep.subr.mxu0 0.0
        %2842 = vmatpush1.xpose.msra.mxu0 0.0
        %2843 = vmatprep.subr.mxu0 0.0
        %2844 = vmatpush1.xpose.msra.mxu0 0.0
        %2845 = vmatprep.subr.mxu0 0.0
        %2846 = vmatpush1.xpose.msra.mxu0 0.0
        %2847 = vmatprep.subr.mxu0 0.0
        %2848 = vmatpush1.xpose.msra.mxu0 0.0
        %2849 = vmatprep.subr.mxu0 0.0
        %2850 = vmatpush1.xpose.msra.mxu0 0.0
        %2851 = vmatprep.subr.mxu0 0.0
        %2852 = vmatpush1.xpose.msra.mxu0 0.0
        %2853 = vmatprep.subr.mxu0 0.0
        %2854 = vmatpush1.xpose.msra.mxu0 0.0
        %2855 = vmatprep.subr.mxu0 0.0
        %2856 = vmatpush1.xpose.msra.mxu0 0.0
        %2857 = vmatprep.subr.mxu0 0.0
        %2858 = vmatpush1.xpose.msra.mxu0 0.0
        %2859 = vmatprep.mubr.f32.mxu0 0.0
        %v2860 = vand.u32 %v1373, 4294901760
        %v2861 = vsub.f32 %v1373, %v2860
        %v2862 = vand.u32 %v2861, 4294901760
        %v2863 = vsub.f32 %v2861, %v2862
        %v2864 = vand.u32 %v2863, 4294901760
        %2865 = vmatmul.mubr.f32.gmra.mrb[0].mxu0 %v2864
        %v2866 = vpop.f32.mrb[0].mxu0
        %v2867 = vadd.f32 0.0, %v2866
        %v2868 = vpop.f32.mrb[0].mxu0
        %2869 = vdwg.mxu0
        %2870 = vmatprep.subr.mxu0 0.0
        %v2871 = vand.u32 %v2746, 4294901760
        %v2872 = vsub.f32 %v2746, %v2871
        %v2873 = vand.u32 %v2872, 4294901760
        %v2874 = vsub.f32 %v2872, %v2873
        %v2875 = vand.u32 %v2874, 4294901760
        %2876 = vmatpush1.xpose.msra.mxu0 %v2875
        %2877 = vmatprep.subr.mxu0 0.0
        %v2878 = vand.u32 %v2747, 4294901760
        %v2879 = vsub.f32 %v2747, %v2878
        %v2880 = vand.u32 %v2879, 4294901760
        %v2881 = vsub.f32 %v2879, %v2880
        %v2882 = vand.u32 %v2881, 4294901760
        %2883 = vmatpush1.xpose.msra.mxu0 %v2882
        %2884 = vmatprep.subr.mxu0 0.0
        %v2885 = vand.u32 %v2748, 4294901760
        %v2886 = vsub.f32 %v2748, %v2885
        %v2887 = vand.u32 %v2886, 4294901760
        %v2888 = vsub.f32 %v2886, %v2887
        %v2889 = vand.u32 %v2888, 4294901760
        %2890 = vmatpush1.xpose.msra.mxu0 %v2889
        %2891 = vmatprep.subr.mxu0 0.0
        %v2892 = vand.u32 %v2749, 4294901760
        %v2893 = vsub.f32 %v2749, %v2892
        %v2894 = vand.u32 %v2893, 4294901760
        %v2895 = vsub.f32 %v2893, %v2894
        %v2896 = vand.u32 %v2895, 4294901760
        %2897 = vmatpush1.xpose.msra.mxu0 %v2896
        %2898 = vmatprep.subr.mxu0 0.0
        %v2899 = vand.u32 %v2750, 4294901760
        %v2900 = vsub.f32 %v2750, %v2899
        %v2901 = vand.u32 %v2900, 4294901760
        %v2902 = vsub.f32 %v2900, %v2901
        %v2903 = vand.u32 %v2902, 4294901760
        %2904 = vmatpush1.xpose.msra.mxu0 %v2903
        %2905 = vmatprep.subr.mxu0 0.0
        %v2906 = vand.u32 %v2751, 4294901760
        %v2907 = vsub.f32 %v2751, %v2906
        %v2908 = vand.u32 %v2907, 4294901760
        %v2909 = vsub.f32 %v2907, %v2908
        %v2910 = vand.u32 %v2909, 4294901760
        %2911 = vmatpush1.xpose.msra.mxu0 %v2910
        %2912 = vmatprep.subr.mxu0 0.0
        %v2913 = vand.u32 %v2752, 4294901760
        %v2914 = vsub.f32 %v2752, %v2913
        %v2915 = vand.u32 %v2914, 4294901760
        %v2916 = vsub.f32 %v2914, %v2915
        %v2917 = vand.u32 %v2916, 4294901760
        %2918 = vmatpush1.xpose.msra.mxu0 %v2917
        %2919 = vmatprep.subr.mxu0 0.0
        %v2920 = vand.u32 %v2753, 4294901760
        %v2921 = vsub.f32 %v2753, %v2920
        %v2922 = vand.u32 %v2921, 4294901760
        %v2923 = vsub.f32 %v2921, %v2922
        %v2924 = vand.u32 %v2923, 4294901760
        %2925 = vmatpush1.xpose.msra.mxu0 %v2924
        %2926 = vmatprep.subr.mxu0 0.0
        %v2927 = vand.u32 %v2754, 4294901760
        %v2928 = vsub.f32 %v2754, %v2927
        %v2929 = vand.u32 %v2928, 4294901760
        %v2930 = vsub.f32 %v2928, %v2929
        %v2931 = vand.u32 %v2930, 4294901760
        %2932 = vmatpush1.xpose.msra.mxu0 %v2931
        %2933 = vmatprep.subr.mxu0 0.0
        %v2934 = vand.u32 %v2755, 4294901760
        %v2935 = vsub.f32 %v2755, %v2934
        %v2936 = vand.u32 %v2935, 4294901760
        %v2937 = vsub.f32 %v2935, %v2936
        %v2938 = vand.u32 %v2937, 4294901760
        %2939 = vmatpush1.xpose.msra.mxu0 %v2938
        %2940 = vmatprep.subr.mxu0 0.0
        %v2941 = vand.u32 %v2756, 4294901760
        %v2942 = vsub.f32 %v2756, %v2941
        %v2943 = vand.u32 %v2942, 4294901760
        %v2944 = vsub.f32 %v2942, %v2943
        %v2945 = vand.u32 %v2944, 4294901760
        %2946 = vmatpush1.xpose.msra.mxu0 %v2945
        %2947 = vmatprep.subr.mxu0 0.0
        %v2948 = vand.u32 %v2757, 4294901760
        %v2949 = vsub.f32 %v2757, %v2948
        %v2950 = vand.u32 %v2949, 4294901760
        %v2951 = vsub.f32 %v2949, %v2950
        %v2952 = vand.u32 %v2951, 4294901760
        %2953 = vmatpush1.xpose.msra.mxu0 %v2952
        %2954 = vmatprep.subr.mxu0 0.0
        %v2955 = vand.u32 %v2758, 4294901760
        %v2956 = vsub.f32 %v2758, %v2955
        %v2957 = vand.u32 %v2956, 4294901760
        %v2958 = vsub.f32 %v2956, %v2957
        %v2959 = vand.u32 %v2958, 4294901760
        %2960 = vmatpush1.xpose.msra.mxu0 %v2959
        %2961 = vmatprep.subr.mxu0 0.0
        %v2962 = vand.u32 %v2759, 4294901760
        %v2963 = vsub.f32 %v2759, %v2962
        %v2964 = vand.u32 %v2963, 4294901760
        %v2965 = vsub.f32 %v2963, %v2964
        %v2966 = vand.u32 %v2965, 4294901760
        %2967 = vmatpush1.xpose.msra.mxu0 %v2966
        %2968 = vmatprep.subr.mxu0 0.0
        %v2969 = vand.u32 %v2760, 4294901760
        %v2970 = vsub.f32 %v2760, %v2969
        %v2971 = vand.u32 %v2970, 4294901760
        %v2972 = vsub.f32 %v2970, %v2971
        %v2973 = vand.u32 %v2972, 4294901760
        %2974 = vmatpush1.xpose.msra.mxu0 %v2973
        %2975 = vmatprep.subr.mxu0 0.0
        %v2976 = vand.u32 %v2761, 4294901760
        %v2977 = vsub.f32 %v2761, %v2976
        %v2978 = vand.u32 %v2977, 4294901760
        %v2979 = vsub.f32 %v2977, %v2978
        %v2980 = vand.u32 %v2979, 4294901760
        %2981 = vmatpush1.xpose.msra.mxu0 %v2980
        %2982 = vmatprep.subr.mxu0 0.0
        %2983 = vmatpush1.xpose.msra.mxu0 0.0
        %2984 = vmatprep.subr.mxu0 0.0
        %2985 = vmatpush1.xpose.msra.mxu0 0.0
        %2986 = vmatprep.subr.mxu0 0.0
        %2987 = vmatpush1.xpose.msra.mxu0 0.0
        %2988 = vmatprep.subr.mxu0 0.0
        %2989 = vmatpush1.xpose.msra.mxu0 0.0
        %2990 = vmatprep.subr.mxu0 0.0
        %2991 = vmatpush1.xpose.msra.mxu0 0.0
        %2992 = vmatprep.subr.mxu0 0.0
        %2993 = vmatpush1.xpose.msra.mxu0 0.0
        %2994 = vmatprep.subr.mxu0 0.0
        %2995 = vmatpush1.xpose.msra.mxu0 0.0
        %2996 = vmatprep.subr.mxu0 0.0
        %2997 = vmatpush1.xpose.msra.mxu0 0.0
        %2998 = vmatprep.subr.mxu0 0.0
        %2999 = vmatpush1.xpose.msra.mxu0 0.0
        %3000 = vmatprep.subr.mxu0 0.0
        %3001 = vmatpush1.xpose.msra.mxu0 0.0
        %3002 = vmatprep.subr.mxu0 0.0
        %3003 = vmatpush1.xpose.msra.mxu0 0.0
        %3004 = vmatprep.subr.mxu0 0.0
        %3005 = vmatpush1.xpose.msra.mxu0 0.0
        %3006 = vmatprep.subr.mxu0 0.0
        %3007 = vmatpush1.xpose.msra.mxu0 0.0
        %3008 = vmatprep.subr.mxu0 0.0
        %3009 = vmatpush1.xpose.msra.mxu0 0.0
        %3010 = vmatprep.subr.mxu0 0.0
        %3011 = vmatpush1.xpose.msra.mxu0 0.0
        %3012 = vmatprep.subr.mxu0 0.0
        %3013 = vmatpush1.xpose.msra.mxu0 0.0
        %3014 = vmatprep.mubr.f32.mxu0 0.0
        %v3015 = vand.u32 %v1373, 4294901760
        %3016 = vmatmul.mubr.f32.gmra.mrb[0].mxu0 %v3015
        %v3017 = vpop.f32.mrb[0].mxu0
        %v3018 = vadd.f32 %v2867, %v3017
        %v3019 = vpop.f32.mrb[0].mxu0
        %3020 = vdwg.mxu0
        %3021 = vmatprep.subr.mxu0 0.0
        %v3022 = vand.u32 %v2746, 4294901760
        %v3023 = vsub.f32 %v2746, %v3022
        %3024 = vmatpush1.xpose.msra.mxu0 %v3023
        %3025 = vmatprep.subr.mxu0 0.0
        %v3026 = vand.u32 %v2747, 4294901760
        %v3027 = vsub.f32 %v2747, %v3026
        %3028 = vmatpush1.xpose.msra.mxu0 %v3027
        %3029 = vmatprep.subr.mxu0 0.0
        %v3030 = vand.u32 %v2748, 4294901760
        %v3031 = vsub.f32 %v2748, %v3030
        %3032 = vmatpush1.xpose.msra.mxu0 %v3031
        %3033 = vmatprep.subr.mxu0 0.0
        %v3034 = vand.u32 %v2749, 4294901760
        %v3035 = vsub.f32 %v2749, %v3034
        %3036 = vmatpush1.xpose.msra.mxu0 %v3035
        %3037 = vmatprep.subr.mxu0 0.0
        %v3038 = vand.u32 %v2750, 4294901760
        %v3039 = vsub.f32 %v2750, %v3038
        %3040 = vmatpush1.xpose.msra.mxu0 %v3039
        %3041 = vmatprep.subr.mxu0 0.0
        %v3042 = vand.u32 %v2751, 4294901760
        %v3043 = vsub.f32 %v2751, %v3042
        %3044 = vmatpush1.xpose.msra.mxu0 %v3043
        %3045 = vmatprep.subr.mxu0 0.0
        %v3046 = vand.u32 %v2752, 4294901760
        %v3047 = vsub.f32 %v2752, %v3046
        %3048 = vmatpush1.xpose.msra.mxu0 %v3047
        %3049 = vmatprep.subr.mxu0 0.0
        %v3050 = vand.u32 %v2753, 4294901760
        %v3051 = vsub.f32 %v2753, %v3050
        %3052 = vmatpush1.xpose.msra.mxu0 %v3051
        %3053 = vmatprep.subr.mxu0 0.0
        %v3054 = vand.u32 %v2754, 4294901760
        %v3055 = vsub.f32 %v2754, %v3054
        %3056 = vmatpush1.xpose.msra.mxu0 %v3055
        %3057 = vmatprep.subr.mxu0 0.0
        %v3058 = vand.u32 %v2755, 4294901760
        %v3059 = vsub.f32 %v2755, %v3058
        %3060 = vmatpush1.xpose.msra.mxu0 %v3059
        %3061 = vmatprep.subr.mxu0 0.0
        %v3062 = vand.u32 %v2756, 4294901760
        %v3063 = vsub.f32 %v2756, %v3062
        %3064 = vmatpush1.xpose.msra.mxu0 %v3063
        %3065 = vmatprep.subr.mxu0 0.0
        %v3066 = vand.u32 %v2757, 4294901760
        %v3067 = vsub.f32 %v2757, %v3066
        %3068 = vmatpush1.xpose.msra.mxu0 %v3067
        %3069 = vmatprep.subr.mxu0 0.0
        %v3070 = vand.u32 %v2758, 4294901760
        %v3071 = vsub.f32 %v2758, %v3070
        %3072 = vmatpush1.xpose.msra.mxu0 %v3071
        %3073 = vmatprep.subr.mxu0 0.0
        %v3074 = vand.u32 %v2759, 4294901760
        %v3075 = vsub.f32 %v2759, %v3074
        %3076 = vmatpush1.xpose.msra.mxu0 %v3075
        %3077 = vmatprep.subr.mxu0 0.0
        %v3078 = vand.u32 %v2760, 4294901760
        %v3079 = vsub.f32 %v2760, %v3078
        %3080 = vmatpush1.xpose.msra.mxu0 %v3079
        %3081 = vmatprep.subr.mxu0 0.0
        %v3082 = vand.u32 %v2761, 4294901760
        %v3083 = vsub.f32 %v2761, %v3082
        %3084 = vmatpush1.xpose.msra.mxu0 %v3083
        %3085 = vmatprep.subr.mxu0 0.0
        %3086 = vmatpush1.xpose.msra.mxu0 0.0
        %3087 = vmatprep.subr.mxu0 0.0
        %3088 = vmatpush1.xpose.msra.mxu0 0.0
        %3089 = vmatprep.subr.mxu0 0.0
        %3090 = vmatpush1.xpose.msra.mxu0 0.0
        %3091 = vmatprep.subr.mxu0 0.0
        %3092 = vmatpush1.xpose.msra.mxu0 0.0
        %3093 = vmatprep.subr.mxu0 0.0
        %3094 = vmatpush1.xpose.msra.mxu0 0.0
        %3095 = vmatprep.subr.mxu0 0.0
        %3096 = vmatpush1.xpose.msra.mxu0 0.0
        %3097 = vmatprep.subr.mxu0 0.0
        %3098 = vmatpush1.xpose.msra.mxu0 0.0
        %3099 = vmatprep.subr.mxu0 0.0
        %3100 = vmatpush1.xpose.msra.mxu0 0.0
        %3101 = vmatprep.subr.mxu0 0.0
        %3102 = vmatpush1.xpose.msra.mxu0 0.0
        %3103 = vmatprep.subr.mxu0 0.0
        %3104 = vmatpush1.xpose.msra.mxu0 0.0
        %3105 = vmatprep.subr.mxu0 0.0
        %3106 = vmatpush1.xpose.msra.mxu0 0.0
        %3107 = vmatprep.subr.mxu0 0.0
        %3108 = vmatpush1.xpose.msra.mxu0 0.0
        %3109 = vmatprep.subr.mxu0 0.0
        %3110 = vmatpush1.xpose.msra.mxu0 0.0
        %3111 = vmatprep.subr.mxu0 0.0
        %3112 = vmatpush1.xpose.msra.mxu0 0.0
        %3113 = vmatprep.subr.mxu0 0.0
        %3114 = vmatpush1.xpose.msra.mxu0 0.0
        %3115 = vmatprep.subr.mxu0 0.0
        %3116 = vmatpush1.xpose.msra.mxu0 0.0
        %3117 = vmatprep.mubr.f32.mxu0 0.0
        %v3118 = vand.u32 %v1373, 4294901760
        %v3119 = vsub.f32 %v1373, %v3118
        %3120 = vmatmul.mubr.f32.gmra.mrb[0].mxu0 %v3119
        %v3121 = vpop.f32.mrb[0].mxu0
        %v3122 = vadd.f32 %v3018, %v3121
        %v3123 = vpop.f32.mrb[0].mxu0
        %3124 = vdwg.mxu0
        %3125 = vmatprep.subr.mxu0 0.0
        %v3126 = vand.u32 %v2746, 4294901760
        %3127 = vmatpush1.xpose.msra.mxu0 %v3126
        %3128 = vmatprep.subr.mxu0 0.0
        %v3129 = vand.u32 %v2747, 4294901760
        %3130 = vmatpush1.xpose.msra.mxu0 %v3129
        %3131 = vmatprep.subr.mxu0 0.0
        %v3132 = vand.u32 %v2748, 4294901760
        %3133 = vmatpush1.xpose.msra.mxu0 %v3132
        %3134 = vmatprep.subr.mxu0 0.0
        %v3135 = vand.u32 %v2749, 4294901760
        %3136 = vmatpush1.xpose.msra.mxu0 %v3135
        %3137 = vmatprep.subr.mxu0 0.0
        %v3138 = vand.u32 %v2750, 4294901760
        %3139 = vmatpush1.xpose.msra.mxu0 %v3138
        %3140 = vmatprep.subr.mxu0 0.0
        %v3141 = vand.u32 %v2751, 4294901760
        %3142 = vmatpush1.xpose.msra.mxu0 %v3141
        %3143 = vmatprep.subr.mxu0 0.0
        %v3144 = vand.u32 %v2752, 4294901760
        %3145 = vmatpush1.xpose.msra.mxu0 %v3144
        %3146 = vmatprep.subr.mxu0 0.0
        %v3147 = vand.u32 %v2753, 4294901760
        %3148 = vmatpush1.xpose.msra.mxu0 %v3147
        %3149 = vmatprep.subr.mxu0 0.0
        %v3150 = vand.u32 %v2754, 4294901760
        %3151 = vmatpush1.xpose.msra.mxu0 %v3150
        %3152 = vmatprep.subr.mxu0 0.0
        %v3153 = vand.u32 %v2755, 4294901760
        %3154 = vmatpush1.xpose.msra.mxu0 %v3153
        %3155 = vmatprep.subr.mxu0 0.0
        %v3156 = vand.u32 %v2756, 4294901760
        %3157 = vmatpush1.xpose.msra.mxu0 %v3156
        %3158 = vmatprep.subr.mxu0 0.0
        %v3159 = vand.u32 %v2757, 4294901760
        %3160 = vmatpush1.xpose.msra.mxu0 %v3159
        %3161 = vmatprep.subr.mxu0 0.0
        %v3162 = vand.u32 %v2758, 4294901760
        %3163 = vmatpush1.xpose.msra.mxu0 %v3162
        %3164 = vmatprep.subr.mxu0 0.0
        %v3165 = vand.u32 %v2759, 4294901760
        %3166 = vmatpush1.xpose.msra.mxu0 %v3165
        %3167 = vmatprep.subr.mxu0 0.0
        %v3168 = vand.u32 %v2760, 4294901760
        %3169 = vmatpush1.xpose.msra.mxu0 %v3168
        %3170 = vmatprep.subr.mxu0 0.0
        %v3171 = vand.u32 %v2761, 4294901760
        %3172 = vmatpush1.xpose.msra.mxu0 %v3171
        %3173 = vmatprep.subr.mxu0 0.0
        %3174 = vmatpush1.xpose.msra.mxu0 0.0
        %3175 = vmatprep.subr.mxu0 0.0
        %3176 = vmatpush1.xpose.msra.mxu0 0.0
        %3177 = vmatprep.subr.mxu0 0.0
        %3178 = vmatpush1.xpose.msra.mxu0 0.0
        %3179 = vmatprep.subr.mxu0 0.0
        %3180 = vmatpush1.xpose.msra.mxu0 0.0
        %3181 = vmatprep.subr.mxu0 0.0
        %3182 = vmatpush1.xpose.msra.mxu0 0.0
        %3183 = vmatprep.subr.mxu0 0.0
        %3184 = vmatpush1.xpose.msra.mxu0 0.0
        %3185 = vmatprep.subr.mxu0 0.0
        %3186 = vmatpush1.xpose.msra.mxu0 0.0
        %3187 = vmatprep.subr.mxu0 0.0
        %3188 = vmatpush1.xpose.msra.mxu0 0.0
        %3189 = vmatprep.subr.mxu0 0.0
        %3190 = vmatpush1.xpose.msra.mxu0 0.0
        %3191 = vmatprep.subr.mxu0 0.0
        %3192 = vmatpush1.xpose.msra.mxu0 0.0
        %3193 = vmatprep.subr.mxu0 0.0
        %3194 = vmatpush1.xpose.msra.mxu0 0.0
        %3195 = vmatprep.subr.mxu0 0.0
        %3196 = vmatpush1.xpose.msra.mxu0 0.0
        %3197 = vmatprep.subr.mxu0 0.0
        %3198 = vmatpush1.xpose.msra.mxu0 0.0
        %3199 = vmatprep.subr.mxu0 0.0
        %3200 = vmatpush1.xpose.msra.mxu0 0.0
        %3201 = vmatprep.subr.mxu0 0.0
        %3202 = vmatpush1.xpose.msra.mxu0 0.0
        %3203 = vmatprep.subr.mxu0 0.0
        %3204 = vmatpush1.xpose.msra.mxu0 0.0
        %3205 = vmatprep.mubr.f32.mxu0 0.0
        %v3206 = vand.u32 %v1373, 4294901760
        %v3207 = vsub.f32 %v1373, %v3206
        %v3208 = vand.u32 %v3207, 4294901760
        %3209 = vmatmul.mubr.f32.gmra.mrb[0].mxu0 %v3208
        %v3210 = vpop.f32.mrb[0].mxu0
        %v3211 = vadd.f32 %v3122, %v3210
        %v3212 = vpop.f32.mrb[0].mxu0
        %3213 = vdwg.mxu0
        %3214 = vmatprep.subr.mxu0 0.0
        %v3215 = vand.u32 %v2746, 4294901760
        %v3216 = vsub.f32 %v2746, %v3215
        %v3217 = vand.u32 %v3216, 4294901760
        %3218 = vmatpush1.xpose.msra.mxu0 %v3217
        %3219 = vmatprep.subr.mxu0 0.0
        %v3220 = vand.u32 %v2747, 4294901760
        %v3221 = vsub.f32 %v2747, %v3220
        %v3222 = vand.u32 %v3221, 4294901760
        %3223 = vmatpush1.xpose.msra.mxu0 %v3222
        %3224 = vmatprep.subr.mxu0 0.0
        %v3225 = vand.u32 %v2748, 4294901760
        %v3226 = vsub.f32 %v2748, %v3225
        %v3227 = vand.u32 %v3226, 4294901760
        %3228 = vmatpush1.xpose.msra.mxu0 %v3227
        %3229 = vmatprep.subr.mxu0 0.0
        %v3230 = vand.u32 %v2749, 4294901760
        %v3231 = vsub.f32 %v2749, %v3230
        %v3232 = vand.u32 %v3231, 4294901760
        %3233 = vmatpush1.xpose.msra.mxu0 %v3232
        %3234 = vmatprep.subr.mxu0 0.0
        %v3235 = vand.u32 %v2750, 4294901760
        %v3236 = vsub.f32 %v2750, %v3235
        %v3237 = vand.u32 %v3236, 4294901760
        %3238 = vmatpush1.xpose.msra.mxu0 %v3237
        %3239 = vmatprep.subr.mxu0 0.0
        %v3240 = vand.u32 %v2751, 4294901760
        %v3241 = vsub.f32 %v2751, %v3240
        %v3242 = vand.u32 %v3241, 4294901760
        %3243 = vmatpush1.xpose.msra.mxu0 %v3242
        %3244 = vmatprep.subr.mxu0 0.0
        %v3245 = vand.u32 %v2752, 4294901760
        %v3246 = vsub.f32 %v2752, %v3245
        %v3247 = vand.u32 %v3246, 4294901760
        %3248 = vmatpush1.xpose.msra.mxu0 %v3247
        %3249 = vmatprep.subr.mxu0 0.0
        %v3250 = vand.u32 %v2753, 4294901760
        %v3251 = vsub.f32 %v2753, %v3250
        %v3252 = vand.u32 %v3251, 4294901760
        %3253 = vmatpush1.xpose.msra.mxu0 %v3252
        %3254 = vmatprep.subr.mxu0 0.0
        %v3255 = vand.u32 %v2754, 4294901760
        %v3256 = vsub.f32 %v2754, %v3255
        %v3257 = vand.u32 %v3256, 4294901760
        %3258 = vmatpush1.xpose.msra.mxu0 %v3257
        %3259 = vmatprep.subr.mxu0 0.0
        %v3260 = vand.u32 %v2755, 4294901760
        %v3261 = vsub.f32 %v2755, %v3260
        %v3262 = vand.u32 %v3261, 4294901760
        %3263 = vmatpush1.xpose.msra.mxu0 %v3262
        %3264 = vmatprep.subr.mxu0 0.0
        %v3265 = vand.u32 %v2756, 4294901760
        %v3266 = vsub.f32 %v2756, %v3265
        %v3267 = vand.u32 %v3266, 4294901760
        %3268 = vmatpush1.xpose.msra.mxu0 %v3267
        %3269 = vmatprep.subr.mxu0 0.0
        %v3270 = vand.u32 %v2757, 4294901760
        %v3271 = vsub.f32 %v2757, %v3270
        %v3272 = vand.u32 %v3271, 4294901760
        %3273 = vmatpush1.xpose.msra.mxu0 %v3272
        %3274 = vmatprep.subr.mxu0 0.0
        %v3275 = vand.u32 %v2758, 4294901760
        %v3276 = vsub.f32 %v2758, %v3275
        %v3277 = vand.u32 %v3276, 4294901760
        %3278 = vmatpush1.xpose.msra.mxu0 %v3277
        %3279 = vmatprep.subr.mxu0 0.0
        %v3280 = vand.u32 %v2759, 4294901760
        %v3281 = vsub.f32 %v2759, %v3280
        %v3282 = vand.u32 %v3281, 4294901760
        %3283 = vmatpush1.xpose.msra.mxu0 %v3282
        %3284 = vmatprep.subr.mxu0 0.0
        %v3285 = vand.u32 %v2760, 4294901760
        %v3286 = vsub.f32 %v2760, %v3285
        %v3287 = vand.u32 %v3286, 4294901760
        %3288 = vmatpush1.xpose.msra.mxu0 %v3287
        %3289 = vmatprep.subr.mxu0 0.0
        %v3290 = vand.u32 %v2761, 4294901760
        %v3291 = vsub.f32 %v2761, %v3290
        %v3292 = vand.u32 %v3291, 4294901760
        %3293 = vmatpush1.xpose.msra.mxu0 %v3292
        %3294 = vmatprep.subr.mxu0 0.0
        %3295 = vmatpush1.xpose.msra.mxu0 0.0
        %3296 = vmatprep.subr.mxu0 0.0
        %3297 = vmatpush1.xpose.msra.mxu0 0.0
        %3298 = vmatprep.subr.mxu0 0.0
        %3299 = vmatpush1.xpose.msra.mxu0 0.0
        %3300 = vmatprep.subr.mxu0 0.0
        %3301 = vmatpush1.xpose.msra.mxu0 0.0
        %3302 = vmatprep.subr.mxu0 0.0
        %3303 = vmatpush1.xpose.msra.mxu0 0.0
        %3304 = vmatprep.subr.mxu0 0.0
        %3305 = vmatpush1.xpose.msra.mxu0 0.0
        %3306 = vmatprep.subr.mxu0 0.0
        %3307 = vmatpush1.xpose.msra.mxu0 0.0
        %3308 = vmatprep.subr.mxu0 0.0
        %3309 = vmatpush1.xpose.msra.mxu0 0.0
        %3310 = vmatprep.subr.mxu0 0.0
        %3311 = vmatpush1.xpose.msra.mxu0 0.0
        %3312 = vmatprep.subr.mxu0 0.0
        %3313 = vmatpush1.xpose.msra.mxu0 0.0
        %3314 = vmatprep.subr.mxu0 0.0
        %3315 = vmatpush1.xpose.msra.mxu0 0.0
        %3316 = vmatprep.subr.mxu0 0.0
        %3317 = vmatpush1.xpose.msra.mxu0 0.0
        %3318 = vmatprep.subr.mxu0 0.0
        %3319 = vmatpush1.xpose.msra.mxu0 0.0
        %3320 = vmatprep.subr.mxu0 0.0
        %3321 = vmatpush1.xpose.msra.mxu0 0.0
        %3322 = vmatprep.subr.mxu0 0.0
        %3323 = vmatpush1.xpose.msra.mxu0 0.0
        %3324 = vmatprep.subr.mxu0 0.0
        %3325 = vmatpush1.xpose.msra.mxu0 0.0
        %3326 = vmatprep.mubr.f32.mxu0 0.0
        %v3327 = vand.u32 %v1373, 4294901760
        %3328 = vmatmul.mubr.f32.gmra.mrb[0].mxu0 %v3327
        %v3329 = vpop.f32.mrb[0].mxu0
        %v3330 = vadd.f32 %v3211, %v3329
        %v3331 = vpop.f32.mrb[0].mxu0
        %3332 = vdwg.mxu0
        %3333 = vmatprep.subr.mxu0 0.0
        %v3334 = vand.u32 %v2746, 4294901760
        %3335 = vmatpush1.xpose.msra.mxu0 %v3334
        %3336 = vmatprep.subr.mxu0 0.0
        %v3337 = vand.u32 %v2747, 4294901760
        %3338 = vmatpush1.xpose.msra.mxu0 %v3337
        %3339 = vmatprep.subr.mxu0 0.0
        %v3340 = vand.u32 %v2748, 4294901760
        %3341 = vmatpush1.xpose.msra.mxu0 %v3340
        %3342 = vmatprep.subr.mxu0 0.0
        %v3343 = vand.u32 %v2749, 4294901760
        %3344 = vmatpush1.xpose.msra.mxu0 %v3343
        %3345 = vmatprep.subr.mxu0 0.0
        %v3346 = vand.u32 %v2750, 4294901760
        %3347 = vmatpush1.xpose.msra.mxu0 %v3346
        %3348 = vmatprep.subr.mxu0 0.0
        %v3349 = vand.u32 %v2751, 4294901760
        %3350 = vmatpush1.xpose.msra.mxu0 %v3349
        %3351 = vmatprep.subr.mxu0 0.0
        %v3352 = vand.u32 %v2752, 4294901760
        %3353 = vmatpush1.xpose.msra.mxu0 %v3352
        %3354 = vmatprep.subr.mxu0 0.0
        %v3355 = vand.u32 %v2753, 4294901760
        %3356 = vmatpush1.xpose.msra.mxu0 %v3355
        %3357 = vmatprep.subr.mxu0 0.0
        %v3358 = vand.u32 %v2754, 4294901760
        %3359 = vmatpush1.xpose.msra.mxu0 %v3358
        %3360 = vmatprep.subr.mxu0 0.0
        %v3361 = vand.u32 %v2755, 4294901760
        %3362 = vmatpush1.xpose.msra.mxu0 %v3361
        %3363 = vmatprep.subr.mxu0 0.0
        %v3364 = vand.u32 %v2756, 4294901760
        %3365 = vmatpush1.xpose.msra.mxu0 %v3364
        %3366 = vmatprep.subr.mxu0 0.0
        %v3367 = vand.u32 %v2757, 4294901760
        %3368 = vmatpush1.xpose.msra.mxu0 %v3367
        %3369 = vmatprep.subr.mxu0 0.0
        %v3370 = vand.u32 %v2758, 4294901760
        %3371 = vmatpush1.xpose.msra.mxu0 %v3370
        %3372 = vmatprep.subr.mxu0 0.0
        %v3373 = vand.u32 %v2759, 4294901760
        %3374 = vmatpush1.xpose.msra.mxu0 %v3373
        %3375 = vmatprep.subr.mxu0 0.0
        %v3376 = vand.u32 %v2760, 4294901760
        %3377 = vmatpush1.xpose.msra.mxu0 %v3376
        %3378 = vmatprep.subr.mxu0 0.0
        %v3379 = vand.u32 %v2761, 4294901760
        %3380 = vmatpush1.xpose.msra.mxu0 %v3379
        %3381 = vmatprep.subr.mxu0 0.0
        %3382 = vmatpush1.xpose.msra.mxu0 0.0
        %3383 = vmatprep.subr.mxu0 0.0
        %3384 = vmatpush1.xpose.msra.mxu0 0.0
        %3385 = vmatprep.subr.mxu0 0.0
        %3386 = vmatpush1.xpose.msra.mxu0 0.0
        %3387 = vmatprep.subr.mxu0 0.0
        %3388 = vmatpush1.xpose.msra.mxu0 0.0
        %3389 = vmatprep.subr.mxu0 0.0
        %3390 = vmatpush1.xpose.msra.mxu0 0.0
        %3391 = vmatprep.subr.mxu0 0.0
        %3392 = vmatpush1.xpose.msra.mxu0 0.0
        %3393 = vmatprep.subr.mxu0 0.0
        %3394 = vmatpush1.xpose.msra.mxu0 0.0
        %3395 = vmatprep.subr.mxu0 0.0
        %3396 = vmatpush1.xpose.msra.mxu0 0.0
        %3397 = vmatprep.subr.mxu0 0.0
        %3398 = vmatpush1.xpose.msra.mxu0 0.0
        %3399 = vmatprep.subr.mxu0 0.0
        %3400 = vmatpush1.xpose.msra.mxu0 0.0
        %3401 = vmatprep.subr.mxu0 0.0
        %3402 = vmatpush1.xpose.msra.mxu0 0.0
        %3403 = vmatprep.subr.mxu0 0.0
        %3404 = vmatpush1.xpose.msra.mxu0 0.0
        %3405 = vmatprep.subr.mxu0 0.0
        %3406 = vmatpush1.xpose.msra.mxu0 0.0
        %3407 = vmatprep.subr.mxu0 0.0
        %3408 = vmatpush1.xpose.msra.mxu0 0.0
        %3409 = vmatprep.subr.mxu0 0.0
        %3410 = vmatpush1.xpose.msra.mxu0 0.0
        %3411 = vmatprep.subr.mxu0 0.0
        %3412 = vmatpush1.xpose.msra.mxu0 0.0
        %3413 = vmatprep.mubr.f32.mxu0 0.0
        %v3414 = vand.u32 %v1373, 4294901760
        %3415 = vmatmul.mubr.f32.gmra.mrb[0].mxu0 %v3414
        %v3416 = vpop.f32.mrb[0].mxu0
        %v3417 = vadd.f32 %v3330, %v3416
        %v3418 = vpop.f32.mrb[0].mxu0
        %3419 = vdwg.mxu0
        %v3420 = vadd.f32 %v2778, %v3417
        %3421 = vst [vmem:[%s308] sm:$0xf] %v3420
        %s3422 = sand.u32 %s183, 1
        %s3423 = scalar_lea.sflag [#allocation5], %s3422
        %s3424 = sand.u32 %s183, 1
        %s3425 = smul.addr %s3424, 4
        %s3426 = scalar_lea.vmem [#allocation4], %s3425
        %s3427 = sand.u32 %s211, 1
        %s3428 = scalar_lea.sflag [#allocation7], %s3427
        %s3429 = sand.u32 %s211, 1
        %s3430 = smul.addr %s3429, 128
        %s3431 = scalar_lea.vmem [#allocation6], %s3430
        // Predicated region
        $region49: #{tpu_custom_call.1} parent=43 // pred_check
          %p3432 = pneg %p193
        $region50: #{tpu_custom_call.1} parent=43 // pred_check_branch
          %3434 = sbr.rel (%p3432) target = $region52
        $region51: #{tpu_custom_call.1} parent=43 // pred_region
          %s3436 = ssub.s32 64, 64
          %3437 = vsyncadd %s3423, %s3436
          %s3438 = smul.addr %s29, 64
          %s3439 = scalar_lea.hbm %s6, %s3438
          %s3441 = sshll.u32 %s3426, 4
          %s3442 = int_to_ptr.vmem [resolvable:$true] %s3441
          %3444 = dma.vmem_to_hbm [thread:$0]  %s3442, 64, %s3439, %s3423
        $region52: #{tpu_custom_call.1} parent=43 // pred_fallthru
          _
        // Predicated region
        $region53: #{tpu_custom_call.1} parent=43 // pred_check
          %p3445 = pneg %p221
        $region54: #{tpu_custom_call.1} parent=43 // pred_check_branch
          %3447 = sbr.rel (%p3445) target = $region56
        $region55: #{tpu_custom_call.1} parent=43 // pred_region
          %s3449 = ssub.s32 2048, 2048
          %3450 = vsyncadd %s3428, %s3449
          %s3451 = smul.addr %s29, 16
          %s3452 = sadd.s32 %s30, %s3451
          %s3453 = smul.addr %s3452, 128
          %s3454 = scalar_lea.hbm %s7, %s3453
          %s3455 = sshll.u32 %s3431, 4
          %s3456 = int_to_ptr.vmem [resolvable:$true] %s3455
          %3461 = dma.vmem_to_hbm [thread:$0]  %s3456, 2048, %s3454, %s3428, 128, 128, 8
        $region56: #{tpu_custom_call.1} parent=43 // pred_fallthru
          _
      $region44: #{tpu_custom_call.1} parent=5 // pred_fallthru
        _
      %p3462 = scmp.le.s32.totalorder 2, %s20
      // Predicated region
      $region57: #{tpu_custom_call.1} parent=5 // pred_check
        %p3463 = pneg %p3462
      $region58: #{tpu_custom_call.1} parent=5 // pred_check_branch
        %3465 = sbr.rel (%p3463) target = $region60
      $region59: #{tpu_custom_call.1} parent=5 // pred_region
        %s3466 = ssub.s32 %s20, 2
        // Predicated region
        $region61: #{tpu_custom_call.1} parent=59 // pred_check
          %p3467 = pneg %p199
        $region62: #{tpu_custom_call.1} parent=59 // pred_check_branch
          %3469 = sbr.rel (%p3467) target = $region64
        $region63: #{tpu_custom_call.1} parent=59 // pred_region
          %s3470 = sand.u32 %s184, 1
          %s3471 = scalar_lea.sflag [#allocation5], %s3470
          %s3472 = sand.u32 %s184, 1
          %s3473 = smul.addr %s3472, 4
          %s3474 = scalar_lea.vmem [#allocation4], %s3473
          %3475 = dma.done %s3471, 64
        $region64: #{tpu_custom_call.1} parent=59 // pred_fallthru
          _
        // Predicated region
        $region65: #{tpu_custom_call.1} parent=59 // pred_check
          %p3476 = pneg %p227
        $region66: #{tpu_custom_call.1} parent=59 // pred_check_branch
          %3478 = sbr.rel (%p3476) target = $region68
        $region67: #{tpu_custom_call.1} parent=59 // pred_region
          %s3479 = sand.u32 %s212, 1
          %s3480 = scalar_lea.sflag [#allocation7], %s3479
          %s3481 = sand.u32 %s212, 1
          %s3482 = smul.addr %s3481, 128
          %s3483 = scalar_lea.vmem [#allocation6], %s3482
          %3484 = dma.done %s3480, 2048
        $region68: #{tpu_custom_call.1} parent=59 // pred_fallthru
          _
      $region60: #{tpu_custom_call.1} parent=5 // pred_fallthru
        _
    $region6: #{tpu_custom_call.1} parent=1 // loop_footer
      %s24 = sadd.s32 1, %s20
    $region7: #{tpu_custom_call.1} parent=1 // loop_footer_branch
      %19 = sbr.rel target = $region3
    $region8: #{tpu_custom_call.1} parent=1 // loop_exit
      _
    %3485 = vsyncpa [#allocation5], 1
    %s3486 = scalar_lea.sflag [#allocation5], 1
    %3487 = vsyncpa %s3486, 1
    %3488 = vsyncpa [#allocation7], 1
    %s3489 = scalar_lea.sflag [#allocation7], 1
    %3490 = vsyncpa %s3489, 1

</llo_original>
